<compile_context>
chip_gen: v5e
topology: v5e:2x2
jax: 0.10.0
libtpu: 0.0.40
codegen_flags: <defaults>
</compile_context>

<pallas_src>
import functools

import jax
import jax.numpy as jnp
from jax.experimental import pallas as pl
from jax.experimental.pallas import tpu as pltpu


def _round_up(n, m):
    return (n + m - 1) // m * m


# ----------------------------------------------------------------------------
# Pallas kernel: tiled fused (A @ B + bias) with optional activation.
# ----------------------------------------------------------------------------
def _mm_bias_act_kernel(a_ref, b_ref, bias_ref, o_ref, acc_ref, *, act):
    @pl.when(pl.program_id(2) == 0)
    def _():
        acc_ref[...] = jnp.zeros_like(acc_ref)

    acc_ref[...] += jnp.dot(a_ref[...], b_ref[...],
                            preferred_element_type=jnp.float32)

    @pl.when(pl.program_id(2) == pl.num_programs(2) - 1)
    def _():
        acc = acc_ref[...] + bias_ref[...]            # (1, tn) bias broadcasts
        if act == "relu":
            acc = jnp.maximum(acc, 0.0)
        elif act == "sigmoid":
            acc = 1.0 / (1.0 + jnp.exp(-acc))         # exact f32 sigmoid
        o_ref[...] = acc.astype(o_ref.dtype)


def _pick_tiles(M, N, K):
    # tm <= 256: keeps >=2 parallel i-blocks at M=512 (v7x dual-TC sharding).
    tm = min(256, _round_up(M, 16))
    # tn 128-256 generally (v5e/v7x friendly); 512 for small-M / wide-N linears
    # (dec1 at real model size) per the v6e MXU-occupancy note.
    if M <= 128 and N >= 1024:
        tn = 512
    else:
        tn = min(256, _round_up(N, 128))
    # K must be exact (garbage in K contaminates all outputs).  A full-dim K
    # block is always legal, so no padding for K <= 2048; above that pick a
    # divisor (keeps the VMEM footprint a few MiB, safe on v7x's 64 MiB).
    if K <= 2048:
        tk, Kp = K, K
    else:
        tk = next((c for c in (2048, 1024, 512, 256, 128) if K % c == 0), None)
        if tk is None:                                # rare fallback: pad K only
            tk = 512
        Kp = _round_up(K, tk)
    return tm, tn, tk, Kp


def matmul_bias_act(a, b, bias, act="none", out_dtype=jnp.bfloat16):
    """out = act(a @ b + bias); a:(M,K) b:(K,N) bias:(N,).

    bf16 MXU operands, f32 accumulation/epilogue, store cast to out_dtype.
    M and N are never padded (Pallas masks ragged edge blocks); K is padded
    only in the K>2048-and-not-divisible fallback, never hit by this model.
    """
    M, K = a.shape
    K2, N = b.shape
    assert K == K2
    tm, tn, tk, Kp = _pick_tiles(M, N, K)

    a = a.astype(jnp.bfloat16)
    b = b.astype(jnp.bfloat16)
    if Kp != K:                                        # fallback path only
        a = jnp.pad(a, ((0, 0), (0, Kp - K)))
        b = jnp.pad(b, ((0, Kp - K), (0, 0)))
    bias2 = bias.astype(jnp.float32).reshape(1, N)

    grid = (pl.cdiv(M, tm), pl.cdiv(N, tn), Kp // tk)
    cost = pl.CostEstimate(
        flops=2 * M * N * K,
        transcendentals=(M * N if act == "sigmoid" else 0),
        bytes_accessed=(M * Kp + Kp * N) * 2 + N * 4
                       + M * N * jnp.dtype(out_dtype).itemsize)

    # NOTE: pl.Buffered(3) on the A spec is a possible further knob for the
    # K-grid==1 conv layers; left at the default depth here for portability.
    return pl.pallas_call(
        functools.partial(_mm_bias_act_kernel, act=act),
        out_shape=jax.ShapeDtypeStruct((M, N), out_dtype),
        grid_spec=pltpu.PrefetchScalarGridSpec(
            num_scalar_prefetch=0,
            grid=grid,
            in_specs=[pl.BlockSpec((tm, tk), lambda i, j, k: (i, k)),
                      pl.BlockSpec((tk, tn), lambda i, j, k: (k, j)),
                      pl.BlockSpec((1, tn), lambda i, j, k: (0, j))],
            out_specs=pl.BlockSpec((tm, tn), lambda i, j, k: (i, j)),
            scratch_shapes=[pltpu.VMEM((tm, tn), jnp.float32)]),
        compiler_params=pltpu.CompilerParams(
            dimension_semantics=("parallel", "parallel", "arbitrary"),
            vmem_limit_bytes=32 * 1024 * 1024),
        cost_estimate=cost,
    )(a, b, bias2)


# ----------------------------------------------------------------------------
# Conv / ConvTranspose wrappers (NHWC internally, bf16 activations).
# ----------------------------------------------------------------------------
def _im2col_nhwc(x, k, stride, pad):
    """x: (N,H,W,C) -> (N*OH*OW, k*k*C), row order (ki, kj, c) channel-fast."""
    # TODO(synk): fold this tap gather into the matmul kernel (manual DMA /
    # shifted index_maps) to avoid materializing the patch matrix in HBM.
    N, H, W, C = x.shape
    xp = jnp.pad(x, ((0, 0), (pad, pad), (pad, pad), (0, 0)))
    OH = (H + 2 * pad - k) // stride + 1
    OW = (W + 2 * pad - k) // stride + 1
    cols = []
    for i in range(k):
        for j in range(k):
            cols.append(xp[:, i:i + stride * OH:stride,
                            j:j + stride * OW:stride, :])
    patches = jnp.concatenate(cols, axis=-1)            # (N, OH, OW, k*k*C)
    return patches.reshape(N * OH * OW, k * k * C), OH, OW


def conv2d_nhwc(x, wm, b, k, stride, pad, act="none"):
    """PyTorch Conv2d.  wm: pre-reshaped (k*k*IC, OC) bf16."""
    N = x.shape[0]
    patches, OH, OW = _im2col_nhwc(x, k, stride, pad)
    out = matmul_bias_act(patches, wm, b, act=act)       # bf16 (N*OH*OW, OC)
    return out.reshape(N, OH, OW, wm.shape[1])


def conv_transpose2x_nhwc(x, w_sub, b4, act="none", out_dtype=jnp.bfloat16):
    """PyTorch ConvTranspose2d(k=3, stride=2, padding=1, output_padding=1) via
    the stride^2 subpixel decomposition: one matmul over 2x2 input patches and
    the combined (4*IC, 4*OC) weight, then a parity -> spatial interleave.

    Returns (raw, nhwc): the raw (N*H*W, 4*OC) matmul output (cheap source for
    BN batch statistics) and the interleaved (N, 2H, 2W, OC) tensor."""
    N, H, W, C = x.shape
    OC = w_sub.shape[1] // 4
    xp = jnp.pad(x, ((0, 0), (0, 1), (0, 1), (0, 0)))
    # TODO(synk): fuse this 2x2 shifted-window gather and the subpixel
    # interleave below into the kernel (shifted in_specs / parity-aware output
    # index_map) to remove two more activation round trips per decoder layer.
    patches = jnp.concatenate(
        [xp[:, 0:H, 0:W, :], xp[:, 0:H, 1:W + 1, :],
         xp[:, 1:H + 1, 0:W, :], xp[:, 1:H + 1, 1:W + 1, :]], axis=-1)
    raw = matmul_bias_act(patches.reshape(N * H * W, 4 * C), w_sub, b4,
                          act=act, out_dtype=out_dtype)  # (N*H*W, 4*OC)
    out = raw.reshape(N, H, W, 2, 2, OC).transpose(0, 1, 3, 2, 4, 5)
    return raw, out.reshape(N, 2 * H, 2 * W, OC)


def bn_relu_from_raw(raw, x_nhwc, gamma, beta, eps=1e-5):
    """Training-mode BatchNorm2d (biased batch var, eps=1e-5) + ReLU.

    Stats come from the raw (M, 4*OC) matmul output (same multiset of values
    per channel); the per-channel affine + ReLU is plain jnp elementwise so
    XLA fuses it into the next layer's patch-gather fusion -- no standalone
    HBM pass, no channel padding."""
    OC = x_nhwc.shape[-1]
    v = raw.astype(jnp.float32).reshape(-1, OC)
    mean = v.mean(axis=0)
    var = v.var(axis=0)                                  # biased, matches PyTorch
    scale = gamma / jnp.sqrt(var + eps)
    shift = beta - mean * scale
    y = x_nhwc.astype(jnp.float32) * scale + shift
    return jnp.maximum(y, 0.0).astype(jnp.bfloat16)


def _subpixel_weight(w):
    """w: (IC, OC, 3, 3) PyTorch ConvTranspose2d weight -> (4*IC, 4*OC).
    Row blocks: 2x2 input taps (dy,dx); col blocks: output parity (ry,rx).
    Only valid for k=3, stride=2, padding=1, output_padding=1."""
    assert w.shape[2] == 3 and w.shape[3] == 3, "subpixel decomposition assumes k=3,s=2,p=1,op=1"
    IC, OC = w.shape[0], w.shape[1]

    def kidx(r, d):          # original-weight spatial index, None = no tap
        if r == 0:
            return 1 if d == 0 else None
        return 2 if d == 0 else 0

    rows = []
    for dy in (0, 1):
        for dx in (0, 1):
            cols = []
            for ry in (0, 1):
                for rx in (0, 1):
                    ki, kj = kidx(ry, dy), kidx(rx, dx)
                    if ki is None or kj is None:
                        cols.append(jnp.zeros((IC, OC), w.dtype))
                    else:
                        cols.append(w[:, :, ki, kj])
            rows.append(jnp.concatenate(cols, axis=1))   # (IC, 4*OC)
    return jnp.concatenate(rows, axis=0)                 # (4*IC, 4*OC)


# ----------------------------------------------------------------------------
# Model: parameter init (PyTorch layout) + one-time prep + forward.
# ----------------------------------------------------------------------------
def init_params(key, nz, im_size, f_size, num_labels):
    in_size = im_size // 2 ** 4
    flat = f_size * 8 * in_size * in_size

    def nrm(k, shape, scale=0.05):
        return scale * jax.random.normal(k, shape, dtype=jnp.float32)

    ks = jax.random.split(key, 20)
    p = {
        "enc1_w": nrm(ks[0], (f_size, 3, 5, 5)),              "enc1_b": jnp.zeros((f_size,)),
        "enc2_w": nrm(ks[1], (f_size * 2, f_size, 5, 5)),     "enc2_b": jnp.zeros((f_size * 2,)),
        "enc3_w": nrm(ks[2], (f_size * 4, f_size * 2, 5, 5)), "enc3_b": jnp.zeros((f_size * 4,)),
        "enc4_w": nrm(ks[3], (f_size * 8, f_size * 4, 5, 5)), "enc4_b": jnp.zeros((f_size * 8,)),
        "encLogVar_w": nrm(ks[4], (nz, flat)),                "encLogVar_b": jnp.zeros((nz,)),
        "encMu_w": nrm(ks[5], (nz, flat)),                    "encMu_b": jnp.zeros((nz,)),
        "encY_w": nrm(ks[6], (num_labels, flat)),             "encY_b": jnp.zeros((num_labels,)),
        "dec1_w": nrm(ks[7], (flat, nz + num_labels)),        "dec1_b": jnp.zeros((flat,)),
        "dec2_w": nrm(ks[8], (f_size * 8, f_size * 4, 3, 3)), "dec2_b": jnp.zeros((f_size * 4,)),
        "dec2b_g": jnp.ones((f_size * 4,)),                   "dec2b_b": jnp.zeros((f_size * 4,)),
        "dec3_w": nrm(ks[9], (f_size * 4, f_size * 2, 3, 3)), "dec3_b": jnp.zeros((f_size * 2,)),
        "dec3b_g": jnp.ones((f_size * 2,)),                   "dec3b_b": jnp.zeros((f_size * 2,)),
        "dec4_w": nrm(ks[10], (f_size * 2, f_size, 3, 3)),    "dec4_b": jnp.zeros((f_size,)),
        "dec4b_g": jnp.ones((f_size,)),                       "dec4b_b": jnp.zeros((f_size,)),
        "dec5_w": nrm(ks[11], (f_size, 3, 3, 3)),             "dec5_b": jnp.zeros((3,)),
    }
    return p


def prepare_params(p, f_size, in_size):
    """One-time weight rearrangement + bf16 cast (no per-forward transposes)."""
    bf16 = jnp.bfloat16
    C8, S = f_size * 8, in_size
    fp = {}
    for name in ("enc1", "enc2", "enc3", "enc4"):
        w = p[name + "_w"]                                 # (OC, IC, k, k)
        OC, IC, k, _ = w.shape
        fp[name + "_w"] = w.transpose(2, 3, 1, 0).reshape(k * k * IC, OC).astype(bf16)
        fp[name + "_b"] = p[name + "_b"]

    # Fused encoder heads (mu | logVar | y); rows permuted from NCHW-flatten
    # to NHWC-flatten order, so the encoder can flatten NHWC directly.
    head_w = jnp.concatenate(
        [p["encMu_w"], p["encLogVar_w"], p["encY_w"]], axis=0).T    # (flat, D)
    D = head_w.shape[1]
    head_w = head_w.reshape(C8, S, S, D).transpose(1, 2, 0, 3).reshape(C8 * S * S, D)
    fp["head_w"] = head_w.astype(bf16)
    fp["head_b"] = jnp.concatenate(
        [p["encMu_b"], p["encLogVar_b"], p["encY_b"]], axis=0)

    # dec1: output columns permuted to NHWC-flatten order so the decoder can
    # reshape straight to (N, S, S, C8) without a runtime transpose.
    dec1_w = p["dec1_w"].T                                          # (K, flat)
    K = dec1_w.shape[0]
    dec1_w = dec1_w.reshape(K, C8, S, S).transpose(0, 2, 3, 1).reshape(K, C8 * S * S)
    fp["dec1_w"] = dec1_w.astype(bf16)
    fp["dec1_b"] = p["dec1_b"].reshape(C8, S, S).transpose(1, 2, 0).reshape(-1)

    for name in ("dec2", "dec3", "dec4", "dec5"):
        fp[name + "_w"] = _subpixel_weight(p[name + "_w"]).astype(bf16)
        fp[name + "_b"] = jnp.tile(p[name + "_b"], 4)
    for name in ("dec2b", "dec3b", "dec4b"):
        fp[name + "_g"] = p[name + "_g"]
        fp[name + "_b"] = p[name + "_b"]
    return fp


def cvae_forward(fp, x, eps, nz, num_labels, f_size, in_size):
    N = x.shape[0]
    xh = x.transpose(0, 2, 3, 1).astype(jnp.bfloat16)     # NCHW -> NHWC once

    # ---- encode ----
    h = conv2d_nhwc(xh, fp["enc1_w"], fp["enc1_b"], 5, 2, 2, act="relu")
    h = conv2d_nhwc(h, fp["enc2_w"], fp["enc2_b"], 5, 2, 2, act="relu")
    h = conv2d_nhwc(h, fp["enc3_w"], fp["enc3_b"], 5, 2, 2, act="relu")
    h = conv2d_nhwc(h, fp["enc4_w"], fp["enc4_b"], 5, 2, 2, act="relu")
    flat = h.reshape(N, -1)                               # NHWC flatten (weights pre-permuted)
    heads = matmul_bias_act(flat, fp["head_w"], fp["head_b"],
                            out_dtype=jnp.float32)        # fused mu|logVar|y
    mu = heads[:, :nz]
    log_var = heads[:, nz:2 * nz]
    y = jax.nn.softmax(heads[:, 2 * nz:], axis=1)

    # ---- re_param ----
    sigma = jnp.exp(log_var / 2.0)
    z = mu + sigma * eps

    # ---- decode ----
    zy = jnp.concatenate([y, z], axis=1)                  # cat([y, z], dim=1)
    d = matmul_bias_act(zy, fp["dec1_w"], fp["dec1_b"], act="relu")
    d = d.reshape(N, in_size, in_size, f_size * 8)        # NHWC directly

    raw, d = conv_transpose2x_nhwc(d, fp["dec2_w"], fp["dec2_b"])
    d = bn_relu_from_raw(raw, d, fp["dec2b_g"], fp["dec2b_b"])
    raw, d = conv_transpose2x_nhwc(d, fp["dec3_w"], fp["dec3_b"])
    d = bn_relu_from_raw(raw, d, fp["dec3b_g"], fp["dec3b_b"])
    raw, d = conv_transpose2x_nhwc(d, fp["dec4_w"], fp["dec4_b"])
    d = bn_relu_from_raw(raw, d, fp["dec4b_g"], fp["dec4b_b"])
    _, rec = conv_transpose2x_nhwc(d, fp["dec5_w"], fp["dec5_b"],
                                   act="sigmoid", out_dtype=jnp.float32)

    return rec.transpose(0, 3, 1, 2), mu, log_var, y      # back to NCHW


if __name__ == "__main__":
    # Small config consistent with the module: imSize divisible by 2**4.
    nz, im_size, f_size, num_labels, batch = 16, 32, 4, 2, 2
    in_size = im_size // 2 ** 4

    key = jax.random.PRNGKey(0)
    k_param, k_x, k_eps = jax.random.split(key, 3)

    params = init_params(k_param, nz, im_size, f_size, num_labels)
    fparams = prepare_params(params, f_size, in_size)

    x = jax.random.normal(k_x, (batch, 3, im_size, im_size), dtype=jnp.float32)
    # TODO(synk): torch.randn noise of re_param reproduced with a fixed JAX key
    # (same distribution/shape, different RNG stream than PyTorch).
    eps = jax.random.normal(k_eps, (batch, nz), dtype=jnp.float32)

    fwd = jax.jit(functools.partial(cvae_forward, nz=nz, num_labels=num_labels,
                                    f_size=f_size, in_size=in_size))
    rec, mu, log_var, y = fwd(fparams, x, eps)
    jax.block_until_ready((rec, mu, log_var, y))

    assert rec.shape == (batch, 3, im_size, im_size)
    assert mu.shape == (batch, nz) and log_var.shape == (batch, nz)
    assert y.shape == (batch, num_labels)
    assert bool(jnp.all(jnp.isfinite(rec)))
    print("KERNEL_OK")
</pallas_src>

<mosaic_0001>
module attributes {stable_mosaic.version = 11 : i64} {
  func.func @_mm_bias_act_kernel(%arg0: i32, %arg1: i32, %arg2: i32, %arg3: memref<256x75xbf16, #tpu.memory_space<vmem>>, %arg4: memref<75x128xbf16, #tpu.memory_space<vmem>>, %arg5: memref<1x128xf32, #tpu.memory_space<vmem>>, %arg6: memref<256x128xbf16, #tpu.memory_space<vmem>>, %arg7: memref<256x128xf32, #tpu.memory_space<vmem>>) attributes {dimension_semantics = [#tpu.dimension_semantics<parallel>, #tpu.dimension_semantics<parallel>, #tpu.dimension_semantics<arbitrary>], iteration_bounds = array<i64: 2, 1, 1>, scalar_prefetch = 0 : i64, scratch_operands = 1 : i64, tpu.core_type = #tpu.core_type<tc>, window_params = [{transform_indices = @transform_0, window_bounds = array<i64: 256, 75>}, {transform_indices = @transform_1, window_bounds = array<i64: 75, 128>}, {transform_indices = @transform_2, window_bounds = array<i64: 1, 128>}, {transform_indices = @transform_3, window_bounds = array<i64: 256, 128>}]} {
    %c0_i32 = arith.constant 0 : i32
    %0 = arith.cmpi eq, %arg2, %c0_i32 : i32
    %1 = arith.extui %0 : i1 to i32
    %c0_i32_0 = arith.constant 0 : i32
    %2 = arith.cmpi ne, %1, %c0_i32_0 : i32
    scf.if %2 {
      %cst_10 = arith.constant 0.000000e+00 : f32
      %12 = vector.broadcast %cst_10 : f32 to vector<256x128xf32>
      %c0_11 = arith.constant 0 : index
      %c0_12 = arith.constant 0 : index
      %13 = vector.load %arg7[%c0_11, %c0_12] : memref<256x128xf32, #tpu.memory_space<vmem>>, vector<256x128xf32>
      tpu.vector_store %arg7[%c0_11, %c0_12], %12 {strides = array<i32>} : memref<256x128xf32, #tpu.memory_space<vmem>>, vector<256x128xf32>,
    } else {
    }
    %c0 = arith.constant 0 : index
    %c0_1 = arith.constant 0 : index
    %3 = vector.load %arg7[%c0, %c0_1] : memref<256x128xf32, #tpu.memory_space<vmem>>, vector<256x128xf32>
    %c0_2 = arith.constant 0 : index
    %c0_3 = arith.constant 0 : index
    %4 = vector.load %arg3[%c0_2, %c0_3] : memref<256x75xbf16, #tpu.memory_space<vmem>>, vector<256x75xbf16>
    %c0_4 = arith.constant 0 : index
    %c0_5 = arith.constant 0 : index
    %5 = vector.load %arg4[%c0_4, %c0_5] : memref<75x128xbf16, #tpu.memory_space<vmem>>, vector<75x128xbf16>
    %cst = arith.constant dense<0.000000e+00> : vector<256x128xf32>
    %6 = tpu.matmul %4, %5, %cst {dimension_numbers = #tpu.dot_dimension_numbers<[1], [0], [0], [1], [0, 0, 1, 1], [], []>} : vector<256x75xbf16>, vector<75x128xbf16>, vector<256x128xf32> -> vector<256x128xf32>
    %7 = arith.addf %3, %6 : vector<256x128xf32>
    %c0_6 = arith.constant 0 : index
    %c0_7 = arith.constant 0 : index
    %8 = vector.load %arg7[%c0_6, %c0_7] : memref<256x128xf32, #tpu.memory_space<vmem>>, vector<256x128xf32>
    tpu.vector_store %arg7[%c0_6, %c0_7], %7 {strides = array<i32>} : memref<256x128xf32, #tpu.memory_space<vmem>>, vector<256x128xf32>,
    %c0_i32_8 = arith.constant 0 : i32
    %9 = arith.cmpi eq, %arg2, %c0_i32_8 : i32
    %10 = arith.extui %9 : i1 to i32
    %c0_i32_9 = arith.constant 0 : i32
    %11 = arith.cmpi ne, %10, %c0_i32_9 : i32
    scf.if %11 {
      %c0_10 = arith.constant 0 : index
      %c0_11 = arith.constant 0 : index
      %12 = vector.load %arg7[%c0_10, %c0_11] : memref<256x128xf32, #tpu.memory_space<vmem>>, vector<256x128xf32>
      %c0_12 = arith.constant 0 : index
      %c0_13 = arith.constant 0 : index
      %13 = vector.load %arg5[%c0_12, %c0_13] : memref<1x128xf32, #tpu.memory_space<vmem>>, vector<1x128xf32>
      %14 = vector.broadcast %13 : vector<1x128xf32> to vector<256x128xf32>
      %15 = arith.addf %12, %14 : vector<256x128xf32>
      %cst_14 = arith.constant 0.000000e+00 : f32
      %16 = vector.broadcast %cst_14 : f32 to vector<256x128xf32>
      %17 = arith.maximumf %15, %16 : vector<256x128xf32>
      %18 = arith.truncf %17 : vector<256x128xf32> to vector<256x128xbf16>
      %c0_15 = arith.constant 0 : index
      %c0_16 = arith.constant 0 : index
      %19 = vector.load %arg6[%c0_15, %c0_16] : memref<256x128xbf16, #tpu.memory_space<vmem>>, vector<256x128xbf16>
      tpu.vector_store %arg6[%c0_15, %c0_16], %18 {strides = array<i32>} : memref<256x128xbf16, #tpu.memory_space<vmem>>, vector<256x128xbf16>,
    } else {
    }
    return
  }
  func.func @transform_0(%arg0: i32, %arg1: i32, %arg2: i32) -> (i32, i32) {
    %c0_i32 = arith.constant 0 : i32
    return %arg0, %arg2 : i32, i32
  }
  func.func @transform_1(%arg0: i32, %arg1: i32, %arg2: i32) -> (i32, i32) {
    %c0_i32 = arith.constant 0 : i32
    return %arg2, %arg1 : i32, i32
  }
  func.func @transform_2(%arg0: i32, %arg1: i32, %arg2: i32) -> (i32, i32) {
    %c0_i32 = arith.constant 0 : i32
    %c0_i32_0 = arith.constant 0 : i32
    return %c0_i32, %arg1 : i32, i32
  }
  func.func @transform_3(%arg0: i32, %arg1: i32, %arg2: i32) -> (i32, i32) {
    %c0_i32 = arith.constant 0 : i32
    return %arg0, %arg1 : i32, i32
  }
}

module attributes {stable_mosaic.version = 11 : i64} {
  func.func @_mm_bias_act_kernel(%arg0: i32, %arg1: i32, %arg2: i32, %arg3: memref<128x100xbf16, #tpu.memory_space<vmem>>, %arg4: memref<100x128xbf16, #tpu.memory_space<vmem>>, %arg5: memref<1x128xf32, #tpu.memory_space<vmem>>, %arg6: memref<128x128xbf16, #tpu.memory_space<vmem>>, %arg7: memref<128x128xf32, #tpu.memory_space<vmem>>) attributes {dimension_semantics = [#tpu.dimension_semantics<parallel>, #tpu.dimension_semantics<parallel>, #tpu.dimension_semantics<arbitrary>], iteration_bounds = array<i64: 1, 1, 1>, scalar_prefetch = 0 : i64, scratch_operands = 1 : i64, tpu.core_type = #tpu.core_type<tc>, window_params = [{transform_indices = @transform_0, window_bounds = array<i64: 128, 100>}, {transform_indices = @transform_1, window_bounds = array<i64: 100, 128>}, {transform_indices = @transform_2, window_bounds = array<i64: 1, 128>}, {transform_indices = @transform_3, window_bounds = array<i64: 128, 128>}]} {
    %c0_i32 = arith.constant 0 : i32
    %0 = arith.cmpi eq, %arg2, %c0_i32 : i32
    %1 = arith.extui %0 : i1 to i32
    %c0_i32_0 = arith.constant 0 : i32
    %2 = arith.cmpi ne, %1, %c0_i32_0 : i32
    scf.if %2 {
      %cst_10 = arith.constant 0.000000e+00 : f32
      %12 = vector.broadcast %cst_10 : f32 to vector<128x128xf32>
      %c0_11 = arith.constant 0 : index
      %c0_12 = arith.constant 0 : index
      %13 = vector.load %arg7[%c0_11, %c0_12] : memref<128x128xf32, #tpu.memory_space<vmem>>, vector<128x128xf32>
      tpu.vector_store %arg7[%c0_11, %c0_12], %12 {strides = array<i32>} : memref<128x128xf32, #tpu.memory_space<vmem>>, vector<128x128xf32>,
    } else {
    }
    %c0 = arith.constant 0 : index
    %c0_1 = arith.constant 0 : index
    %3 = vector.load %arg7[%c0, %c0_1] : memref<128x128xf32, #tpu.memory_space<vmem>>, vector<128x128xf32>
    %c0_2 = arith.constant 0 : index
    %c0_3 = arith.constant 0 : index
    %4 = vector.load %arg3[%c0_2, %c0_3] : memref<128x100xbf16, #tpu.memory_space<vmem>>, vector<128x100xbf16>
    %c0_4 = arith.constant 0 : index
    %c0_5 = arith.constant 0 : index
    %5 = vector.load %arg4[%c0_4, %c0_5] : memref<100x128xbf16, #tpu.memory_space<vmem>>, vector<100x128xbf16>
    %cst = arith.constant dense<0.000000e+00> : vector<128x128xf32>
    %6 = tpu.matmul %4, %5, %cst {dimension_numbers = #tpu.dot_dimension_numbers<[1], [0], [0], [1], [0, 0, 1, 1], [], []>} : vector<128x100xbf16>, vector<100x128xbf16>, vector<128x128xf32> -> vector<128x128xf32>
    %7 = arith.addf %3, %6 : vector<128x128xf32>
    %c0_6 = arith.constant 0 : index
    %c0_7 = arith.constant 0 : index
    %8 = vector.load %arg7[%c0_6, %c0_7] : memref<128x128xf32, #tpu.memory_space<vmem>>, vector<128x128xf32>
    tpu.vector_store %arg7[%c0_6, %c0_7], %7 {strides = array<i32>} : memref<128x128xf32, #tpu.memory_space<vmem>>, vector<128x128xf32>,
    %c0_i32_8 = arith.constant 0 : i32
    %9 = arith.cmpi eq, %arg2, %c0_i32_8 : i32
    %10 = arith.extui %9 : i1 to i32
    %c0_i32_9 = arith.constant 0 : i32
    %11 = arith.cmpi ne, %10, %c0_i32_9 : i32
    scf.if %11 {
      %c0_10 = arith.constant 0 : index
      %c0_11 = arith.constant 0 : index
      %12 = vector.load %arg7[%c0_10, %c0_11] : memref<128x128xf32, #tpu.memory_space<vmem>>, vector<128x128xf32>
      %c0_12 = arith.constant 0 : index
      %c0_13 = arith.constant 0 : index
      %13 = vector.load %arg5[%c0_12, %c0_13] : memref<1x128xf32, #tpu.memory_space<vmem>>, vector<1x128xf32>
      %14 = vector.broadcast %13 : vector<1x128xf32> to vector<128x128xf32>
      %15 = arith.addf %12, %14 : vector<128x128xf32>
      %cst_14 = arith.constant 0.000000e+00 : f32
      %16 = vector.broadcast %cst_14 : f32 to vector<128x128xf32>
      %17 = arith.maximumf %15, %16 : vector<128x128xf32>
      %18 = arith.truncf %17 : vector<128x128xf32> to vector<128x128xbf16>
      %c0_15 = arith.constant 0 : index
      %c0_16 = arith.constant 0 : index
      %19 = vector.load %arg6[%c0_15, %c0_16] : memref<128x128xbf16, #tpu.memory_space<vmem>>, vector<128x128xbf16>
      tpu.vector_store %arg6[%c0_15, %c0_16], %18 {strides = array<i32>} : memref<128x128xbf16, #tpu.memory_space<vmem>>, vector<128x128xbf16>,
    } else {
    }
    return
  }
  func.func @transform_0(%arg0: i32, %arg1: i32, %arg2: i32) -> (i32, i32) {
    %c0_i32 = arith.constant 0 : i32
    return %arg0, %arg2 : i32, i32
  }
  func.func @transform_1(%arg0: i32, %arg1: i32, %arg2: i32) -> (i32, i32) {
    %c0_i32 = arith.constant 0 : i32
    return %arg2, %arg1 : i32, i32
  }
  func.func @transform_2(%arg0: i32, %arg1: i32, %arg2: i32) -> (i32, i32) {
    %c0_i32 = arith.constant 0 : i32
    %c0_i32_0 = arith.constant 0 : i32
    return %c0_i32, %arg1 : i32, i32
  }
  func.func @transform_3(%arg0: i32, %arg1: i32, %arg2: i32) -> (i32, i32) {
    %c0_i32 = arith.constant 0 : i32
    return %arg0, %arg1 : i32, i32
  }
}

module attributes {stable_mosaic.version = 11 : i64} {
  func.func @_mm_bias_act_kernel(%arg0: i32, %arg1: i32, %arg2: i32, %arg3: memref<32x200xbf16, #tpu.memory_space<vmem>>, %arg4: memref<200x128xbf16, #tpu.memory_space<vmem>>, %arg5: memref<1x128xf32, #tpu.memory_space<vmem>>, %arg6: memref<32x128xbf16, #tpu.memory_space<vmem>>, %arg7: memref<32x128xf32, #tpu.memory_space<vmem>>) attributes {dimension_semantics = [#tpu.dimension_semantics<parallel>, #tpu.dimension_semantics<parallel>, #tpu.dimension_semantics<arbitrary>], iteration_bounds = array<i64: 1, 1, 1>, scalar_prefetch = 0 : i64, scratch_operands = 1 : i64, tpu.core_type = #tpu.core_type<tc>, window_params = [{transform_indices = @transform_0, window_bounds = array<i64: 32, 200>}, {transform_indices = @transform_1, window_bounds = array<i64: 200, 128>}, {transform_indices = @transform_2, window_bounds = array<i64: 1, 128>}, {transform_indices = @transform_3, window_bounds = array<i64: 32, 128>}]} {
    %c0_i32 = arith.constant 0 : i32
    %0 = arith.cmpi eq, %arg2, %c0_i32 : i32
    %1 = arith.extui %0 : i1 to i32
    %c0_i32_0 = arith.constant 0 : i32
    %2 = arith.cmpi ne, %1, %c0_i32_0 : i32
    scf.if %2 {
      %cst_10 = arith.constant 0.000000e+00 : f32
      %12 = vector.broadcast %cst_10 : f32 to vector<32x128xf32>
      %c0_11 = arith.constant 0 : index
      %c0_12 = arith.constant 0 : index
      %13 = vector.load %arg7[%c0_11, %c0_12] : memref<32x128xf32, #tpu.memory_space<vmem>>, vector<32x128xf32>
      tpu.vector_store %arg7[%c0_11, %c0_12], %12 {strides = array<i32>} : memref<32x128xf32, #tpu.memory_space<vmem>>, vector<32x128xf32>,
    } else {
    }
    %c0 = arith.constant 0 : index
    %c0_1 = arith.constant 0 : index
    %3 = vector.load %arg7[%c0, %c0_1] : memref<32x128xf32, #tpu.memory_space<vmem>>, vector<32x128xf32>
    %c0_2 = arith.constant 0 : index
    %c0_3 = arith.constant 0 : index
    %4 = vector.load %arg3[%c0_2, %c0_3] : memref<32x200xbf16, #tpu.memory_space<vmem>>, vector<32x200xbf16>
    %c0_4 = arith.constant 0 : index
    %c0_5 = arith.constant 0 : index
    %5 = vector.load %arg4[%c0_4, %c0_5] : memref<200x128xbf16, #tpu.memory_space<vmem>>, vector<200x128xbf16>
    %cst = arith.constant dense<0.000000e+00> : vector<32x128xf32>
    %6 = tpu.matmul %4, %5, %cst {dimension_numbers = #tpu.dot_dimension_numbers<[1], [0], [0], [1], [0, 0, 1, 1], [], []>} : vector<32x200xbf16>, vector<200x128xbf16>, vector<32x128xf32> -> vector<32x128xf32>
    %7 = arith.addf %3, %6 : vector<32x128xf32>
    %c0_6 = arith.constant 0 : index
    %c0_7 = arith.constant 0 : index
    %8 = vector.load %arg7[%c0_6, %c0_7] : memref<32x128xf32, #tpu.memory_space<vmem>>, vector<32x128xf32>
    tpu.vector_store %arg7[%c0_6, %c0_7], %7 {strides = array<i32>} : memref<32x128xf32, #tpu.memory_space<vmem>>, vector<32x128xf32>,
    %c0_i32_8 = arith.constant 0 : i32
    %9 = arith.cmpi eq, %arg2, %c0_i32_8 : i32
    %10 = arith.extui %9 : i1 to i32
    %c0_i32_9 = arith.constant 0 : i32
    %11 = arith.cmpi ne, %10, %c0_i32_9 : i32
    scf.if %11 {
      %c0_10 = arith.constant 0 : index
      %c0_11 = arith.constant 0 : index
      %12 = vector.load %arg7[%c0_10, %c0_11] : memref<32x128xf32, #tpu.memory_space<vmem>>, vector<32x128xf32>
      %c0_12 = arith.constant 0 : index
      %c0_13 = arith.constant 0 : index
      %13 = vector.load %arg5[%c0_12, %c0_13] : memref<1x128xf32, #tpu.memory_space<vmem>>, vector<1x128xf32>
      %14 = vector.broadcast %13 : vector<1x128xf32> to vector<32x128xf32>
      %15 = arith.addf %12, %14 : vector<32x128xf32>
      %cst_14 = arith.constant 0.000000e+00 : f32
      %16 = vector.broadcast %cst_14 : f32 to vector<32x128xf32>
      %17 = arith.maximumf %15, %16 : vector<32x128xf32>
      %18 = arith.truncf %17 : vector<32x128xf32> to vector<32x128xbf16>
      %c0_15 = arith.constant 0 : index
      %c0_16 = arith.constant 0 : index
      %19 = vector.load %arg6[%c0_15, %c0_16] : memref<32x128xbf16, #tpu.memory_space<vmem>>, vector<32x128xbf16>
      tpu.vector_store %arg6[%c0_15, %c0_16], %18 {strides = array<i32>} : memref<32x128xbf16, #tpu.memory_space<vmem>>, vector<32x128xbf16>,
    } else {
    }
    return
  }
  func.func @transform_0(%arg0: i32, %arg1: i32, %arg2: i32) -> (i32, i32) {
    %c0_i32 = arith.constant 0 : i32
    return %arg0, %arg2 : i32, i32
  }
  func.func @transform_1(%arg0: i32, %arg1: i32, %arg2: i32) -> (i32, i32) {
    %c0_i32 = arith.constant 0 : i32
    return %arg2, %arg1 : i32, i32
  }
  func.func @transform_2(%arg0: i32, %arg1: i32, %arg2: i32) -> (i32, i32) {
    %c0_i32 = arith.constant 0 : i32
    %c0_i32_0 = arith.constant 0 : i32
    return %c0_i32, %arg1 : i32, i32
  }
  func.func @transform_3(%arg0: i32, %arg1: i32, %arg2: i32) -> (i32, i32) {
    %c0_i32 = arith.constant 0 : i32
    return %arg0, %arg1 : i32, i32
  }
}

module attributes {stable_mosaic.version = 11 : i64} {
  func.func @_mm_bias_act_kernel(%arg0: i32, %arg1: i32, %arg2: i32, %arg3: memref<16x400xbf16, #tpu.memory_space<vmem>>, %arg4: memref<400x128xbf16, #tpu.memory_space<vmem>>, %arg5: memref<1x128xf32, #tpu.memory_space<vmem>>, %arg6: memref<16x128xbf16, #tpu.memory_space<vmem>>, %arg7: memref<16x128xf32, #tpu.memory_space<vmem>>) attributes {dimension_semantics = [#tpu.dimension_semantics<parallel>, #tpu.dimension_semantics<parallel>, #tpu.dimension_semantics<arbitrary>], iteration_bounds = array<i64: 1, 1, 1>, scalar_prefetch = 0 : i64, scratch_operands = 1 : i64, tpu.core_type = #tpu.core_type<tc>, window_params = [{transform_indices = @transform_0, window_bounds = array<i64: 16, 400>}, {transform_indices = @transform_1, window_bounds = array<i64: 400, 128>}, {transform_indices = @transform_2, window_bounds = array<i64: 1, 128>}, {transform_indices = @transform_3, window_bounds = array<i64: 16, 128>}]} {
    %c0_i32 = arith.constant 0 : i32
    %0 = arith.cmpi eq, %arg2, %c0_i32 : i32
    %1 = arith.extui %0 : i1 to i32
    %c0_i32_0 = arith.constant 0 : i32
    %2 = arith.cmpi ne, %1, %c0_i32_0 : i32
    scf.if %2 {
      %cst_10 = arith.constant 0.000000e+00 : f32
      %12 = vector.broadcast %cst_10 : f32 to vector<16x128xf32>
      %c0_11 = arith.constant 0 : index
      %c0_12 = arith.constant 0 : index
      %13 = vector.load %arg7[%c0_11, %c0_12] : memref<16x128xf32, #tpu.memory_space<vmem>>, vector<16x128xf32>
      tpu.vector_store %arg7[%c0_11, %c0_12], %12 {strides = array<i32>} : memref<16x128xf32, #tpu.memory_space<vmem>>, vector<16x128xf32>,
    } else {
    }
    %c0 = arith.constant 0 : index
    %c0_1 = arith.constant 0 : index
    %3 = vector.load %arg7[%c0, %c0_1] : memref<16x128xf32, #tpu.memory_space<vmem>>, vector<16x128xf32>
    %c0_2 = arith.constant 0 : index
    %c0_3 = arith.constant 0 : index
    %4 = vector.load %arg3[%c0_2, %c0_3] : memref<16x400xbf16, #tpu.memory_space<vmem>>, vector<16x400xbf16>
    %c0_4 = arith.constant 0 : index
    %c0_5 = arith.constant 0 : index
    %5 = vector.load %arg4[%c0_4, %c0_5] : memref<400x128xbf16, #tpu.memory_space<vmem>>, vector<400x128xbf16>
    %cst = arith.constant dense<0.000000e+00> : vector<16x128xf32>
    %6 = tpu.matmul %4, %5, %cst {dimension_numbers = #tpu.dot_dimension_numbers<[1], [0], [0], [1], [0, 0, 1, 1], [], []>} : vector<16x400xbf16>, vector<400x128xbf16>, vector<16x128xf32> -> vector<16x128xf32>
    %7 = arith.addf %3, %6 : vector<16x128xf32>
    %c0_6 = arith.constant 0 : index
    %c0_7 = arith.constant 0 : index
    %8 = vector.load %arg7[%c0_6, %c0_7] : memref<16x128xf32, #tpu.memory_space<vmem>>, vector<16x128xf32>
    tpu.vector_store %arg7[%c0_6, %c0_7], %7 {strides = array<i32>} : memref<16x128xf32, #tpu.memory_space<vmem>>, vector<16x128xf32>,
    %c0_i32_8 = arith.constant 0 : i32
    %9 = arith.cmpi eq, %arg2, %c0_i32_8 : i32
    %10 = arith.extui %9 : i1 to i32
    %c0_i32_9 = arith.constant 0 : i32
    %11 = arith.cmpi ne, %10, %c0_i32_9 : i32
    scf.if %11 {
      %c0_10 = arith.constant 0 : index
      %c0_11 = arith.constant 0 : index
      %12 = vector.load %arg7[%c0_10, %c0_11] : memref<16x128xf32, #tpu.memory_space<vmem>>, vector<16x128xf32>
      %c0_12 = arith.constant 0 : index
      %c0_13 = arith.constant 0 : index
      %13 = vector.load %arg5[%c0_12, %c0_13] : memref<1x128xf32, #tpu.memory_space<vmem>>, vector<1x128xf32>
      %14 = vector.broadcast %13 : vector<1x128xf32> to vector<16x128xf32>
      %15 = arith.addf %12, %14 : vector<16x128xf32>
      %cst_14 = arith.constant 0.000000e+00 : f32
      %16 = vector.broadcast %cst_14 : f32 to vector<16x128xf32>
      %17 = arith.maximumf %15, %16 : vector<16x128xf32>
      %18 = arith.truncf %17 : vector<16x128xf32> to vector<16x128xbf16>
      %c0_15 = arith.constant 0 : index
      %c0_16 = arith.constant 0 : index
      %19 = vector.load %arg6[%c0_15, %c0_16] : memref<16x128xbf16, #tpu.memory_space<vmem>>, vector<16x128xbf16>
      tpu.vector_store %arg6[%c0_15, %c0_16], %18 {strides = array<i32>} : memref<16x128xbf16, #tpu.memory_space<vmem>>, vector<16x128xbf16>,
    } else {
    }
    return
  }
  func.func @transform_0(%arg0: i32, %arg1: i32, %arg2: i32) -> (i32, i32) {
    %c0_i32 = arith.constant 0 : i32
    return %arg0, %arg2 : i32, i32
  }
  func.func @transform_1(%arg0: i32, %arg1: i32, %arg2: i32) -> (i32, i32) {
    %c0_i32 = arith.constant 0 : i32
    return %arg2, %arg1 : i32, i32
  }
  func.func @transform_2(%arg0: i32, %arg1: i32, %arg2: i32) -> (i32, i32) {
    %c0_i32 = arith.constant 0 : i32
    %c0_i32_0 = arith.constant 0 : i32
    return %c0_i32, %arg1 : i32, i32
  }
  func.func @transform_3(%arg0: i32, %arg1: i32, %arg2: i32) -> (i32, i32) {
    %c0_i32 = arith.constant 0 : i32
    return %arg0, %arg1 : i32, i32
  }
}

module attributes {stable_mosaic.version = 11 : i64} {
  func.func @_mm_bias_act_kernel(%arg0: i32, %arg1: i32, %arg2: i32, %arg3: memref<16x128xbf16, #tpu.memory_space<vmem>>, %arg4: memref<128x128xbf16, #tpu.memory_space<vmem>>, %arg5: memref<1x128xf32, #tpu.memory_space<vmem>>, %arg6: memref<16x128xf32, #tpu.memory_space<vmem>>, %arg7: memref<16x128xf32, #tpu.memory_space<vmem>>) attributes {dimension_semantics = [#tpu.dimension_semantics<parallel>, #tpu.dimension_semantics<parallel>, #tpu.dimension_semantics<arbitrary>], iteration_bounds = array<i64: 1, 1, 1>, scalar_prefetch = 0 : i64, scratch_operands = 1 : i64, tpu.core_type = #tpu.core_type<tc>, window_params = [{transform_indices = @transform_0, window_bounds = array<i64: 16, 128>}, {transform_indices = @transform_1, window_bounds = array<i64: 128, 128>}, {transform_indices = @transform_2, window_bounds = array<i64: 1, 128>}, {transform_indices = @transform_3, window_bounds = array<i64: 16, 128>}]} {
    %c0_i32 = arith.constant 0 : i32
    %0 = arith.cmpi eq, %arg2, %c0_i32 : i32
    %1 = arith.extui %0 : i1 to i32
    %c0_i32_0 = arith.constant 0 : i32
    %2 = arith.cmpi ne, %1, %c0_i32_0 : i32
    scf.if %2 {
      %cst_10 = arith.constant 0.000000e+00 : f32
      %12 = vector.broadcast %cst_10 : f32 to vector<16x128xf32>
      %c0_11 = arith.constant 0 : index
      %c0_12 = arith.constant 0 : index
      %13 = vector.load %arg7[%c0_11, %c0_12] : memref<16x128xf32, #tpu.memory_space<vmem>>, vector<16x128xf32>
      tpu.vector_store %arg7[%c0_11, %c0_12], %12 {strides = array<i32>} : memref<16x128xf32, #tpu.memory_space<vmem>>, vector<16x128xf32>,
    } else {
    }
    %c0 = arith.constant 0 : index
    %c0_1 = arith.constant 0 : index
    %3 = vector.load %arg7[%c0, %c0_1] : memref<16x128xf32, #tpu.memory_space<vmem>>, vector<16x128xf32>
    %c0_2 = arith.constant 0 : index
    %c0_3 = arith.constant 0 : index
    %4 = vector.load %arg3[%c0_2, %c0_3] : memref<16x128xbf16, #tpu.memory_space<vmem>>, vector<16x128xbf16>
    %c0_4 = arith.constant 0 : index
    %c0_5 = arith.constant 0 : index
    %5 = vector.load %arg4[%c0_4, %c0_5] : memref<128x128xbf16, #tpu.memory_space<vmem>>, vector<128x128xbf16>
    %cst = arith.constant dense<0.000000e+00> : vector<16x128xf32>
    %6 = tpu.matmul %4, %5, %cst {dimension_numbers = #tpu.dot_dimension_numbers<[1], [0], [0], [1], [0, 0, 1, 1], [], []>} : vector<16x128xbf16>, vector<128x128xbf16>, vector<16x128xf32> -> vector<16x128xf32>
    %7 = arith.addf %3, %6 : vector<16x128xf32>
    %c0_6 = arith.constant 0 : index
    %c0_7 = arith.constant 0 : index
    %8 = vector.load %arg7[%c0_6, %c0_7] : memref<16x128xf32, #tpu.memory_space<vmem>>, vector<16x128xf32>
    tpu.vector_store %arg7[%c0_6, %c0_7], %7 {strides = array<i32>} : memref<16x128xf32, #tpu.memory_space<vmem>>, vector<16x128xf32>,
    %c0_i32_8 = arith.constant 0 : i32
    %9 = arith.cmpi eq, %arg2, %c0_i32_8 : i32
    %10 = arith.extui %9 : i1 to i32
    %c0_i32_9 = arith.constant 0 : i32
    %11 = arith.cmpi ne, %10, %c0_i32_9 : i32
    scf.if %11 {
      %c0_10 = arith.constant 0 : index
      %c0_11 = arith.constant 0 : index
      %12 = vector.load %arg7[%c0_10, %c0_11] : memref<16x128xf32, #tpu.memory_space<vmem>>, vector<16x128xf32>
      %c0_12 = arith.constant 0 : index
      %c0_13 = arith.constant 0 : index
      %13 = vector.load %arg5[%c0_12, %c0_13] : memref<1x128xf32, #tpu.memory_space<vmem>>, vector<1x128xf32>
      %14 = vector.broadcast %13 : vector<1x128xf32> to vector<16x128xf32>
      %15 = arith.addf %12, %14 : vector<16x128xf32>
      %c0_14 = arith.constant 0 : index
      %c0_15 = arith.constant 0 : index
      %16 = vector.load %arg6[%c0_14, %c0_15] : memref<16x128xf32, #tpu.memory_space<vmem>>, vector<16x128xf32>
      tpu.vector_store %arg6[%c0_14, %c0_15], %15 {strides = array<i32>} : memref<16x128xf32, #tpu.memory_space<vmem>>, vector<16x128xf32>,
    } else {
    }
    return
  }
  func.func @transform_0(%arg0: i32, %arg1: i32, %arg2: i32) -> (i32, i32) {
    %c0_i32 = arith.constant 0 : i32
    return %arg0, %arg2 : i32, i32
  }
  func.func @transform_1(%arg0: i32, %arg1: i32, %arg2: i32) -> (i32, i32) {
    %c0_i32 = arith.constant 0 : i32
    return %arg2, %arg1 : i32, i32
  }
  func.func @transform_2(%arg0: i32, %arg1: i32, %arg2: i32) -> (i32, i32) {
    %c0_i32 = arith.constant 0 : i32
    %c0_i32_0 = arith.constant 0 : i32
    return %c0_i32, %arg1 : i32, i32
  }
  func.func @transform_3(%arg0: i32, %arg1: i32, %arg2: i32) -> (i32, i32) {
    %c0_i32 = arith.constant 0 : i32
    return %arg0, %arg1 : i32, i32
  }
}

module attributes {stable_mosaic.version = 11 : i64} {
  func.func @_mm_bias_act_kernel(%arg0: i32, %arg1: i32, %arg2: i32, %arg3: memref<16x18xbf16, #tpu.memory_space<vmem>>, %arg4: memref<18x128xbf16, #tpu.memory_space<vmem>>, %arg5: memref<1x128xf32, #tpu.memory_space<vmem>>, %arg6: memref<16x128xbf16, #tpu.memory_space<vmem>>, %arg7: memref<16x128xf32, #tpu.memory_space<vmem>>) attributes {dimension_semantics = [#tpu.dimension_semantics<parallel>, #tpu.dimension_semantics<parallel>, #tpu.dimension_semantics<arbitrary>], iteration_bounds = array<i64: 1, 1, 1>, scalar_prefetch = 0 : i64, scratch_operands = 1 : i64, tpu.core_type = #tpu.core_type<tc>, window_params = [{transform_indices = @transform_0, window_bounds = array<i64: 16, 18>}, {transform_indices = @transform_1, window_bounds = array<i64: 18, 128>}, {transform_indices = @transform_2, window_bounds = array<i64: 1, 128>}, {transform_indices = @transform_3, window_bounds = array<i64: 16, 128>}]} {
    %c0_i32 = arith.constant 0 : i32
    %0 = arith.cmpi eq, %arg2, %c0_i32 : i32
    %1 = arith.extui %0 : i1 to i32
    %c0_i32_0 = arith.constant 0 : i32
    %2 = arith.cmpi ne, %1, %c0_i32_0 : i32
    scf.if %2 {
      %cst_10 = arith.constant 0.000000e+00 : f32
      %12 = vector.broadcast %cst_10 : f32 to vector<16x128xf32>
      %c0_11 = arith.constant 0 : index
      %c0_12 = arith.constant 0 : index
      %13 = vector.load %arg7[%c0_11, %c0_12] : memref<16x128xf32, #tpu.memory_space<vmem>>, vector<16x128xf32>
      tpu.vector_store %arg7[%c0_11, %c0_12], %12 {strides = array<i32>} : memref<16x128xf32, #tpu.memory_space<vmem>>, vector<16x128xf32>,
    } else {
    }
    %c0 = arith.constant 0 : index
    %c0_1 = arith.constant 0 : index
    %3 = vector.load %arg7[%c0, %c0_1] : memref<16x128xf32, #tpu.memory_space<vmem>>, vector<16x128xf32>
    %c0_2 = arith.constant 0 : index
    %c0_3 = arith.constant 0 : index
    %4 = vector.load %arg3[%c0_2, %c0_3] : memref<16x18xbf16, #tpu.memory_space<vmem>>, vector<16x18xbf16>
    %c0_4 = arith.constant 0 : index
    %c0_5 = arith.constant 0 : index
    %5 = vector.load %arg4[%c0_4, %c0_5] : memref<18x128xbf16, #tpu.memory_space<vmem>>, vector<18x128xbf16>
    %cst = arith.constant dense<0.000000e+00> : vector<16x128xf32>
    %6 = tpu.matmul %4, %5, %cst {dimension_numbers = #tpu.dot_dimension_numbers<[1], [0], [0], [1], [0, 0, 1, 1], [], []>} : vector<16x18xbf16>, vector<18x128xbf16>, vector<16x128xf32> -> vector<16x128xf32>
    %7 = arith.addf %3, %6 : vector<16x128xf32>
    %c0_6 = arith.constant 0 : index
    %c0_7 = arith.constant 0 : index
    %8 = vector.load %arg7[%c0_6, %c0_7] : memref<16x128xf32, #tpu.memory_space<vmem>>, vector<16x128xf32>
    tpu.vector_store %arg7[%c0_6, %c0_7], %7 {strides = array<i32>} : memref<16x128xf32, #tpu.memory_space<vmem>>, vector<16x128xf32>,
    %c0_i32_8 = arith.constant 0 : i32
    %9 = arith.cmpi eq, %arg2, %c0_i32_8 : i32
    %10 = arith.extui %9 : i1 to i32
    %c0_i32_9 = arith.constant 0 : i32
    %11 = arith.cmpi ne, %10, %c0_i32_9 : i32
    scf.if %11 {
      %c0_10 = arith.constant 0 : index
      %c0_11 = arith.constant 0 : index
      %12 = vector.load %arg7[%c0_10, %c0_11] : memref<16x128xf32, #tpu.memory_space<vmem>>, vector<16x128xf32>
      %c0_12 = arith.constant 0 : index
      %c0_13 = arith.constant 0 : index
      %13 = vector.load %arg5[%c0_12, %c0_13] : memref<1x128xf32, #tpu.memory_space<vmem>>, vector<1x128xf32>
      %14 = vector.broadcast %13 : vector<1x128xf32> to vector<16x128xf32>
      %15 = arith.addf %12, %14 : vector<16x128xf32>
      %cst_14 = arith.constant 0.000000e+00 : f32
      %16 = vector.broadcast %cst_14 : f32 to vector<16x128xf32>
      %17 = arith.maximumf %15, %16 : vector<16x128xf32>
      %18 = arith.truncf %17 : vector<16x128xf32> to vector<16x128xbf16>
      %c0_15 = arith.constant 0 : index
      %c0_16 = arith.constant 0 : index
      %19 = vector.load %arg6[%c0_15, %c0_16] : memref<16x128xbf16, #tpu.memory_space<vmem>>, vector<16x128xbf16>
      tpu.vector_store %arg6[%c0_15, %c0_16], %18 {strides = array<i32>} : memref<16x128xbf16, #tpu.memory_space<vmem>>, vector<16x128xbf16>,
    } else {
    }
    return
  }
  func.func @transform_0(%arg0: i32, %arg1: i32, %arg2: i32) -> (i32, i32) {
    %c0_i32 = arith.constant 0 : i32
    return %arg0, %arg2 : i32, i32
  }
  func.func @transform_1(%arg0: i32, %arg1: i32, %arg2: i32) -> (i32, i32) {
    %c0_i32 = arith.constant 0 : i32
    return %arg2, %arg1 : i32, i32
  }
  func.func @transform_2(%arg0: i32, %arg1: i32, %arg2: i32) -> (i32, i32) {
    %c0_i32 = arith.constant 0 : i32
    %c0_i32_0 = arith.constant 0 : i32
    return %c0_i32, %arg1 : i32, i32
  }
  func.func @transform_3(%arg0: i32, %arg1: i32, %arg2: i32) -> (i32, i32) {
    %c0_i32 = arith.constant 0 : i32
    return %arg0, %arg1 : i32, i32
  }
}

module attributes {stable_mosaic.version = 11 : i64} {
  func.func @_mm_bias_act_kernel(%arg0: i32, %arg1: i32, %arg2: i32, %arg3: memref<16x128xbf16, #tpu.memory_space<vmem>>, %arg4: memref<128x128xbf16, #tpu.memory_space<vmem>>, %arg5: memref<1x128xf32, #tpu.memory_space<vmem>>, %arg6: memref<16x128xbf16, #tpu.memory_space<vmem>>, %arg7: memref<16x128xf32, #tpu.memory_space<vmem>>) attributes {dimension_semantics = [#tpu.dimension_semantics<parallel>, #tpu.dimension_semantics<parallel>, #tpu.dimension_semantics<arbitrary>], iteration_bounds = array<i64: 1, 1, 1>, scalar_prefetch = 0 : i64, scratch_operands = 1 : i64, tpu.core_type = #tpu.core_type<tc>, window_params = [{transform_indices = @transform_0, window_bounds = array<i64: 16, 128>}, {transform_indices = @transform_1, window_bounds = array<i64: 128, 128>}, {transform_indices = @transform_2, window_bounds = array<i64: 1, 128>}, {transform_indices = @transform_3, window_bounds = array<i64: 16, 128>}]} {
    %c0_i32 = arith.constant 0 : i32
    %0 = arith.cmpi eq, %arg2, %c0_i32 : i32
    %1 = arith.extui %0 : i1 to i32
    %c0_i32_0 = arith.constant 0 : i32
    %2 = arith.cmpi ne, %1, %c0_i32_0 : i32
    scf.if %2 {
      %cst_10 = arith.constant 0.000000e+00 : f32
      %12 = vector.broadcast %cst_10 : f32 to vector<16x128xf32>
      %c0_11 = arith.constant 0 : index
      %c0_12 = arith.constant 0 : index
      %13 = vector.load %arg7[%c0_11, %c0_12] : memref<16x128xf32, #tpu.memory_space<vmem>>, vector<16x128xf32>
      tpu.vector_store %arg7[%c0_11, %c0_12], %12 {strides = array<i32>} : memref<16x128xf32, #tpu.memory_space<vmem>>, vector<16x128xf32>,
    } else {
    }
    %c0 = arith.constant 0 : index
    %c0_1 = arith.constant 0 : index
    %3 = vector.load %arg7[%c0, %c0_1] : memref<16x128xf32, #tpu.memory_space<vmem>>, vector<16x128xf32>
    %c0_2 = arith.constant 0 : index
    %c0_3 = arith.constant 0 : index
    %4 = vector.load %arg3[%c0_2, %c0_3] : memref<16x128xbf16, #tpu.memory_space<vmem>>, vector<16x128xbf16>
    %c0_4 = arith.constant 0 : index
    %c0_5 = arith.constant 0 : index
    %5 = vector.load %arg4[%c0_4, %c0_5] : memref<128x128xbf16, #tpu.memory_space<vmem>>, vector<128x128xbf16>
    %cst = arith.constant dense<0.000000e+00> : vector<16x128xf32>
    %6 = tpu.matmul %4, %5, %cst {dimension_numbers = #tpu.dot_dimension_numbers<[1], [0], [0], [1], [0, 0, 1, 1], [], []>} : vector<16x128xbf16>, vector<128x128xbf16>, vector<16x128xf32> -> vector<16x128xf32>
    %7 = arith.addf %3, %6 : vector<16x128xf32>
    %c0_6 = arith.constant 0 : index
    %c0_7 = arith.constant 0 : index
    %8 = vector.load %arg7[%c0_6, %c0_7] : memref<16x128xf32, #tpu.memory_space<vmem>>, vector<16x128xf32>
    tpu.vector_store %arg7[%c0_6, %c0_7], %7 {strides = array<i32>} : memref<16x128xf32, #tpu.memory_space<vmem>>, vector<16x128xf32>,
    %c0_i32_8 = arith.constant 0 : i32
    %9 = arith.cmpi eq, %arg2, %c0_i32_8 : i32
    %10 = arith.extui %9 : i1 to i32
    %c0_i32_9 = arith.constant 0 : i32
    %11 = arith.cmpi ne, %10, %c0_i32_9 : i32
    scf.if %11 {
      %c0_10 = arith.constant 0 : index
      %c0_11 = arith.constant 0 : index
      %12 = vector.load %arg7[%c0_10, %c0_11] : memref<16x128xf32, #tpu.memory_space<vmem>>, vector<16x128xf32>
      %c0_12 = arith.constant 0 : index
      %c0_13 = arith.constant 0 : index
      %13 = vector.load %arg5[%c0_12, %c0_13] : memref<1x128xf32, #tpu.memory_space<vmem>>, vector<1x128xf32>
      %14 = vector.broadcast %13 : vector<1x128xf32> to vector<16x128xf32>
      %15 = arith.addf %12, %14 : vector<16x128xf32>
      %16 = arith.truncf %15 : vector<16x128xf32> to vector<16x128xbf16>
      %c0_14 = arith.constant 0 : index
      %c0_15 = arith.constant 0 : index
      %17 = vector.load %arg6[%c0_14, %c0_15] : memref<16x128xbf16, #tpu.memory_space<vmem>>, vector<16x128xbf16>
      tpu.vector_store %arg6[%c0_14, %c0_15], %16 {strides = array<i32>} : memref<16x128xbf16, #tpu.memory_space<vmem>>, vector<16x128xbf16>,
    } else {
    }
    return
  }
  func.func @transform_0(%arg0: i32, %arg1: i32, %arg2: i32) -> (i32, i32) {
    %c0_i32 = arith.constant 0 : i32
    return %arg0, %arg2 : i32, i32
  }
  func.func @transform_1(%arg0: i32, %arg1: i32, %arg2: i32) -> (i32, i32) {
    %c0_i32 = arith.constant 0 : i32
    return %arg2, %arg1 : i32, i32
  }
  func.func @transform_2(%arg0: i32, %arg1: i32, %arg2: i32) -> (i32, i32) {
    %c0_i32 = arith.constant 0 : i32
    %c0_i32_0 = arith.constant 0 : i32
    return %c0_i32, %arg1 : i32, i32
  }
  func.func @transform_3(%arg0: i32, %arg1: i32, %arg2: i32) -> (i32, i32) {
    %c0_i32 = arith.constant 0 : i32
    return %arg0, %arg1 : i32, i32
  }
}

module attributes {stable_mosaic.version = 11 : i64} {
  func.func @_mm_bias_act_kernel(%arg0: i32, %arg1: i32, %arg2: i32, %arg3: memref<32x64xbf16, #tpu.memory_space<vmem>>, %arg4: memref<64x128xbf16, #tpu.memory_space<vmem>>, %arg5: memref<1x128xf32, #tpu.memory_space<vmem>>, %arg6: memref<32x128xbf16, #tpu.memory_space<vmem>>, %arg7: memref<32x128xf32, #tpu.memory_space<vmem>>) attributes {dimension_semantics = [#tpu.dimension_semantics<parallel>, #tpu.dimension_semantics<parallel>, #tpu.dimension_semantics<arbitrary>], iteration_bounds = array<i64: 1, 1, 1>, scalar_prefetch = 0 : i64, scratch_operands = 1 : i64, tpu.core_type = #tpu.core_type<tc>, window_params = [{transform_indices = @transform_0, window_bounds = array<i64: 32, 64>}, {transform_indices = @transform_1, window_bounds = array<i64: 64, 128>}, {transform_indices = @transform_2, window_bounds = array<i64: 1, 128>}, {transform_indices = @transform_3, window_bounds = array<i64: 32, 128>}]} {
    %c0_i32 = arith.constant 0 : i32
    %0 = arith.cmpi eq, %arg2, %c0_i32 : i32
    %1 = arith.extui %0 : i1 to i32
    %c0_i32_0 = arith.constant 0 : i32
    %2 = arith.cmpi ne, %1, %c0_i32_0 : i32
    scf.if %2 {
      %cst_10 = arith.constant 0.000000e+00 : f32
      %12 = vector.broadcast %cst_10 : f32 to vector<32x128xf32>
      %c0_11 = arith.constant 0 : index
      %c0_12 = arith.constant 0 : index
      %13 = vector.load %arg7[%c0_11, %c0_12] : memref<32x128xf32, #tpu.memory_space<vmem>>, vector<32x128xf32>
      tpu.vector_store %arg7[%c0_11, %c0_12], %12 {strides = array<i32>} : memref<32x128xf32, #tpu.memory_space<vmem>>, vector<32x128xf32>,
    } else {
    }
    %c0 = arith.constant 0 : index
    %c0_1 = arith.constant 0 : index
    %3 = vector.load %arg7[%c0, %c0_1] : memref<32x128xf32, #tpu.memory_space<vmem>>, vector<32x128xf32>
    %c0_2 = arith.constant 0 : index
    %c0_3 = arith.constant 0 : index
    %4 = vector.load %arg3[%c0_2, %c0_3] : memref<32x64xbf16, #tpu.memory_space<vmem>>, vector<32x64xbf16>
    %c0_4 = arith.constant 0 : index
    %c0_5 = arith.constant 0 : index
    %5 = vector.load %arg4[%c0_4, %c0_5] : memref<64x128xbf16, #tpu.memory_space<vmem>>, vector<64x128xbf16>
    %cst = arith.constant dense<0.000000e+00> : vector<32x128xf32>
    %6 = tpu.matmul %4, %5, %cst {dimension_numbers = #tpu.dot_dimension_numbers<[1], [0], [0], [1], [0, 0, 1, 1], [], []>} : vector<32x64xbf16>, vector<64x128xbf16>, vector<32x128xf32> -> vector<32x128xf32>
    %7 = arith.addf %3, %6 : vector<32x128xf32>
    %c0_6 = arith.constant 0 : index
    %c0_7 = arith.constant 0 : index
    %8 = vector.load %arg7[%c0_6, %c0_7] : memref<32x128xf32, #tpu.memory_space<vmem>>, vector<32x128xf32>
    tpu.vector_store %arg7[%c0_6, %c0_7], %7 {strides = array<i32>} : memref<32x128xf32, #tpu.memory_space<vmem>>, vector<32x128xf32>,
    %c0_i32_8 = arith.constant 0 : i32
    %9 = arith.cmpi eq, %arg2, %c0_i32_8 : i32
    %10 = arith.extui %9 : i1 to i32
    %c0_i32_9 = arith.constant 0 : i32
    %11 = arith.cmpi ne, %10, %c0_i32_9 : i32
    scf.if %11 {
      %c0_10 = arith.constant 0 : index
      %c0_11 = arith.constant 0 : index
      %12 = vector.load %arg7[%c0_10, %c0_11] : memref<32x128xf32, #tpu.memory_space<vmem>>, vector<32x128xf32>
      %c0_12 = arith.constant 0 : index
      %c0_13 = arith.constant 0 : index
      %13 = vector.load %arg5[%c0_12, %c0_13] : memref<1x128xf32, #tpu.memory_space<vmem>>, vector<1x128xf32>
      %14 = vector.broadcast %13 : vector<1x128xf32> to vector<32x128xf32>
      %15 = arith.addf %12, %14 : vector<32x128xf32>
      %16 = arith.truncf %15 : vector<32x128xf32> to vector<32x128xbf16>
      %c0_14 = arith.constant 0 : index
      %c0_15 = arith.constant 0 : index
      %17 = vector.load %arg6[%c0_14, %c0_15] : memref<32x128xbf16, #tpu.memory_space<vmem>>, vector<32x128xbf16>
      tpu.vector_store %arg6[%c0_14, %c0_15], %16 {strides = array<i32>} : memref<32x128xbf16, #tpu.memory_space<vmem>>, vector<32x128xbf16>,
    } else {
    }
    return
  }
  func.func @transform_0(%arg0: i32, %arg1: i32, %arg2: i32) -> (i32, i32) {
    %c0_i32 = arith.constant 0 : i32
    return %arg0, %arg2 : i32, i32
  }
  func.func @transform_1(%arg0: i32, %arg1: i32, %arg2: i32) -> (i32, i32) {
    %c0_i32 = arith.constant 0 : i32
    return %arg2, %arg1 : i32, i32
  }
  func.func @transform_2(%arg0: i32, %arg1: i32, %arg2: i32) -> (i32, i32) {
    %c0_i32 = arith.constant 0 : i32
    %c0_i32_0 = arith.constant 0 : i32
    return %c0_i32, %arg1 : i32, i32
  }
  func.func @transform_3(%arg0: i32, %arg1: i32, %arg2: i32) -> (i32, i32) {
    %c0_i32 = arith.constant 0 : i32
    return %arg0, %arg1 : i32, i32
  }
}

module attributes {stable_mosaic.version = 11 : i64} {
  func.func @_mm_bias_act_kernel(%arg0: i32, %arg1: i32, %arg2: i32, %arg3: memref<128x32xbf16, #tpu.memory_space<vmem>>, %arg4: memref<32x128xbf16, #tpu.memory_space<vmem>>, %arg5: memref<1x128xf32, #tpu.memory_space<vmem>>, %arg6: memref<128x128xbf16, #tpu.memory_space<vmem>>, %arg7: memref<128x128xf32, #tpu.memory_space<vmem>>) attributes {dimension_semantics = [#tpu.dimension_semantics<parallel>, #tpu.dimension_semantics<parallel>, #tpu.dimension_semantics<arbitrary>], iteration_bounds = array<i64: 1, 1, 1>, scalar_prefetch = 0 : i64, scratch_operands = 1 : i64, tpu.core_type = #tpu.core_type<tc>, window_params = [{transform_indices = @transform_0, window_bounds = array<i64: 128, 32>}, {transform_indices = @transform_1, window_bounds = array<i64: 32, 128>}, {transform_indices = @transform_2, window_bounds = array<i64: 1, 128>}, {transform_indices = @transform_3, window_bounds = array<i64: 128, 128>}]} {
    %c0_i32 = arith.constant 0 : i32
    %0 = arith.cmpi eq, %arg2, %c0_i32 : i32
    %1 = arith.extui %0 : i1 to i32
    %c0_i32_0 = arith.constant 0 : i32
    %2 = arith.cmpi ne, %1, %c0_i32_0 : i32
    scf.if %2 {
      %cst_10 = arith.constant 0.000000e+00 : f32
      %12 = vector.broadcast %cst_10 : f32 to vector<128x128xf32>
      %c0_11 = arith.constant 0 : index
      %c0_12 = arith.constant 0 : index
      %13 = vector.load %arg7[%c0_11, %c0_12] : memref<128x128xf32, #tpu.memory_space<vmem>>, vector<128x128xf32>
      tpu.vector_store %arg7[%c0_11, %c0_12], %12 {strides = array<i32>} : memref<128x128xf32, #tpu.memory_space<vmem>>, vector<128x128xf32>,
    } else {
    }
    %c0 = arith.constant 0 : index
    %c0_1 = arith.constant 0 : index
    %3 = vector.load %arg7[%c0, %c0_1] : memref<128x128xf32, #tpu.memory_space<vmem>>, vector<128x128xf32>
    %c0_2 = arith.constant 0 : index
    %c0_3 = arith.constant 0 : index
    %4 = vector.load %arg3[%c0_2, %c0_3] : memref<128x32xbf16, #tpu.memory_space<vmem>>, vector<128x32xbf16>
    %c0_4 = arith.constant 0 : index
    %c0_5 = arith.constant 0 : index
    %5 = vector.load %arg4[%c0_4, %c0_5] : memref<32x128xbf16, #tpu.memory_space<vmem>>, vector<32x128xbf16>
    %cst = arith.constant dense<0.000000e+00> : vector<128x128xf32>
    %6 = tpu.matmul %4, %5, %cst {dimension_numbers = #tpu.dot_dimension_numbers<[1], [0], [0], [1], [0, 0, 1, 1], [], []>} : vector<128x32xbf16>, vector<32x128xbf16>, vector<128x128xf32> -> vector<128x128xf32>
    %7 = arith.addf %3, %6 : vector<128x128xf32>
    %c0_6 = arith.constant 0 : index
    %c0_7 = arith.constant 0 : index
    %8 = vector.load %arg7[%c0_6, %c0_7] : memref<128x128xf32, #tpu.memory_space<vmem>>, vector<128x128xf32>
    tpu.vector_store %arg7[%c0_6, %c0_7], %7 {strides = array<i32>} : memref<128x128xf32, #tpu.memory_space<vmem>>, vector<128x128xf32>,
    %c0_i32_8 = arith.constant 0 : i32
    %9 = arith.cmpi eq, %arg2, %c0_i32_8 : i32
    %10 = arith.extui %9 : i1 to i32
    %c0_i32_9 = arith.constant 0 : i32
    %11 = arith.cmpi ne, %10, %c0_i32_9 : i32
    scf.if %11 {
      %c0_10 = arith.constant 0 : index
      %c0_11 = arith.constant 0 : index
      %12 = vector.load %arg7[%c0_10, %c0_11] : memref<128x128xf32, #tpu.memory_space<vmem>>, vector<128x128xf32>
      %c0_12 = arith.constant 0 : index
      %c0_13 = arith.constant 0 : index
      %13 = vector.load %arg5[%c0_12, %c0_13] : memref<1x128xf32, #tpu.memory_space<vmem>>, vector<1x128xf32>
      %14 = vector.broadcast %13 : vector<1x128xf32> to vector<128x128xf32>
      %15 = arith.addf %12, %14 : vector<128x128xf32>
      %16 = arith.truncf %15 : vector<128x128xf32> to vector<128x128xbf16>
      %c0_14 = arith.constant 0 : index
      %c0_15 = arith.constant 0 : index
      %17 = vector.load %arg6[%c0_14, %c0_15] : memref<128x128xbf16, #tpu.memory_space<vmem>>, vector<128x128xbf16>
      tpu.vector_store %arg6[%c0_14, %c0_15], %16 {strides = array<i32>} : memref<128x128xbf16, #tpu.memory_space<vmem>>, vector<128x128xbf16>,
    } else {
    }
    return
  }
  func.func @transform_0(%arg0: i32, %arg1: i32, %arg2: i32) -> (i32, i32) {
    %c0_i32 = arith.constant 0 : i32
    return %arg0, %arg2 : i32, i32
  }
  func.func @transform_1(%arg0: i32, %arg1: i32, %arg2: i32) -> (i32, i32) {
    %c0_i32 = arith.constant 0 : i32
    return %arg2, %arg1 : i32, i32
  }
  func.func @transform_2(%arg0: i32, %arg1: i32, %arg2: i32) -> (i32, i32) {
    %c0_i32 = arith.constant 0 : i32
    %c0_i32_0 = arith.constant 0 : i32
    return %c0_i32, %arg1 : i32, i32
  }
  func.func @transform_3(%arg0: i32, %arg1: i32, %arg2: i32) -> (i32, i32) {
    %c0_i32 = arith.constant 0 : i32
    return %arg0, %arg1 : i32, i32
  }
}

module attributes {stable_mosaic.version = 11 : i64} {
  func.func @_mm_bias_act_kernel(%arg0: i32, %arg1: i32, %arg2: i32, %arg3: memref<256x16xbf16, #tpu.memory_space<vmem>>, %arg4: memref<16x128xbf16, #tpu.memory_space<vmem>>, %arg5: memref<1x128xf32, #tpu.memory_space<vmem>>, %arg6: memref<256x128xf32, #tpu.memory_space<vmem>>, %arg7: memref<256x128xf32, #tpu.memory_space<vmem>>) attributes {dimension_semantics = [#tpu.dimension_semantics<parallel>, #tpu.dimension_semantics<parallel>, #tpu.dimension_semantics<arbitrary>], iteration_bounds = array<i64: 2, 1, 1>, scalar_prefetch = 0 : i64, scratch_operands = 1 : i64, tpu.core_type = #tpu.core_type<tc>, window_params = [{transform_indices = @transform_0, window_bounds = array<i64: 256, 16>}, {transform_indices = @transform_1, window_bounds = array<i64: 16, 128>}, {transform_indices = @transform_2, window_bounds = array<i64: 1, 128>}, {transform_indices = @transform_3, window_bounds = array<i64: 256, 128>}]} {
    %c0_i32 = arith.constant 0 : i32
    %0 = arith.cmpi eq, %arg2, %c0_i32 : i32
    %1 = arith.extui %0 : i1 to i32
    %c0_i32_0 = arith.constant 0 : i32
    %2 = arith.cmpi ne, %1, %c0_i32_0 : i32
    scf.if %2 {
      %cst_10 = arith.constant 0.000000e+00 : f32
      %12 = vector.broadcast %cst_10 : f32 to vector<256x128xf32>
      %c0_11 = arith.constant 0 : index
      %c0_12 = arith.constant 0 : index
      %13 = vector.load %arg7[%c0_11, %c0_12] : memref<256x128xf32, #tpu.memory_space<vmem>>, vector<256x128xf32>
      tpu.vector_store %arg7[%c0_11, %c0_12], %12 {strides = array<i32>} : memref<256x128xf32, #tpu.memory_space<vmem>>, vector<256x128xf32>,
    } else {
    }
    %c0 = arith.constant 0 : index
    %c0_1 = arith.constant 0 : index
    %3 = vector.load %arg7[%c0, %c0_1] : memref<256x128xf32, #tpu.memory_space<vmem>>, vector<256x128xf32>
    %c0_2 = arith.constant 0 : index
    %c0_3 = arith.constant 0 : index
    %4 = vector.load %arg3[%c0_2, %c0_3] : memref<256x16xbf16, #tpu.memory_space<vmem>>, vector<256x16xbf16>
    %c0_4 = arith.constant 0 : index
    %c0_5 = arith.constant 0 : index
    %5 = vector.load %arg4[%c0_4, %c0_5] : memref<16x128xbf16, #tpu.memory_space<vmem>>, vector<16x128xbf16>
    %cst = arith.constant dense<0.000000e+00> : vector<256x128xf32>
    %6 = tpu.matmul %4, %5, %cst {dimension_numbers = #tpu.dot_dimension_numbers<[1], [0], [0], [1], [0, 0, 1, 1], [], []>} : vector<256x16xbf16>, vector<16x128xbf16>, vector<256x128xf32> -> vector<256x128xf32>
    %7 = arith.addf %3, %6 : vector<256x128xf32>
    %c0_6 = arith.constant 0 : index
    %c0_7 = arith.constant 0 : index
    %8 = vector.load %arg7[%c0_6, %c0_7] : memref<256x128xf32, #tpu.memory_space<vmem>>, vector<256x128xf32>
    tpu.vector_store %arg7[%c0_6, %c0_7], %7 {strides = array<i32>} : memref<256x128xf32, #tpu.memory_space<vmem>>, vector<256x128xf32>,
    %c0_i32_8 = arith.constant 0 : i32
    %9 = arith.cmpi eq, %arg2, %c0_i32_8 : i32
    %10 = arith.extui %9 : i1 to i32
    %c0_i32_9 = arith.constant 0 : i32
    %11 = arith.cmpi ne, %10, %c0_i32_9 : i32
    scf.if %11 {
      %c0_10 = arith.constant 0 : index
      %c0_11 = arith.constant 0 : index
      %12 = vector.load %arg7[%c0_10, %c0_11] : memref<256x128xf32, #tpu.memory_space<vmem>>, vector<256x128xf32>
      %c0_12 = arith.constant 0 : index
      %c0_13 = arith.constant 0 : index
      %13 = vector.load %arg5[%c0_12, %c0_13] : memref<1x128xf32, #tpu.memory_space<vmem>>, vector<1x128xf32>
      %14 = vector.broadcast %13 : vector<1x128xf32> to vector<256x128xf32>
      %15 = arith.addf %12, %14 : vector<256x128xf32>
      %cst_14 = arith.constant 0.000000e+00 : f32
      %16 = vector.broadcast %cst_14 : f32 to vector<256x128xf32>
      %17 = arith.subf %16, %15 : vector<256x128xf32>
      %18 = math.exp %17 : vector<256x128xf32>
      %cst_15 = arith.constant 1.000000e+00 : f32
      %19 = vector.broadcast %cst_15 : f32 to vector<256x128xf32>
      %20 = arith.addf %19, %18 : vector<256x128xf32>
      %cst_16 = arith.constant 1.000000e+00 : f32
      %21 = vector.broadcast %cst_16 : f32 to vector<256x128xf32>
      %22 = arith.divf %21, %20 : vector<256x128xf32>
      %c0_17 = arith.constant 0 : index
      %c0_18 = arith.constant 0 : index
      %23 = vector.load %arg6[%c0_17, %c0_18] : memref<256x128xf32, #tpu.memory_space<vmem>>, vector<256x128xf32>
      tpu.vector_store %arg6[%c0_17, %c0_18], %22 {strides = array<i32>} : memref<256x128xf32, #tpu.memory_space<vmem>>, vector<256x128xf32>,
    } else {
    }
    return
  }
  func.func @transform_0(%arg0: i32, %arg1: i32, %arg2: i32) -> (i32, i32) {
    %c0_i32 = arith.constant 0 : i32
    return %arg0, %arg2 : i32, i32
  }
  func.func @transform_1(%arg0: i32, %arg1: i32, %arg2: i32) -> (i32, i32) {
    %c0_i32 = arith.constant 0 : i32
    return %arg2, %arg1 : i32, i32
  }
  func.func @transform_2(%arg0: i32, %arg1: i32, %arg2: i32) -> (i32, i32) {
    %c0_i32 = arith.constant 0 : i32
    %c0_i32_0 = arith.constant 0 : i32
    return %c0_i32, %arg1 : i32, i32
  }
  func.func @transform_3(%arg0: i32, %arg1: i32, %arg2: i32) -> (i32, i32) {
    %c0_i32 = arith.constant 0 : i32
    return %arg0, %arg1 : i32, i32
  }
}

</mosaic_0001>

<llo_original>
// kernel: cvae_forward.10
$region0: #{cvae_forward.10}
  #allocation0 [shape = 'u32[]', space=smem, size = 0x4, offset = 0x4, fixed_abs, tag = 'smem constant byte address 0x4 - core index']
  #allocation1 [shape = 'u32[72,128]{1,0:T(1,128)}', space=vmem, size = 0x9000, scoped, tag = 'internal scratch']
  #allocation2 [shape = 'f32[256,128]{1,0:T(8,128)}', space=vmem, size = 0x20000, scoped, tag = 'scratch operand']
  %s0 = inlined_call_operand.vmem [shape: bf16[512,75], index: 0, kind: input, shape index: {}]
  %s1 = inlined_call_operand.vmem [shape: bf16[75,4], index: 1, kind: input, shape index: {}]
  %s2 = inlined_call_operand.vmem [shape: f32[1,4], index: 2, kind: input, shape index: {}]
  %s3 = inlined_call_operand.vmem [shape: bf16[512,4], index: 3, kind: output, shape index: {}]
  %s4 = sld [smem:[#allocation0]]
  $region53: #{cvae_forward.10} parent=0
    _
  %s6 = ssub.s32 1, %s4
  %s7 = scalar_select 0, %s6, %s4
  loop: start=0, step=1, limit=4
  $region2: #{cvae_forward.10} parent=0 // loop_pre_header
    _
  $region3: #{cvae_forward.10} parent=0 // loop_header
    %s9 = sphi 0, %s13
    %p10 = scmp.ge.s32.totalorder %s9, 4
    %s16 = sphi 0, %s35
    %s17 = sphi 0, %s31
    %s18 = sphi 0, %s27
    %s19 = sphi 0, %s16
    %s20 = sphi 0, %s17
    %s21 = sphi 0, %s18
    %s22 = sphi 0, %s19
    %s23 = sphi 0, %s20
    %s24 = sphi 0, %s21
    %s40 = sphi 0, %s42
    %s43 = sphi 0, %s40
    %s44 = sphi 0, %s43
    %s60 = sphi 0, %s44
    %s68 = sphi 0, %s70
    %s71 = sphi 0, %s68
    %s72 = sphi 0, %s71
    %s88 = sphi 0, %s72
    %s94 = sphi 0, %s96
    %s97 = sphi 0, %s94
    %s98 = sphi 0, %s97
    %s114 = sphi 0, %s98
    %s122 = sphi 0, %s124
    %s125 = sphi 0, %s122
    %s126 = sphi 0, %s125
    %s142 = sphi 0, %s126
  $region4: #{cvae_forward.10} parent=0 // loop_header_branch
    %12 = sbr.rel (%p10) target = $region8
  $region5: #{cvae_forward.10} parent=0 // loop_body
    %s14 = ssub.s32 %s9, 1
    %s15 = ssub.s32 %s9, 2
    %s25 = sadd.s32 1, %s18
    %p26 = scmp.ge.s32.totalorder %s25, 1
    %s27 = scalar_select %p26, 0, %s25
    %s28 = sadd.s32 1, %s17
    %s29 = scalar_select %p26, %s28, %s17
    %p30 = scmp.ge.s32.totalorder %s29, 1
    %s31 = scalar_select %p30, 0, %s29
    %s32 = sadd.s32 1, %s16
    %s33 = scalar_select %p30, %s32, %s16
    %p34 = scmp.ge.s32.totalorder %s33, 2
    %s35 = scalar_select %p34, 0, %s33
    %s36 = ssub.s32 %s16, %s35
    %s37 = ssub.s32 %s18, %s27
    %s38 = sor.u32 %s36, %s37
    %p39 = scmp.eq.s32.totalorder %s38, 0
    %s41 = sadd.s32 %s40, 1
    %s42 = scalar_select %p39, %s40, %s41
    %p45 = pneg %p39
    %p46 = scmp.eq.s32.totalorder %s9, 1
    %p47 = por %p45, %p46
    %p48 = scmp.ne.s32.totalorder %s40, %s43
    %p49 = scmp.eq.s32.totalorder %s9, 0
    %p50 = por %p48, %p49
    %p51 = scmp.ne.s32.totalorder %s40, %s43
    %p52 = scmp.eq.s32.totalorder %s14, 1
    %p53 = por %p51, %p52
    %p54 = scmp.ne.s32.totalorder %s43, %s44
    %p55 = scmp.eq.s32.totalorder %s14, 0
    %p56 = por %p54, %p55
    %p57 = scmp.ne.s32.totalorder %s43, %s44
    %p58 = scmp.eq.s32.totalorder %s15, 1
    %p59 = por %p57, %p58
    %p61 = scmp.ne.s32.totalorder %s44, %s60
    %p62 = scmp.eq.s32.totalorder %s15, 0
    %p63 = por %p61, %p62
    %s64 = ssub.s32 %s18, %s27
    %s65 = ssub.s32 %s17, %s31
    %s66 = sor.u32 %s64, %s65
    %p67 = scmp.eq.s32.totalorder %s66, 0
    %s69 = sadd.s32 %s68, 1
    %s70 = scalar_select %p67, %s68, %s69
    %p73 = pneg %p67
    %p74 = scmp.eq.s32.totalorder %s9, 1
    %p75 = por %p73, %p74
    %p76 = scmp.ne.s32.totalorder %s68, %s71
    %p77 = scmp.eq.s32.totalorder %s9, 0
    %p78 = por %p76, %p77
    %p79 = scmp.ne.s32.totalorder %s68, %s71
    %p80 = scmp.eq.s32.totalorder %s14, 1
    %p81 = por %p79, %p80
    %p82 = scmp.ne.s32.totalorder %s71, %s72
    %p83 = scmp.eq.s32.totalorder %s14, 0
    %p84 = por %p82, %p83
    %p85 = scmp.ne.s32.totalorder %s71, %s72
    %p86 = scmp.eq.s32.totalorder %s15, 1
    %p87 = por %p85, %p86
    %p89 = scmp.ne.s32.totalorder %s72, %s88
    %p90 = scmp.eq.s32.totalorder %s15, 0
    %p91 = por %p89, %p90
    %s92 = ssub.s32 %s17, %s31
    %p93 = scmp.eq.s32.totalorder %s92, 0
    %s95 = sadd.s32 %s94, 1
    %s96 = scalar_select %p93, %s94, %s95
    %p99 = pneg %p93
    %p100 = scmp.eq.s32.totalorder %s9, 1
    %p101 = por %p99, %p100
    %p102 = scmp.ne.s32.totalorder %s94, %s97
    %p103 = scmp.eq.s32.totalorder %s9, 0
    %p104 = por %p102, %p103
    %p105 = scmp.ne.s32.totalorder %s94, %s97
    %p106 = scmp.eq.s32.totalorder %s14, 1
    %p107 = por %p105, %p106
    %p108 = scmp.ne.s32.totalorder %s97, %s98
    %p109 = scmp.eq.s32.totalorder %s14, 0
    %p110 = por %p108, %p109
    %p111 = scmp.ne.s32.totalorder %s97, %s98
    %p112 = scmp.eq.s32.totalorder %s15, 1
    %p113 = por %p111, %p112
    %p115 = scmp.ne.s32.totalorder %s98, %s114
    %p116 = scmp.eq.s32.totalorder %s15, 0
    %p117 = por %p115, %p116
    %s118 = ssub.s32 %s16, %s35
    %s119 = ssub.s32 %s17, %s31
    %s120 = sor.u32 %s118, %s119
    %p121 = scmp.eq.s32.totalorder %s120, 0
    %s123 = sadd.s32 %s122, 1
    %s124 = scalar_select %p121, %s122, %s123
    %p127 = pneg %p121
    %p128 = scmp.eq.s32.totalorder %s9, 1
    %p129 = por %p127, %p128
    %p130 = scmp.ne.s32.totalorder %s122, %s125
    %p131 = scmp.eq.s32.totalorder %s9, 0
    %p132 = por %p130, %p131
    %p133 = scmp.ne.s32.totalorder %s122, %s125
    %p134 = scmp.eq.s32.totalorder %s14, 1
    %p135 = por %p133, %p134
    %p136 = scmp.ne.s32.totalorder %s125, %s126
    %p137 = scmp.eq.s32.totalorder %s14, 0
    %p138 = por %p136, %p137
    %p139 = scmp.ne.s32.totalorder %s125, %s126
    %p140 = scmp.eq.s32.totalorder %s15, 1
    %p141 = por %p139, %p140
    %p143 = scmp.ne.s32.totalorder %s126, %s142
    %p144 = scmp.eq.s32.totalorder %s15, 0
    %p145 = por %p143, %p144
    %p146 = scmp.le.s32.totalorder 1, %s9
    %p147 = scmp.lt.s32.totalorder %s9, 3
    %p148 = pnand %p146, %p147
    %p149 = pneg %p148
    // Predicated region
    $region9: #{cvae_forward.10} parent=5 // pred_check
      _
    $region10: #{cvae_forward.10} parent=5 // pred_check_branch
      %151 = sbr.rel (%p148) target = $region12
    $region11: #{cvae_forward.10} parent=5 // pred_region
      %s152 = ssub.s32 %s9, 1
      // Predicated region
      $region13: #{cvae_forward.10} parent=11 // pred_check
        %p153 = pneg %p84
      $region14: #{cvae_forward.10} parent=11 // pred_check_branch
        %155 = sbr.rel (%p153) target = $region16
      $region15: #{cvae_forward.10} parent=11 // pred_region
        %s156 = smul.u32 10, %s21
        %p157 = scmp.lt.s32.totalorder %s156, 9
        %s158 = scalar_select %p157, %s156, 9
        %p159 = scmp.lt.s32.totalorder %s20, 0
        %s160 = scalar_select %p159, %s20, 0
        %s161 = sadd.s32 %s160, %s158
        %s162 = smul.addr %s161, 4
        %s163 = scalar_lea.vmem %s1, %s162
        %s164 = smul.u32 10, %s21
      $region16: #{cvae_forward.10} parent=11 // pred_fallthru
        _
      // Predicated region
      $region17: #{cvae_forward.10} parent=11 // pred_check
        %p165 = pneg %p110
      $region18: #{cvae_forward.10} parent=11 // pred_check_branch
        %167 = sbr.rel (%p165) target = $region20
      $region19: #{cvae_forward.10} parent=11 // pred_region
        %p168 = scmp.lt.s32.totalorder %s20, 0
        %s169 = scalar_select %p168, %s20, 0
        %s170 = scalar_lea.vmem %s2, %s169
      $region20: #{cvae_forward.10} parent=11 // pred_fallthru
        _
    $region12: #{cvae_forward.10} parent=5 // pred_fallthru
      _
    %p171 = scmp.lt.s32.totalorder %s9, 2
    // Predicated region
    $region21: #{cvae_forward.10} parent=5 // pred_check
      %p172 = pneg %p171
    $region22: #{cvae_forward.10} parent=5 // pred_check_branch
      %174 = sbr.rel (%p172) target = $region24
    $region23: #{cvae_forward.10} parent=5 // pred_region
      // Predicated region
      $region25: #{cvae_forward.10} parent=23 // pred_check
        %p175 = pneg %p50
      $region26: #{cvae_forward.10} parent=23 // pred_check_branch
        %177 = sbr.rel (%p175) target = $region28
      $region27: #{cvae_forward.10} parent=23 // pred_region
        %s178 = smul.u32 32, %s16
        %p179 = scmp.lt.s32.totalorder %s178, 63
        %s180 = scalar_select %p179, %s178, 63
        %p181 = scmp.lt.s32.totalorder %s18, 0
        %s182 = scalar_select %p181, %s18, 0
        %s183 = sadd.s32 %s182, %s180
        %s184 = smul.addr %s183, 4
        %s185 = scalar_lea.vmem %s0, %s184
        %s186 = smul.u32 32, %s16
      $region28: #{cvae_forward.10} parent=23 // pred_fallthru
        _
    $region24: #{cvae_forward.10} parent=5 // pred_fallthru
      _
    %p187 = scmp.le.s32.totalorder 1, %s9
    %p188 = scmp.lt.s32.totalorder %s9, 3
    %p189 = pnand %p187, %p188
    %p190 = pneg %p189
    // Predicated region
    $region29: #{cvae_forward.10} parent=5 // pred_check
      _
    $region30: #{cvae_forward.10} parent=5 // pred_check_branch
      %192 = sbr.rel (%p189) target = $region32
    $region31: #{cvae_forward.10} parent=5 // pred_region
      %s193 = ssub.s32 %s9, 1
      %s194 = smul.u32 32, %s19
      %p195 = scmp.lt.s32.totalorder %s194, 63
      %s196 = scalar_select %p195, %s194, 63
      %p197 = scmp.lt.s32.totalorder %s21, 0
      %s198 = scalar_select %p197, %s21, 0
      %s199 = sadd.s32 %s198, %s196
      %s200 = smul.addr %s199, 4
      %s201 = scalar_lea.vmem %s0, %s200
      %p202 = pneg %p56
      %p203 = pneg %p53
      %s204 = smul.u32 10, %s21
      %p205 = scmp.lt.s32.totalorder %s204, 9
      %s206 = scalar_select %p205, %s204, 9
      %p207 = scmp.lt.s32.totalorder %s20, 0
      %s208 = scalar_select %p207, %s20, 0
      %s209 = sadd.s32 %s208, %s206
      %s210 = smul.addr %s209, 4
      %s211 = scalar_lea.vmem %s1, %s210
      %p212 = pneg %p84
      %p213 = pneg %p81
      %p214 = scmp.lt.s32.totalorder %s20, 0
      %s215 = scalar_select %p214, %s20, 0
      %s216 = scalar_lea.vmem %s2, %s215
      %p217 = pneg %p110
      %p218 = pneg %p107
      %p219 = pneg %p138
      %p220 = pneg %p135
      %s221 = smul.u32 32, %s19
      %p222 = scmp.lt.s32.totalorder %s221, 63
      %s223 = scalar_select %p222, %s221, 63
      %p224 = scmp.lt.s32.totalorder %s20, 0
      %s225 = scalar_select %p224, %s20, 0
      %s226 = sadd.s32 %s225, %s223
      %s227 = smul.addr %s226, 4
      %s228 = scalar_lea.vmem %s3, %s227
      %s229 = smul.u32 32, %s19
      %p230 = scmp.lt.s32.totalorder %s229, 63
      %s231 = scalar_select %p230, %s229, 63
      %p232 = scmp.lt.s32.totalorder %s21, 0
      %s233 = scalar_select %p232, %s21, 0
      %s234 = sadd.s32 %s233, %s231
      %s235 = smul.addr %s234, 4
      %s236 = scalar_lea.vmem %s0, %s235
      %s237 = smul.u32 32, %s19
      %s238 = smul.u32 10, %s21
      %p239 = scmp.lt.s32.totalorder %s238, 9
      %s240 = scalar_select %p239, %s238, 9
      %p241 = scmp.lt.s32.totalorder %s20, 0
      %s242 = scalar_select %p241, %s20, 0
      %s243 = sadd.s32 %s242, %s240
      %s244 = smul.addr %s243, 4
      %s245 = scalar_lea.vmem %s1, %s244
      %s246 = smul.u32 10, %s21
      %p247 = scmp.lt.s32.totalorder %s20, 0
      %s248 = scalar_select %p247, %s20, 0
      %s249 = scalar_lea.vmem %s2, %s248
      %s250 = smul.u32 32, %s19
      %p251 = scmp.lt.s32.totalorder %s250, 63
      %s252 = scalar_select %p251, %s250, 63
      %p253 = scmp.lt.s32.totalorder %s20, 0
      %s254 = scalar_select %p253, %s20, 0
      %s255 = sadd.s32 %s254, %s252
      %s256 = smul.addr %s255, 4
      %s257 = scalar_lea.vmem %s3, %s256
      %s258 = smul.u32 32, %s19
      %p260 = scmp.eq.s32.totalorder %s21, 0
      // Predicated region
      $region33: #{cvae_forward.10} parent=31 // pred_check
        %p261 = pneg %p260
      $region34: #{cvae_forward.10} parent=31 // pred_check_branch
        %263 = sbr.rel (%p261) target = $region36
      $region35: #{cvae_forward.10} parent=31 // pred_region
        %264 = vst [vmem:[#allocation2] sm:$0xff] 0.0
        %265 = vst [vmem:[#allocation2 + $0x8] sm:$0xff] 0.0
        %266 = vst [vmem:[#allocation2 + $0x10] sm:$0xff] 0.0
        %267 = vst [vmem:[#allocation2 + $0x18] sm:$0xff] 0.0
        %268 = vst [vmem:[#allocation2 + $0x20] sm:$0xff] 0.0
        %269 = vst [vmem:[#allocation2 + $0x28] sm:$0xff] 0.0
        %270 = vst [vmem:[#allocation2 + $0x30] sm:$0xff] 0.0
        %271 = vst [vmem:[#allocation2 + $0x38] sm:$0xff] 0.0
        %272 = vst [vmem:[#allocation2 + $0x40] sm:$0xff] 0.0
        %273 = vst [vmem:[#allocation2 + $0x48] sm:$0xff] 0.0
        %274 = vst [vmem:[#allocation2 + $0x50] sm:$0xff] 0.0
        %275 = vst [vmem:[#allocation2 + $0x58] sm:$0xff] 0.0
        %276 = vst [vmem:[#allocation2 + $0x60] sm:$0xff] 0.0
        %277 = vst [vmem:[#allocation2 + $0x68] sm:$0xff] 0.0
        %278 = vst [vmem:[#allocation2 + $0x70] sm:$0xff] 0.0
        %279 = vst [vmem:[#allocation2 + $0x78] sm:$0xff] 0.0
        %280 = vst [vmem:[#allocation2 + $0x80] sm:$0xff] 0.0
        %281 = vst [vmem:[#allocation2 + $0x88] sm:$0xff] 0.0
        %282 = vst [vmem:[#allocation2 + $0x90] sm:$0xff] 0.0
        %283 = vst [vmem:[#allocation2 + $0x98] sm:$0xff] 0.0
        %284 = vst [vmem:[#allocation2 + $0xa0] sm:$0xff] 0.0
        %285 = vst [vmem:[#allocation2 + $0xa8] sm:$0xff] 0.0
        %286 = vst [vmem:[#allocation2 + $0xb0] sm:$0xff] 0.0
        %287 = vst [vmem:[#allocation2 + $0xb8] sm:$0xff] 0.0
        %288 = vst [vmem:[#allocation2 + $0xc0] sm:$0xff] 0.0
        %289 = vst [vmem:[#allocation2 + $0xc8] sm:$0xff] 0.0
        %290 = vst [vmem:[#allocation2 + $0xd0] sm:$0xff] 0.0
        %291 = vst [vmem:[#allocation2 + $0xd8] sm:$0xff] 0.0
        %292 = vst [vmem:[#allocation2 + $0xe0] sm:$0xff] 0.0
        %293 = vst [vmem:[#allocation2 + $0xe8] sm:$0xff] 0.0
        %294 = vst [vmem:[#allocation2 + $0xf0] sm:$0xff] 0.0
        %295 = vst [vmem:[#allocation2 + $0xf8] sm:$0xff] 0.0
      $region36: #{cvae_forward.10} parent=31 // pred_fallthru
        _
      %v296 = vld [vmem:[#allocation2] sm:$0xff]
      %v297 = vld [vmem:[#allocation2 + $0x8] sm:$0xff]
      %v298 = vld [vmem:[#allocation2 + $0x10] sm:$0xff]
      %v299 = vld [vmem:[#allocation2 + $0x18] sm:$0xff]
      %v300 = vld [vmem:[#allocation2 + $0x20] sm:$0xff]
      %v301 = vld [vmem:[#allocation2 + $0x28] sm:$0xff]
      %v302 = vld [vmem:[#allocation2 + $0x30] sm:$0xff]
      %v303 = vld [vmem:[#allocation2 + $0x38] sm:$0xff]
      %v304 = vld [vmem:[#allocation2 + $0x40] sm:$0xff]
      %v305 = vld [vmem:[#allocation2 + $0x48] sm:$0xff]
      %v306 = vld [vmem:[#allocation2 + $0x50] sm:$0xff]
      %v307 = vld [vmem:[#allocation2 + $0x58] sm:$0xff]
      %v308 = vld [vmem:[#allocation2 + $0x60] sm:$0xff]
      %v309 = vld [vmem:[#allocation2 + $0x68] sm:$0xff]
      %v310 = vld [vmem:[#allocation2 + $0x70] sm:$0xff]
      %v311 = vld [vmem:[#allocation2 + $0x78] sm:$0xff]
      %v312 = vld [vmem:[#allocation2 + $0x80] sm:$0xff]
      %v313 = vld [vmem:[#allocation2 + $0x88] sm:$0xff]
      %v314 = vld [vmem:[#allocation2 + $0x90] sm:$0xff]
      %v315 = vld [vmem:[#allocation2 + $0x98] sm:$0xff]
      %v316 = vld [vmem:[#allocation2 + $0xa0] sm:$0xff]
      %v317 = vld [vmem:[#allocation2 + $0xa8] sm:$0xff]
      %v318 = vld [vmem:[#allocation2 + $0xb0] sm:$0xff]
      %v319 = vld [vmem:[#allocation2 + $0xb8] sm:$0xff]
      %v320 = vld [vmem:[#allocation2 + $0xc0] sm:$0xff]
      %v321 = vld [vmem:[#allocation2 + $0xc8] sm:$0xff]
      %v322 = vld [vmem:[#allocation2 + $0xd0] sm:$0xff]
      %v323 = vld [vmem:[#allocation2 + $0xd8] sm:$0xff]
      %v324 = vld [vmem:[#allocation2 + $0xe0] sm:$0xff]
      %v325 = vld [vmem:[#allocation2 + $0xe8] sm:$0xff]
      %v326 = vld [vmem:[#allocation2 + $0xf0] sm:$0xff]
      %v327 = vld [vmem:[#allocation2 + $0xf8] sm:$0xff]
      %v328 = vld [vmem:[%s236] sm:$0xf]
      %v329 = vld [vmem:[%s236 + $0x4] sm:$0xf]
      %v330 = vld [vmem:[%s236 + $0x8] sm:$0xf]
      %v331 = vld [vmem:[%s236 + $0xc] sm:$0xf]
      %v332 = vld [vmem:[%s236 + $0x10] sm:$0xf]
      %v333 = vld [vmem:[%s236 + $0x14] sm:$0xf]
      %v334 = vld [vmem:[%s236 + $0x18] sm:$0xf]
      %v335 = vld [vmem:[%s236 + $0x1c] sm:$0xf]
      %v336 = vld [vmem:[%s236 + $0x20] sm:$0xf]
      %v337 = vld [vmem:[%s236 + $0x24] sm:$0xf]
      %v338 = vld [vmem:[%s236 + $0x28] sm:$0xf]
      %v339 = vld [vmem:[%s236 + $0x2c] sm:$0xf]
      %v340 = vld [vmem:[%s236 + $0x30] sm:$0xf]
      %v341 = vld [vmem:[%s236 + $0x34] sm:$0xf]
      %v342 = vld [vmem:[%s236 + $0x38] sm:$0xf]
      %v343 = vld [vmem:[%s236 + $0x3c] sm:$0xf]
      %v344 = vld [vmem:[%s236 + $0x40] sm:$0xf]
      %v345 = vld [vmem:[%s236 + $0x44] sm:$0xf]
      %v346 = vld [vmem:[%s236 + $0x48] sm:$0xf]
      %v347 = vld [vmem:[%s236 + $0x4c] sm:$0xf]
      %v348 = vld [vmem:[%s236 + $0x50] sm:$0xf]
      %v349 = vld [vmem:[%s236 + $0x54] sm:$0xf]
      %v350 = vld [vmem:[%s236 + $0x58] sm:$0xf]
      %v351 = vld [vmem:[%s236 + $0x5c] sm:$0xf]
      %v352 = vld [vmem:[%s236 + $0x60] sm:$0xf]
      %v353 = vld [vmem:[%s236 + $0x64] sm:$0xf]
      %v354 = vld [vmem:[%s236 + $0x68] sm:$0xf]
      %v355 = vld [vmem:[%s236 + $0x6c] sm:$0xf]
      %v356 = vld [vmem:[%s236 + $0x70] sm:$0xf]
      %v357 = vld [vmem:[%s236 + $0x74] sm:$0xf]
      %v358 = vld [vmem:[%s236 + $0x78] sm:$0xf]
      %v359 = vld [vmem:[%s236 + $0x7c] sm:$0xf]
      %v360 = vld [vmem:[%s245] sm:$0xf]
      %v361 = vld [vmem:[%s245 + $0x4] sm:$0xf]
      %v362 = vld [vmem:[%s245 + $0x8] sm:$0xf]
      %v363 = vld [vmem:[%s245 + $0xc] sm:$0xf]
      %v364 = vld [vmem:[%s245 + $0x10] sm:$0xf]
      %v365 = vld [vmem:[%s245 + $0x14] sm:$0xf]
      %v366 = vld [vmem:[%s245 + $0x18] sm:$0xf]
      %v367 = vld [vmem:[%s245 + $0x1c] sm:$0xf]
      %v368 = vld [vmem:[%s245 + $0x20] sm:$0xf]
      %v369 = vld [vmem:[%s245 + $0x24] sm:$0x3]
      %v402 = vunpack.c.l.b16 %v328
      %v403 = vunpack.c.l.b16 %v329
      %v404 = vunpack.c.l.b16 %v330
      %v405 = vunpack.c.l.b16 %v331
      %v406 = vunpack.c.l.b16 %v332
      %v407 = vunpack.c.l.b16 %v333
      %v408 = vunpack.c.l.b16 %v334
      %v409 = vunpack.c.l.b16 %v335
      %v410 = vunpack.c.l.b16 %v336
      %v411 = vunpack.c.l.b16 %v337
      %v412 = vunpack.c.l.b16 %v338
      %v413 = vunpack.c.l.b16 %v339
      %v414 = vunpack.c.l.b16 %v340
      %v415 = vunpack.c.l.b16 %v341
      %v416 = vunpack.c.l.b16 %v342
      %v417 = vunpack.c.l.b16 %v343
      %v418 = vunpack.c.l.b16 %v344
      %v419 = vunpack.c.l.b16 %v345
      %v420 = vunpack.c.l.b16 %v346
      %v421 = vunpack.c.l.b16 %v347
      %v422 = vunpack.c.l.b16 %v348
      %v423 = vunpack.c.l.b16 %v349
      %v424 = vunpack.c.l.b16 %v350
      %v425 = vunpack.c.l.b16 %v351
      %v426 = vunpack.c.l.b16 %v352
      %v427 = vunpack.c.l.b16 %v353
      %v428 = vunpack.c.l.b16 %v354
      %v429 = vunpack.c.l.b16 %v355
      %v430 = vunpack.c.l.b16 %v356
      %v431 = vunpack.c.l.b16 %v357
      %v432 = vunpack.c.l.b16 %v358
      %v433 = vunpack.c.l.b16 %v359
      %v434 = vpack.c.b16 %v403, %v402
      %v435 = vpack.c.b16 %v405, %v404
      %v436 = vpack.c.b16 %v407, %v406
      %v437 = vpack.c.b16 %v409, %v408
      %v438 = vpack.c.b16 %v411, %v410
      %v439 = vpack.c.b16 %v413, %v412
      %v440 = vpack.c.b16 %v415, %v414
      %v441 = vpack.c.b16 %v417, %v416
      %v442 = vpack.c.b16 %v419, %v418
      %v443 = vpack.c.b16 %v421, %v420
      %v444 = vpack.c.b16 %v423, %v422
      %v445 = vpack.c.b16 %v425, %v424
      %v446 = vpack.c.b16 %v427, %v426
      %v447 = vpack.c.b16 %v429, %v428
      %v448 = vpack.c.b16 %v431, %v430
      %v449 = vpack.c.b16 %v433, %v432
      %v460 = vunpack.c.l.b16 %v360
      %v461 = vunpack.c.l.b16 %v361
      %v462 = vunpack.c.l.b16 %v362
      %v463 = vunpack.c.l.b16 %v363
      %v464 = vunpack.c.l.b16 %v364
      %v465 = vunpack.c.l.b16 %v365
      %v466 = vunpack.c.l.b16 %v366
      %v467 = vunpack.c.l.b16 %v367
      %v468 = vunpack.c.l.b16 %v368
      %v469 = vunpack.c.l.b16 %v369
      %v470 = vpack.c.b16 %v461, %v460
      %v471 = vpack.c.b16 %v463, %v462
      %v472 = vpack.c.b16 %v465, %v464
      %v473 = vpack.c.b16 %v467, %v466
      %v474 = vpack.c.b16 %v469, %v468
      %vm479 = vcmask 613376
      %v481 = vsel %vm479, %v434, 0
      %v484 = vsel %vm479, %v435, 0
      %v487 = vsel %vm479, %v436, 0
      %v490 = vsel %vm479, %v437, 0
      %v493 = vsel %vm479, %v438, 0
      %v496 = vsel %vm479, %v439, 0
      %v499 = vsel %vm479, %v440, 0
      %v502 = vsel %vm479, %v441, 0
      %v505 = vsel %vm479, %v442, 0
      %v508 = vsel %vm479, %v443, 0
      %v511 = vsel %vm479, %v444, 0
      %v514 = vsel %vm479, %v445, 0
      %v517 = vsel %vm479, %v446, 0
      %v520 = vsel %vm479, %v447, 0
      %v523 = vsel %vm479, %v448, 0
      %v526 = vsel %vm479, %v449, 0
      %vm528 = vcmask 1044480
      %vm529 = vcmask 1045504
      %v530 = vsel %vm528, 4294967295, 65535
      %v531 = vsel %vm529, %v530, 0
      %v533 = vand.u32 %v474, %v531
      %535 = vmatpush.bf16.msra.mxu0 0
      %536 = vmatpush.bf16.msra.mxu0 0
      %537 = vmatpush.bf16.msra.mxu0 0
      %538 = vmatpush.bf16.msra.mxu0 %v533
      %539 = vmatpush.bf16.msra.mxu0 %v473
      %540 = vmatpush.bf16.msra.mxu0 %v472
      %541 = vmatpush.bf16.msra.mxu0 %v471
      %542 = vmatpush.bf16.msra.mxu0 %v470
      %543 = vmatmul.bf16.gmra.mxu0 %v481
      %v544 = vpop.f32.mrf.mxu0
      %v545 = vadd.f32 0.0, %v544
      %v546 = vpop.f32.mrf.mxu0
      %v547 = vadd.f32 0.0, %v546
      %548 = vmatmul.bf16.gmra.mxu0 %v484
      %v549 = vpop.f32.mrf.mxu0
      %v550 = vadd.f32 0.0, %v549
      %v551 = vpop.f32.mrf.mxu0
      %v552 = vadd.f32 0.0, %v551
      %553 = vmatmul.bf16.gmra.mxu0 %v487
      %v554 = vpop.f32.mrf.mxu0
      %v555 = vadd.f32 0.0, %v554
      %v556 = vpop.f32.mrf.mxu0
      %v557 = vadd.f32 0.0, %v556
      %558 = vmatmul.bf16.gmra.mxu0 %v490
      %v559 = vpop.f32.mrf.mxu0
      %v560 = vadd.f32 0.0, %v559
      %v561 = vpop.f32.mrf.mxu0
      %v562 = vadd.f32 0.0, %v561
      %563 = vmatmul.bf16.gmra.mxu0 %v493
      %v564 = vpop.f32.mrf.mxu0
      %v565 = vadd.f32 0.0, %v564
      %v566 = vpop.f32.mrf.mxu0
      %v567 = vadd.f32 0.0, %v566
      %568 = vmatmul.bf16.gmra.mxu0 %v496
      %v569 = vpop.f32.mrf.mxu0
      %v570 = vadd.f32 0.0, %v569
      %v571 = vpop.f32.mrf.mxu0
      %v572 = vadd.f32 0.0, %v571
      %573 = vmatmul.bf16.gmra.mxu0 %v499
      %v574 = vpop.f32.mrf.mxu0
      %v575 = vadd.f32 0.0, %v574
      %v576 = vpop.f32.mrf.mxu0
      %v577 = vadd.f32 0.0, %v576
      %578 = vmatmul.bf16.gmra.mxu0 %v502
      %v579 = vpop.f32.mrf.mxu0
      %v580 = vadd.f32 0.0, %v579
      %v581 = vpop.f32.mrf.mxu0
      %v582 = vadd.f32 0.0, %v581
      %583 = vmatmul.bf16.gmra.mxu0 %v505
      %v584 = vpop.f32.mrf.mxu0
      %v585 = vadd.f32 0.0, %v584
      %v586 = vpop.f32.mrf.mxu0
      %v587 = vadd.f32 0.0, %v586
      %588 = vmatmul.bf16.gmra.mxu0 %v508
      %v589 = vpop.f32.mrf.mxu0
      %v590 = vadd.f32 0.0, %v589
      %v591 = vpop.f32.mrf.mxu0
      %v592 = vadd.f32 0.0, %v591
      %593 = vmatmul.bf16.gmra.mxu0 %v511
      %v594 = vpop.f32.mrf.mxu0
      %v595 = vadd.f32 0.0, %v594
      %v596 = vpop.f32.mrf.mxu0
      %v597 = vadd.f32 0.0, %v596
      %598 = vmatmul.bf16.gmra.mxu0 %v514
      %v599 = vpop.f32.mrf.mxu0
      %v600 = vadd.f32 0.0, %v599
      %v601 = vpop.f32.mrf.mxu0
      %v602 = vadd.f32 0.0, %v601
      %603 = vmatmul.bf16.gmra.mxu0 %v517
      %v604 = vpop.f32.mrf.mxu0
      %v605 = vadd.f32 0.0, %v604
      %v606 = vpop.f32.mrf.mxu0
      %v607 = vadd.f32 0.0, %v606
      %608 = vmatmul.bf16.gmra.mxu0 %v520
      %v609 = vpop.f32.mrf.mxu0
      %v610 = vadd.f32 0.0, %v609
      %v611 = vpop.f32.mrf.mxu0
      %v612 = vadd.f32 0.0, %v611
      %613 = vmatmul.bf16.gmra.mxu0 %v523
      %v614 = vpop.f32.mrf.mxu0
      %v615 = vadd.f32 0.0, %v614
      %v616 = vpop.f32.mrf.mxu0
      %v617 = vadd.f32 0.0, %v616
      %618 = vmatmul.bf16.gmra.mxu0 %v526
      %v619 = vpop.f32.mrf.mxu0
      %v620 = vadd.f32 0.0, %v619
      %v621 = vpop.f32.mrf.mxu0
      %v622 = vadd.f32 0.0, %v621
      %623 = vdwg.mxu0
      %v624 = vadd.f32 %v296, %v545
      %v625 = vadd.f32 %v297, %v547
      %v626 = vadd.f32 %v298, %v550
      %v627 = vadd.f32 %v299, %v552
      %v628 = vadd.f32 %v300, %v555
      %v629 = vadd.f32 %v301, %v557
      %v630 = vadd.f32 %v302, %v560
      %v631 = vadd.f32 %v303, %v562
      %v632 = vadd.f32 %v304, %v565
      %v633 = vadd.f32 %v305, %v567
      %v634 = vadd.f32 %v306, %v570
      %v635 = vadd.f32 %v307, %v572
      %v636 = vadd.f32 %v308, %v575
      %v637 = vadd.f32 %v309, %v577
      %v638 = vadd.f32 %v310, %v580
      %v639 = vadd.f32 %v311, %v582
      %v640 = vadd.f32 %v312, %v585
      %v641 = vadd.f32 %v313, %v587
      %v642 = vadd.f32 %v314, %v590
      %v643 = vadd.f32 %v315, %v592
      %v644 = vadd.f32 %v316, %v595
      %v645 = vadd.f32 %v317, %v597
      %v646 = vadd.f32 %v318, %v600
      %v647 = vadd.f32 %v319, %v602
      %v648 = vadd.f32 %v320, %v605
      %v649 = vadd.f32 %v321, %v607
      %v650 = vadd.f32 %v322, %v610
      %v651 = vadd.f32 %v323, %v612
      %v652 = vadd.f32 %v324, %v615
      %v653 = vadd.f32 %v325, %v617
      %v654 = vadd.f32 %v326, %v620
      %v655 = vadd.f32 %v327, %v622
      %656 = vst [vmem:[#allocation2] sm:$0xff] %v624
      %657 = vst [vmem:[#allocation2 + $0x8] sm:$0xff] %v625
      %658 = vst [vmem:[#allocation2 + $0x10] sm:$0xff] %v626
      %659 = vst [vmem:[#allocation2 + $0x18] sm:$0xff] %v627
      %660 = vst [vmem:[#allocation2 + $0x20] sm:$0xff] %v628
      %661 = vst [vmem:[#allocation2 + $0x28] sm:$0xff] %v629
      %662 = vst [vmem:[#allocation2 + $0x30] sm:$0xff] %v630
      %663 = vst [vmem:[#allocation2 + $0x38] sm:$0xff] %v631
      %664 = vst [vmem:[#allocation2 + $0x40] sm:$0xff] %v632
      %665 = vst [vmem:[#allocation2 + $0x48] sm:$0xff] %v633
      %666 = vst [vmem:[#allocation2 + $0x50] sm:$0xff] %v634
      %667 = vst [vmem:[#allocation2 + $0x58] sm:$0xff] %v635
      %668 = vst [vmem:[#allocation2 + $0x60] sm:$0xff] %v636
      %669 = vst [vmem:[#allocation2 + $0x68] sm:$0xff] %v637
      %670 = vst [vmem:[#allocation2 + $0x70] sm:$0xff] %v638
      %671 = vst [vmem:[#allocation2 + $0x78] sm:$0xff] %v639
      %672 = vst [vmem:[#allocation2 + $0x80] sm:$0xff] %v640
      %673 = vst [vmem:[#allocation2 + $0x88] sm:$0xff] %v641
      %674 = vst [vmem:[#allocation2 + $0x90] sm:$0xff] %v642
      %675 = vst [vmem:[#allocation2 + $0x98] sm:$0xff] %v643
      %676 = vst [vmem:[#allocation2 + $0xa0] sm:$0xff] %v644
      %677 = vst [vmem:[#allocation2 + $0xa8] sm:$0xff] %v645
      %678 = vst [vmem:[#allocation2 + $0xb0] sm:$0xff] %v646
      %679 = vst [vmem:[#allocation2 + $0xb8] sm:$0xff] %v647
      %680 = vst [vmem:[#allocation2 + $0xc0] sm:$0xff] %v648
      %681 = vst [vmem:[#allocation2 + $0xc8] sm:$0xff] %v649
      %682 = vst [vmem:[#allocation2 + $0xd0] sm:$0xff] %v650
      %683 = vst [vmem:[#allocation2 + $0xd8] sm:$0xff] %v651
      %684 = vst [vmem:[#allocation2 + $0xe0] sm:$0xff] %v652
      %685 = vst [vmem:[#allocation2 + $0xe8] sm:$0xff] %v653
      %686 = vst [vmem:[#allocation2 + $0xf0] sm:$0xff] %v654
      %687 = vst [vmem:[#allocation2 + $0xf8] sm:$0xff] %v655
      // Predicated region
      $region37: #{cvae_forward.10} parent=31 // pred_check
        %p688 = pneg %p260
      $region38: #{cvae_forward.10} parent=31 // pred_check_branch
        %690 = sbr.rel (%p688) target = $region40
      $region39: #{cvae_forward.10} parent=31 // pred_region
        %v691 = vld [vmem:[#allocation2] sm:$0xff]
        %v692 = vld [vmem:[#allocation2 + $0x8] sm:$0xff]
        %v693 = vld [vmem:[#allocation2 + $0x10] sm:$0xff]
        %v694 = vld [vmem:[#allocation2 + $0x18] sm:$0xff]
        %v695 = vld [vmem:[#allocation2 + $0x20] sm:$0xff]
        %v696 = vld [vmem:[#allocation2 + $0x28] sm:$0xff]
        %v697 = vld [vmem:[#allocation2 + $0x30] sm:$0xff]
        %v698 = vld [vmem:[#allocation2 + $0x38] sm:$0xff]
        %v699 = vld [vmem:[#allocation2 + $0x40] sm:$0xff]
        %v700 = vld [vmem:[#allocation2 + $0x48] sm:$0xff]
        %v701 = vld [vmem:[#allocation2 + $0x50] sm:$0xff]
        %v702 = vld [vmem:[#allocation2 + $0x58] sm:$0xff]
        %v703 = vld [vmem:[#allocation2 + $0x60] sm:$0xff]
        %v704 = vld [vmem:[#allocation2 + $0x68] sm:$0xff]
        %v705 = vld [vmem:[#allocation2 + $0x70] sm:$0xff]
        %v706 = vld [vmem:[#allocation2 + $0x78] sm:$0xff]
        %v707 = vld [vmem:[#allocation2 + $0x80] sm:$0xff]
        %v708 = vld [vmem:[#allocation2 + $0x88] sm:$0xff]
        %v709 = vld [vmem:[#allocation2 + $0x90] sm:$0xff]
        %v710 = vld [vmem:[#allocation2 + $0x98] sm:$0xff]
        %v711 = vld [vmem:[#allocation2 + $0xa0] sm:$0xff]
        %v712 = vld [vmem:[#allocation2 + $0xa8] sm:$0xff]
        %v713 = vld [vmem:[#allocation2 + $0xb0] sm:$0xff]
        %v714 = vld [vmem:[#allocation2 + $0xb8] sm:$0xff]
        %v715 = vld [vmem:[#allocation2 + $0xc0] sm:$0xff]
        %v716 = vld [vmem:[#allocation2 + $0xc8] sm:$0xff]
        %v717 = vld [vmem:[#allocation2 + $0xd0] sm:$0xff]
        %v718 = vld [vmem:[#allocation2 + $0xd8] sm:$0xff]
        %v719 = vld [vmem:[#allocation2 + $0xe0] sm:$0xff]
        %v720 = vld [vmem:[#allocation2 + $0xe8] sm:$0xff]
        %v721 = vld [vmem:[#allocation2 + $0xf0] sm:$0xff]
        %v722 = vld [vmem:[#allocation2 + $0xf8] sm:$0xff]
        %v723 = vld [vmem:[%s249] sm:$0x1]
        %v725 = vperm.slane %v723, 0
        %v727 = vadd.f32 %v691, %v725
        %v728 = vadd.f32 %v692, %v725
        %v729 = vadd.f32 %v693, %v725
        %v730 = vadd.f32 %v694, %v725
        %v731 = vadd.f32 %v695, %v725
        %v732 = vadd.f32 %v696, %v725
        %v733 = vadd.f32 %v697, %v725
        %v734 = vadd.f32 %v698, %v725
        %v735 = vadd.f32 %v699, %v725
        %v736 = vadd.f32 %v700, %v725
        %v737 = vadd.f32 %v701, %v725
        %v738 = vadd.f32 %v702, %v725
        %v739 = vadd.f32 %v703, %v725
        %v740 = vadd.f32 %v704, %v725
        %v741 = vadd.f32 %v705, %v725
        %v742 = vadd.f32 %v706, %v725
        %v743 = vadd.f32 %v707, %v725
        %v744 = vadd.f32 %v708, %v725
        %v745 = vadd.f32 %v709, %v725
        %v746 = vadd.f32 %v710, %v725
        %v747 = vadd.f32 %v711, %v725
        %v748 = vadd.f32 %v712, %v725
        %v749 = vadd.f32 %v713, %v725
        %v750 = vadd.f32 %v714, %v725
        %v751 = vadd.f32 %v715, %v725
        %v752 = vadd.f32 %v716, %v725
        %v753 = vadd.f32 %v717, %v725
        %v754 = vadd.f32 %v718, %v725
        %v755 = vadd.f32 %v719, %v725
        %v756 = vadd.f32 %v720, %v725
        %v757 = vadd.f32 %v721, %v725
        %v758 = vadd.f32 %v722, %v725
        %v759 = vmax.f32 %v727, 0.0
        %v760 = vmax.f32 %v728, 0.0
        %v761 = vmax.f32 %v729, 0.0
        %v762 = vmax.f32 %v730, 0.0
        %v763 = vmax.f32 %v731, 0.0
        %v764 = vmax.f32 %v732, 0.0
        %v765 = vmax.f32 %v733, 0.0
        %v766 = vmax.f32 %v734, 0.0
        %v767 = vmax.f32 %v735, 0.0
        %v768 = vmax.f32 %v736, 0.0
        %v769 = vmax.f32 %v737, 0.0
        %v770 = vmax.f32 %v738, 0.0
        %v771 = vmax.f32 %v739, 0.0
        %v772 = vmax.f32 %v740, 0.0
        %v773 = vmax.f32 %v741, 0.0
        %v774 = vmax.f32 %v742, 0.0
        %v775 = vmax.f32 %v743, 0.0
        %v776 = vmax.f32 %v744, 0.0
        %v777 = vmax.f32 %v745, 0.0
        %v778 = vmax.f32 %v746, 0.0
        %v779 = vmax.f32 %v747, 0.0
        %v780 = vmax.f32 %v748, 0.0
        %v781 = vmax.f32 %v749, 0.0
        %v782 = vmax.f32 %v750, 0.0
        %v783 = vmax.f32 %v751, 0.0
        %v784 = vmax.f32 %v752, 0.0
        %v785 = vmax.f32 %v753, 0.0
        %v786 = vmax.f32 %v754, 0.0
        %v787 = vmax.f32 %v755, 0.0
        %v788 = vmax.f32 %v756, 0.0
        %v789 = vmax.f32 %v757, 0.0
        %v790 = vmax.f32 %v758, 0.0
        %v791 = vpack.c.bf16 %v759, %v759
        %v792 = vpack.c.bf16 %v760, %v760
        %v793 = vpack.c.bf16 %v761, %v761
        %v794 = vpack.c.bf16 %v762, %v762
        %v795 = vpack.c.bf16 %v763, %v763
        %v796 = vpack.c.bf16 %v764, %v764
        %v797 = vpack.c.bf16 %v765, %v765
        %v798 = vpack.c.bf16 %v766, %v766
        %v799 = vpack.c.bf16 %v767, %v767
        %v800 = vpack.c.bf16 %v768, %v768
        %v801 = vpack.c.bf16 %v769, %v769
        %v802 = vpack.c.bf16 %v770, %v770
        %v803 = vpack.c.bf16 %v771, %v771
        %v804 = vpack.c.bf16 %v772, %v772
        %v805 = vpack.c.bf16 %v773, %v773
        %v806 = vpack.c.bf16 %v774, %v774
        %v807 = vpack.c.bf16 %v775, %v775
        %v808 = vpack.c.bf16 %v776, %v776
        %v809 = vpack.c.bf16 %v777, %v777
        %v810 = vpack.c.bf16 %v778, %v778
        %v811 = vpack.c.bf16 %v779, %v779
        %v812 = vpack.c.bf16 %v780, %v780
        %v813 = vpack.c.bf16 %v781, %v781
        %v814 = vpack.c.bf16 %v782, %v782
        %v815 = vpack.c.bf16 %v783, %v783
        %v816 = vpack.c.bf16 %v784, %v784
        %v817 = vpack.c.bf16 %v785, %v785
        %v818 = vpack.c.bf16 %v786, %v786
        %v819 = vpack.c.bf16 %v787, %v787
        %v820 = vpack.c.bf16 %v788, %v788
        %v821 = vpack.c.bf16 %v789, %v789
        %v822 = vpack.c.bf16 %v790, %v790
        %823 = vst [vmem:[%s257] sm:$0xf] %v791
        %824 = vst [vmem:[%s257 + $0x4] sm:$0xf] %v792
        %825 = vst [vmem:[%s257 + $0x8] sm:$0xf] %v793
        %826 = vst [vmem:[%s257 + $0xc] sm:$0xf] %v794
        %827 = vst [vmem:[%s257 + $0x10] sm:$0xf] %v795
        %828 = vst [vmem:[%s257 + $0x14] sm:$0xf] %v796
        %829 = vst [vmem:[%s257 + $0x18] sm:$0xf] %v797
        %830 = vst [vmem:[%s257 + $0x1c] sm:$0xf] %v798
        %831 = vst [vmem:[%s257 + $0x20] sm:$0xf] %v799
        %832 = vst [vmem:[%s257 + $0x24] sm:$0xf] %v800
        %833 = vst [vmem:[%s257 + $0x28] sm:$0xf] %v801
        %834 = vst [vmem:[%s257 + $0x2c] sm:$0xf] %v802
        %835 = vst [vmem:[%s257 + $0x30] sm:$0xf] %v803
        %836 = vst [vmem:[%s257 + $0x34] sm:$0xf] %v804
        %837 = vst [vmem:[%s257 + $0x38] sm:$0xf] %v805
        %838 = vst [vmem:[%s257 + $0x3c] sm:$0xf] %v806
        %839 = vst [vmem:[%s257 + $0x40] sm:$0xf] %v807
        %840 = vst [vmem:[%s257 + $0x44] sm:$0xf] %v808
        %841 = vst [vmem:[%s257 + $0x48] sm:$0xf] %v809
        %842 = vst [vmem:[%s257 + $0x4c] sm:$0xf] %v810
        %843 = vst [vmem:[%s257 + $0x50] sm:$0xf] %v811
        %844 = vst [vmem:[%s257 + $0x54] sm:$0xf] %v812
        %845 = vst [vmem:[%s257 + $0x58] sm:$0xf] %v813
        %846 = vst [vmem:[%s257 + $0x5c] sm:$0xf] %v814
        %847 = vst [vmem:[%s257 + $0x60] sm:$0xf] %v815
        %848 = vst [vmem:[%s257 + $0x64] sm:$0xf] %v816
        %849 = vst [vmem:[%s257 + $0x68] sm:$0xf] %v817
        %850 = vst [vmem:[%s257 + $0x6c] sm:$0xf] %v818
        %851 = vst [vmem:[%s257 + $0x70] sm:$0xf] %v819
        %852 = vst [vmem:[%s257 + $0x74] sm:$0xf] %v820
        %853 = vst [vmem:[%s257 + $0x78] sm:$0xf] %v821
        %854 = vst [vmem:[%s257 + $0x7c] sm:$0xf] %v822
      $region40: #{cvae_forward.10} parent=31 // pred_fallthru
        _
      %s855 = smul.u32 32, %s19
      %p856 = scmp.lt.s32.totalorder %s855, 63
      %s857 = scalar_select %p856, %s855, 63
      %p858 = scmp.lt.s32.totalorder %s20, 0
      %s859 = scalar_select %p858, %s20, 0
      %s860 = sadd.s32 %s859, %s857
      %s861 = smul.addr %s860, 4
      %s862 = scalar_lea.vmem %s3, %s861
      // Predicated region
      $region41: #{cvae_forward.10} parent=31 // pred_check
        %p863 = pneg %p135
      $region42: #{cvae_forward.10} parent=31 // pred_check_branch
        %865 = sbr.rel (%p863) target = $region44
      $region43: #{cvae_forward.10} parent=31 // pred_region
        %s866 = smul.u32 32, %s19
      $region44: #{cvae_forward.10} parent=31 // pred_fallthru
        _
    $region32: #{cvae_forward.10} parent=5 // pred_fallthru
      _
    %p867 = scmp.le.s32.totalorder 2, %s9
    // Predicated region
    $region45: #{cvae_forward.10} parent=5 // pred_check
      %p868 = pneg %p867
    $region46: #{cvae_forward.10} parent=5 // pred_check_branch
      %870 = sbr.rel (%p868) target = $region48
    $region47: #{cvae_forward.10} parent=5 // pred_region
      %s871 = ssub.s32 %s9, 2
      // Predicated region
      $region49: #{cvae_forward.10} parent=47 // pred_check
        %p872 = pneg %p141
      $region50: #{cvae_forward.10} parent=47 // pred_check_branch
        %874 = sbr.rel (%p872) target = $region52
      $region51: #{cvae_forward.10} parent=47 // pred_region
        %s875 = smul.u32 32, %s22
        %p876 = scmp.lt.s32.totalorder %s875, 63
        %s877 = scalar_select %p876, %s875, 63
        %p878 = scmp.lt.s32.totalorder %s23, 0
        %s879 = scalar_select %p878, %s23, 0
        %s880 = sadd.s32 %s879, %s877
        %s881 = smul.addr %s880, 4
        %s882 = scalar_lea.vmem %s3, %s881
      $region52: #{cvae_forward.10} parent=47 // pred_fallthru
        _
    $region48: #{cvae_forward.10} parent=5 // pred_fallthru
      _
  $region6: #{cvae_forward.10} parent=0 // loop_footer
    %s13 = sadd.s32 1, %s9
  $region7: #{cvae_forward.10} parent=0 // loop_footer_branch
    %8 = sbr.rel target = $region3
  $region8: #{cvae_forward.10} parent=0 // loop_exit
    _

// kernel: cvae_forward.11
$region0: #{cvae_forward.11}
  #allocation0 [shape = 'u32[]', space=smem, size = 0x4, offset = 0x4, fixed_abs, tag = 'smem constant byte address 0x4 - core index']
  #allocation1 [shape = 'u32[72,128]{1,0:T(1,128)}', space=vmem, size = 0x9000, scoped, tag = 'internal scratch']
  #allocation2 [shape = 'f32[128,128]{1,0:T(8,128)}', space=vmem, size = 0x10000, scoped, tag = 'scratch operand']
  %s0 = inlined_call_operand.vmem [shape: bf16[128,100], index: 0, kind: input, shape index: {}]
  %s1 = inlined_call_operand.vmem [shape: bf16[100,8], index: 1, kind: input, shape index: {}]
  %s2 = inlined_call_operand.vmem [shape: f32[1,8], index: 2, kind: input, shape index: {}]
  %s3 = inlined_call_operand.vmem [shape: bf16[128,8], index: 3, kind: output, shape index: {}]
  %s4 = sld [smem:[#allocation0]]
  $region30: #{cvae_forward.11} parent=0
    _
  %s6 = ssub.s32 1, %s4
  %s7 = scalar_select 0, %s6, %s4
  // Predicated region
  $region2: #{cvae_forward.11} parent=0 // pred_check
    _
  $region3: #{cvae_forward.11} parent=0 // pred_check_branch
    %9 = sbr.rel (0) target = $region5
  $region4: #{cvae_forward.11} parent=0 // pred_region
    _
  $region5: #{cvae_forward.11} parent=0 // pred_fallthru
    _
  // Predicated region
  $region6: #{cvae_forward.11} parent=0 // pred_check
    _
  $region7: #{cvae_forward.11} parent=0 // pred_check_branch
    %11 = sbr.rel (0) target = $region9
  $region8: #{cvae_forward.11} parent=0 // pred_region
    _
  $region9: #{cvae_forward.11} parent=0 // pred_fallthru
    _
  // Predicated region
  $region10: #{cvae_forward.11} parent=0 // pred_check
    _
  $region11: #{cvae_forward.11} parent=0 // pred_check_branch
    %13 = sbr.rel (0) target = $region13
  $region12: #{cvae_forward.11} parent=0 // pred_region
    _
  $region13: #{cvae_forward.11} parent=0 // pred_fallthru
    _
  %p15 = scmp.eq.s32.totalorder 0, 0
  // Predicated region
  $region14: #{cvae_forward.11} parent=0 // pred_check
    %p16 = pneg %p15
  $region15: #{cvae_forward.11} parent=0 // pred_check_branch
    %18 = sbr.rel (%p16) target = $region17
  $region16: #{cvae_forward.11} parent=0 // pred_region
    %19 = vst [vmem:[#allocation2] sm:$0xff] 0.0
    %20 = vst [vmem:[#allocation2 + $0x8] sm:$0xff] 0.0
    %21 = vst [vmem:[#allocation2 + $0x10] sm:$0xff] 0.0
    %22 = vst [vmem:[#allocation2 + $0x18] sm:$0xff] 0.0
    %23 = vst [vmem:[#allocation2 + $0x20] sm:$0xff] 0.0
    %24 = vst [vmem:[#allocation2 + $0x28] sm:$0xff] 0.0
    %25 = vst [vmem:[#allocation2 + $0x30] sm:$0xff] 0.0
    %26 = vst [vmem:[#allocation2 + $0x38] sm:$0xff] 0.0
    %27 = vst [vmem:[#allocation2 + $0x40] sm:$0xff] 0.0
    %28 = vst [vmem:[#allocation2 + $0x48] sm:$0xff] 0.0
    %29 = vst [vmem:[#allocation2 + $0x50] sm:$0xff] 0.0
    %30 = vst [vmem:[#allocation2 + $0x58] sm:$0xff] 0.0
    %31 = vst [vmem:[#allocation2 + $0x60] sm:$0xff] 0.0
    %32 = vst [vmem:[#allocation2 + $0x68] sm:$0xff] 0.0
    %33 = vst [vmem:[#allocation2 + $0x70] sm:$0xff] 0.0
    %34 = vst [vmem:[#allocation2 + $0x78] sm:$0xff] 0.0
  $region17: #{cvae_forward.11} parent=0 // pred_fallthru
    _
  %v35 = vld [vmem:[#allocation2] sm:$0xff]
  %v36 = vld [vmem:[#allocation2 + $0x8] sm:$0xff]
  %v37 = vld [vmem:[#allocation2 + $0x10] sm:$0xff]
  %v38 = vld [vmem:[#allocation2 + $0x18] sm:$0xff]
  %v39 = vld [vmem:[#allocation2 + $0x20] sm:$0xff]
  %v40 = vld [vmem:[#allocation2 + $0x28] sm:$0xff]
  %v41 = vld [vmem:[#allocation2 + $0x30] sm:$0xff]
  %v42 = vld [vmem:[#allocation2 + $0x38] sm:$0xff]
  %v43 = vld [vmem:[#allocation2 + $0x40] sm:$0xff]
  %v44 = vld [vmem:[#allocation2 + $0x48] sm:$0xff]
  %v45 = vld [vmem:[#allocation2 + $0x50] sm:$0xff]
  %v46 = vld [vmem:[#allocation2 + $0x58] sm:$0xff]
  %v47 = vld [vmem:[#allocation2 + $0x60] sm:$0xff]
  %v48 = vld [vmem:[#allocation2 + $0x68] sm:$0xff]
  %v49 = vld [vmem:[#allocation2 + $0x70] sm:$0xff]
  %v50 = vld [vmem:[#allocation2 + $0x78] sm:$0xff]
  %v51 = vld [vmem:[%s0] sm:$0xf]
  %v52 = vld [vmem:[%s0 + $0x4] sm:$0xf]
  %v53 = vld [vmem:[%s0 + $0x8] sm:$0xf]
  %v54 = vld [vmem:[%s0 + $0xc] sm:$0xf]
  %v55 = vld [vmem:[%s0 + $0x10] sm:$0xf]
  %v56 = vld [vmem:[%s0 + $0x14] sm:$0xf]
  %v57 = vld [vmem:[%s0 + $0x18] sm:$0xf]
  %v58 = vld [vmem:[%s0 + $0x1c] sm:$0xf]
  %v59 = vld [vmem:[%s0 + $0x20] sm:$0xf]
  %v60 = vld [vmem:[%s0 + $0x24] sm:$0xf]
  %v61 = vld [vmem:[%s0 + $0x28] sm:$0xf]
  %v62 = vld [vmem:[%s0 + $0x2c] sm:$0xf]
  %v63 = vld [vmem:[%s0 + $0x30] sm:$0xf]
  %v64 = vld [vmem:[%s0 + $0x34] sm:$0xf]
  %v65 = vld [vmem:[%s0 + $0x38] sm:$0xf]
  %v66 = vld [vmem:[%s0 + $0x3c] sm:$0xf]
  %v67 = vld [vmem:[%s1] sm:$0xf]
  %v68 = vld [vmem:[%s1 + $0x4] sm:$0xf]
  %v69 = vld [vmem:[%s1 + $0x8] sm:$0xf]
  %v70 = vld [vmem:[%s1 + $0xc] sm:$0xf]
  %v71 = vld [vmem:[%s1 + $0x10] sm:$0xf]
  %v72 = vld [vmem:[%s1 + $0x14] sm:$0xf]
  %v73 = vld [vmem:[%s1 + $0x18] sm:$0xf]
  %v74 = vld [vmem:[%s1 + $0x1c] sm:$0xf]
  %v75 = vld [vmem:[%s1 + $0x20] sm:$0xf]
  %v76 = vld [vmem:[%s1 + $0x24] sm:$0xf]
  %v77 = vld [vmem:[%s1 + $0x28] sm:$0xf]
  %v78 = vld [vmem:[%s1 + $0x2c] sm:$0xf]
  %v79 = vld [vmem:[%s1 + $0x30] sm:$0x3]
  %v96 = vunpack.c.l.b16 %v51
  %v97 = vunpack.c.l.b16 %v52
  %v98 = vunpack.c.l.b16 %v53
  %v99 = vunpack.c.l.b16 %v54
  %v100 = vunpack.c.l.b16 %v55
  %v101 = vunpack.c.l.b16 %v56
  %v102 = vunpack.c.l.b16 %v57
  %v103 = vunpack.c.l.b16 %v58
  %v104 = vunpack.c.l.b16 %v59
  %v105 = vunpack.c.l.b16 %v60
  %v106 = vunpack.c.l.b16 %v61
  %v107 = vunpack.c.l.b16 %v62
  %v108 = vunpack.c.l.b16 %v63
  %v109 = vunpack.c.l.b16 %v64
  %v110 = vunpack.c.l.b16 %v65
  %v111 = vunpack.c.l.b16 %v66
  %v112 = vpack.c.b16 %v97, %v96
  %v113 = vpack.c.b16 %v99, %v98
  %v114 = vpack.c.b16 %v101, %v100
  %v115 = vpack.c.b16 %v103, %v102
  %v116 = vpack.c.b16 %v105, %v104
  %v117 = vpack.c.b16 %v107, %v106
  %v118 = vpack.c.b16 %v109, %v108
  %v119 = vpack.c.b16 %v111, %v110
  %v133 = vunpack.c.l.b16 %v67
  %v134 = vunpack.c.l.b16 %v68
  %v135 = vunpack.c.l.b16 %v69
  %v136 = vunpack.c.l.b16 %v70
  %v137 = vunpack.c.l.b16 %v71
  %v138 = vunpack.c.l.b16 %v72
  %v139 = vunpack.c.l.b16 %v73
  %v140 = vunpack.c.l.b16 %v74
  %v141 = vunpack.c.l.b16 %v75
  %v142 = vunpack.c.l.b16 %v76
  %v143 = vunpack.c.l.b16 %v77
  %v144 = vunpack.c.l.b16 %v78
  %v145 = vunpack.c.l.b16 %v79
  %v146 = vpack.c.b16 %v134, %v133
  %v147 = vpack.c.b16 %v136, %v135
  %v148 = vpack.c.b16 %v138, %v137
  %v149 = vpack.c.b16 %v140, %v139
  %v150 = vpack.c.b16 %v142, %v141
  %v151 = vpack.c.b16 %v144, %v143
  %v152 = vpack.c.b16 %v145, %v145
  %vm159 = vcmask 818176
  %v161 = vsel %vm159, %v112, 0
  %v164 = vsel %vm159, %v113, 0
  %v167 = vsel %vm159, %v114, 0
  %v170 = vsel %vm159, %v115, 0
  %v173 = vsel %vm159, %v116, 0
  %v176 = vsel %vm159, %v117, 0
  %v179 = vsel %vm159, %v118, 0
  %v182 = vsel %vm159, %v119, 0
  %vm184 = vcmask 1041408
  %v186 = vsel %vm184, %v152, 0
  %188 = vmatpush.bf16.msra.mxu0 0
  %189 = vmatpush.bf16.msra.mxu0 %v186
  %190 = vmatpush.bf16.msra.mxu0 %v151
  %191 = vmatpush.bf16.msra.mxu0 %v150
  %192 = vmatpush.bf16.msra.mxu0 %v149
  %193 = vmatpush.bf16.msra.mxu0 %v148
  %194 = vmatpush.bf16.msra.mxu0 %v147
  %195 = vmatpush.bf16.msra.mxu0 %v146
  %196 = vmatmul.bf16.gmra.mxu0 %v161
  %v197 = vpop.f32.mrf.mxu0
  %v198 = vadd.f32 0.0, %v197
  %v199 = vpop.f32.mrf.mxu0
  %v200 = vadd.f32 0.0, %v199
  %201 = vmatmul.bf16.gmra.mxu0 %v164
  %v202 = vpop.f32.mrf.mxu0
  %v203 = vadd.f32 0.0, %v202
  %v204 = vpop.f32.mrf.mxu0
  %v205 = vadd.f32 0.0, %v204
  %206 = vmatmul.bf16.gmra.mxu0 %v167
  %v207 = vpop.f32.mrf.mxu0
  %v208 = vadd.f32 0.0, %v207
  %v209 = vpop.f32.mrf.mxu0
  %v210 = vadd.f32 0.0, %v209
  %211 = vmatmul.bf16.gmra.mxu0 %v170
  %v212 = vpop.f32.mrf.mxu0
  %v213 = vadd.f32 0.0, %v212
  %v214 = vpop.f32.mrf.mxu0
  %v215 = vadd.f32 0.0, %v214
  %216 = vmatmul.bf16.gmra.mxu0 %v173
  %v217 = vpop.f32.mrf.mxu0
  %v218 = vadd.f32 0.0, %v217
  %v219 = vpop.f32.mrf.mxu0
  %v220 = vadd.f32 0.0, %v219
  %221 = vmatmul.bf16.gmra.mxu0 %v176
  %v222 = vpop.f32.mrf.mxu0
  %v223 = vadd.f32 0.0, %v222
  %v224 = vpop.f32.mrf.mxu0
  %v225 = vadd.f32 0.0, %v224
  %226 = vmatmul.bf16.gmra.mxu0 %v179
  %v227 = vpop.f32.mrf.mxu0
  %v228 = vadd.f32 0.0, %v227
  %v229 = vpop.f32.mrf.mxu0
  %v230 = vadd.f32 0.0, %v229
  %231 = vmatmul.bf16.gmra.mxu0 %v182
  %v232 = vpop.f32.mrf.mxu0
  %v233 = vadd.f32 0.0, %v232
  %v234 = vpop.f32.mrf.mxu0
  %v235 = vadd.f32 0.0, %v234
  %236 = vdwg.mxu0
  %v237 = vadd.f32 %v35, %v198
  %v238 = vadd.f32 %v36, %v200
  %v239 = vadd.f32 %v37, %v203
  %v240 = vadd.f32 %v38, %v205
  %v241 = vadd.f32 %v39, %v208
  %v242 = vadd.f32 %v40, %v210
  %v243 = vadd.f32 %v41, %v213
  %v244 = vadd.f32 %v42, %v215
  %v245 = vadd.f32 %v43, %v218
  %v246 = vadd.f32 %v44, %v220
  %v247 = vadd.f32 %v45, %v223
  %v248 = vadd.f32 %v46, %v225
  %v249 = vadd.f32 %v47, %v228
  %v250 = vadd.f32 %v48, %v230
  %v251 = vadd.f32 %v49, %v233
  %v252 = vadd.f32 %v50, %v235
  %253 = vst [vmem:[#allocation2] sm:$0xff] %v237
  %254 = vst [vmem:[#allocation2 + $0x8] sm:$0xff] %v238
  %255 = vst [vmem:[#allocation2 + $0x10] sm:$0xff] %v239
  %256 = vst [vmem:[#allocation2 + $0x18] sm:$0xff] %v240
  %257 = vst [vmem:[#allocation2 + $0x20] sm:$0xff] %v241
  %258 = vst [vmem:[#allocation2 + $0x28] sm:$0xff] %v242
  %259 = vst [vmem:[#allocation2 + $0x30] sm:$0xff] %v243
  %260 = vst [vmem:[#allocation2 + $0x38] sm:$0xff] %v244
  %261 = vst [vmem:[#allocation2 + $0x40] sm:$0xff] %v245
  %262 = vst [vmem:[#allocation2 + $0x48] sm:$0xff] %v246
  %263 = vst [vmem:[#allocation2 + $0x50] sm:$0xff] %v247
  %264 = vst [vmem:[#allocation2 + $0x58] sm:$0xff] %v248
  %265 = vst [vmem:[#allocation2 + $0x60] sm:$0xff] %v249
  %266 = vst [vmem:[#allocation2 + $0x68] sm:$0xff] %v250
  %267 = vst [vmem:[#allocation2 + $0x70] sm:$0xff] %v251
  %268 = vst [vmem:[#allocation2 + $0x78] sm:$0xff] %v252
  // Predicated region
  $region18: #{cvae_forward.11} parent=0 // pred_check
    %p269 = pneg %p15
  $region19: #{cvae_forward.11} parent=0 // pred_check_branch
    %271 = sbr.rel (%p269) target = $region21
  $region20: #{cvae_forward.11} parent=0 // pred_region
    %v272 = vld [vmem:[#allocation2] sm:$0xff]
    %v273 = vld [vmem:[#allocation2 + $0x8] sm:$0xff]
    %v274 = vld [vmem:[#allocation2 + $0x10] sm:$0xff]
    %v275 = vld [vmem:[#allocation2 + $0x18] sm:$0xff]
    %v276 = vld [vmem:[#allocation2 + $0x20] sm:$0xff]
    %v277 = vld [vmem:[#allocation2 + $0x28] sm:$0xff]
    %v278 = vld [vmem:[#allocation2 + $0x30] sm:$0xff]
    %v279 = vld [vmem:[#allocation2 + $0x38] sm:$0xff]
    %v280 = vld [vmem:[#allocation2 + $0x40] sm:$0xff]
    %v281 = vld [vmem:[#allocation2 + $0x48] sm:$0xff]
    %v282 = vld [vmem:[#allocation2 + $0x50] sm:$0xff]
    %v283 = vld [vmem:[#allocation2 + $0x58] sm:$0xff]
    %v284 = vld [vmem:[#allocation2 + $0x60] sm:$0xff]
    %v285 = vld [vmem:[#allocation2 + $0x68] sm:$0xff]
    %v286 = vld [vmem:[#allocation2 + $0x70] sm:$0xff]
    %v287 = vld [vmem:[#allocation2 + $0x78] sm:$0xff]
    %v288 = vld [vmem:[%s2] sm:$0x1]
    %v290 = vperm.slane %v288, 0
    %v292 = vadd.f32 %v272, %v290
    %v293 = vadd.f32 %v273, %v290
    %v294 = vadd.f32 %v274, %v290
    %v295 = vadd.f32 %v275, %v290
    %v296 = vadd.f32 %v276, %v290
    %v297 = vadd.f32 %v277, %v290
    %v298 = vadd.f32 %v278, %v290
    %v299 = vadd.f32 %v279, %v290
    %v300 = vadd.f32 %v280, %v290
    %v301 = vadd.f32 %v281, %v290
    %v302 = vadd.f32 %v282, %v290
    %v303 = vadd.f32 %v283, %v290
    %v304 = vadd.f32 %v284, %v290
    %v305 = vadd.f32 %v285, %v290
    %v306 = vadd.f32 %v286, %v290
    %v307 = vadd.f32 %v287, %v290
    %v308 = vmax.f32 %v292, 0.0
    %v309 = vmax.f32 %v293, 0.0
    %v310 = vmax.f32 %v294, 0.0
    %v311 = vmax.f32 %v295, 0.0
    %v312 = vmax.f32 %v296, 0.0
    %v313 = vmax.f32 %v297, 0.0
    %v314 = vmax.f32 %v298, 0.0
    %v315 = vmax.f32 %v299, 0.0
    %v316 = vmax.f32 %v300, 0.0
    %v317 = vmax.f32 %v301, 0.0
    %v318 = vmax.f32 %v302, 0.0
    %v319 = vmax.f32 %v303, 0.0
    %v320 = vmax.f32 %v304, 0.0
    %v321 = vmax.f32 %v305, 0.0
    %v322 = vmax.f32 %v306, 0.0
    %v323 = vmax.f32 %v307, 0.0
    %v324 = vpack.c.bf16 %v308, %v308
    %v325 = vpack.c.bf16 %v309, %v309
    %v326 = vpack.c.bf16 %v310, %v310
    %v327 = vpack.c.bf16 %v311, %v311
    %v328 = vpack.c.bf16 %v312, %v312
    %v329 = vpack.c.bf16 %v313, %v313
    %v330 = vpack.c.bf16 %v314, %v314
    %v331 = vpack.c.bf16 %v315, %v315
    %v332 = vpack.c.bf16 %v316, %v316
    %v333 = vpack.c.bf16 %v317, %v317
    %v334 = vpack.c.bf16 %v318, %v318
    %v335 = vpack.c.bf16 %v319, %v319
    %v336 = vpack.c.bf16 %v320, %v320
    %v337 = vpack.c.bf16 %v321, %v321
    %v338 = vpack.c.bf16 %v322, %v322
    %v339 = vpack.c.bf16 %v323, %v323
    %340 = vst [vmem:[%s3] sm:$0xf] %v324
    %341 = vst [vmem:[%s3 + $0x4] sm:$0xf] %v325
    %342 = vst [vmem:[%s3 + $0x8] sm:$0xf] %v326
    %343 = vst [vmem:[%s3 + $0xc] sm:$0xf] %v327
    %344 = vst [vmem:[%s3 + $0x10] sm:$0xf] %v328
    %345 = vst [vmem:[%s3 + $0x14] sm:$0xf] %v329
    %346 = vst [vmem:[%s3 + $0x18] sm:$0xf] %v330
    %347 = vst [vmem:[%s3 + $0x1c] sm:$0xf] %v331
    %348 = vst [vmem:[%s3 + $0x20] sm:$0xf] %v332
    %349 = vst [vmem:[%s3 + $0x24] sm:$0xf] %v333
    %350 = vst [vmem:[%s3 + $0x28] sm:$0xf] %v334
    %351 = vst [vmem:[%s3 + $0x2c] sm:$0xf] %v335
    %352 = vst [vmem:[%s3 + $0x30] sm:$0xf] %v336
    %353 = vst [vmem:[%s3 + $0x34] sm:$0xf] %v337
    %354 = vst [vmem:[%s3 + $0x38] sm:$0xf] %v338
    %355 = vst [vmem:[%s3 + $0x3c] sm:$0xf] %v339
  $region21: #{cvae_forward.11} parent=0 // pred_fallthru
    _
  // Predicated region
  $region22: #{cvae_forward.11} parent=0 // pred_check
    _
  $region23: #{cvae_forward.11} parent=0 // pred_check_branch
    %357 = sbr.rel (0) target = $region25
  $region24: #{cvae_forward.11} parent=0 // pred_region
    _
  $region25: #{cvae_forward.11} parent=0 // pred_fallthru
    _
  // Predicated region
  $region26: #{cvae_forward.11} parent=0 // pred_check
    _
  $region27: #{cvae_forward.11} parent=0 // pred_check_branch
    %359 = sbr.rel (0) target = $region29
  $region28: #{cvae_forward.11} parent=0 // pred_region
    _
  $region29: #{cvae_forward.11} parent=0 // pred_fallthru
    _

// kernel: cvae_forward.12
$region0: #{cvae_forward.12}
  #allocation0 [shape = 'u32[]', space=smem, size = 0x4, offset = 0x4, fixed_abs, tag = 'smem constant byte address 0x4 - core index']
  #allocation1 [shape = 'u32[72,128]{1,0:T(1,128)}', space=vmem, size = 0x9000, scoped, tag = 'internal scratch']
  #allocation2 [shape = 'f32[32,128]{1,0:T(8,128)}', space=vmem, size = 0x4000, scoped, tag = 'scratch operand']
  %s0 = inlined_call_operand.vmem [shape: bf16[32,200], index: 0, kind: input, shape index: {}]
  %s1 = inlined_call_operand.vmem [shape: bf16[200,16], index: 1, kind: input, shape index: {}]
  %s2 = inlined_call_operand.vmem [shape: f32[1,16], index: 2, kind: input, shape index: {}]
  %s3 = inlined_call_operand.vmem [shape: bf16[32,16], index: 3, kind: output, shape index: {}]
  %s4 = sld [smem:[#allocation0]]
  $region30: #{cvae_forward.12} parent=0
    _
  %s6 = ssub.s32 1, %s4
  %s7 = scalar_select 0, %s6, %s4
  // Predicated region
  $region2: #{cvae_forward.12} parent=0 // pred_check
    _
  $region3: #{cvae_forward.12} parent=0 // pred_check_branch
    %9 = sbr.rel (0) target = $region5
  $region4: #{cvae_forward.12} parent=0 // pred_region
    _
  $region5: #{cvae_forward.12} parent=0 // pred_fallthru
    _
  // Predicated region
  $region6: #{cvae_forward.12} parent=0 // pred_check
    _
  $region7: #{cvae_forward.12} parent=0 // pred_check_branch
    %11 = sbr.rel (0) target = $region9
  $region8: #{cvae_forward.12} parent=0 // pred_region
    _
  $region9: #{cvae_forward.12} parent=0 // pred_fallthru
    _
  // Predicated region
  $region10: #{cvae_forward.12} parent=0 // pred_check
    _
  $region11: #{cvae_forward.12} parent=0 // pred_check_branch
    %13 = sbr.rel (0) target = $region13
  $region12: #{cvae_forward.12} parent=0 // pred_region
    _
  $region13: #{cvae_forward.12} parent=0 // pred_fallthru
    _
  %p15 = scmp.eq.s32.totalorder 0, 0
  // Predicated region
  $region14: #{cvae_forward.12} parent=0 // pred_check
    %p16 = pneg %p15
  $region15: #{cvae_forward.12} parent=0 // pred_check_branch
    %18 = sbr.rel (%p16) target = $region17
  $region16: #{cvae_forward.12} parent=0 // pred_region
    %19 = vst [vmem:[#allocation2] sm:$0xff] 0.0
    %20 = vst [vmem:[#allocation2 + $0x8] sm:$0xff] 0.0
    %21 = vst [vmem:[#allocation2 + $0x10] sm:$0xff] 0.0
    %22 = vst [vmem:[#allocation2 + $0x18] sm:$0xff] 0.0
  $region17: #{cvae_forward.12} parent=0 // pred_fallthru
    _
  %v23 = vld [vmem:[#allocation2] sm:$0xff]
  %v24 = vld [vmem:[#allocation2 + $0x8] sm:$0xff]
  %v25 = vld [vmem:[#allocation2 + $0x10] sm:$0xff]
  %v26 = vld [vmem:[#allocation2 + $0x18] sm:$0xff]
  %v27 = vld [vmem:[%s0] sm:$0xff]
  %v28 = vld [vmem:[%s0 + $0x8] sm:$0xff]
  %v29 = vld [vmem:[%s0 + $0x10] sm:$0xff]
  %v30 = vld [vmem:[%s0 + $0x18] sm:$0xff]
  %v31 = vld [vmem:[%s1] sm:$0xf]
  %v32 = vld [vmem:[%s1 + $0x4] sm:$0xf]
  %v33 = vld [vmem:[%s1 + $0x8] sm:$0xf]
  %v34 = vld [vmem:[%s1 + $0xc] sm:$0xf]
  %v35 = vld [vmem:[%s1 + $0x10] sm:$0xf]
  %v36 = vld [vmem:[%s1 + $0x14] sm:$0xf]
  %v37 = vld [vmem:[%s1 + $0x18] sm:$0xf]
  %v38 = vld [vmem:[%s1 + $0x1c] sm:$0xf]
  %v39 = vld [vmem:[%s1 + $0x20] sm:$0xf]
  %v40 = vld [vmem:[%s1 + $0x24] sm:$0xf]
  %v41 = vld [vmem:[%s1 + $0x28] sm:$0xf]
  %v42 = vld [vmem:[%s1 + $0x2c] sm:$0xf]
  %v43 = vld [vmem:[%s1 + $0x30] sm:$0xf]
  %v44 = vld [vmem:[%s1 + $0x34] sm:$0xf]
  %v45 = vld [vmem:[%s1 + $0x38] sm:$0xf]
  %v46 = vld [vmem:[%s1 + $0x3c] sm:$0xf]
  %v47 = vld [vmem:[%s1 + $0x40] sm:$0xf]
  %v48 = vld [vmem:[%s1 + $0x44] sm:$0xf]
  %v49 = vld [vmem:[%s1 + $0x48] sm:$0xf]
  %v50 = vld [vmem:[%s1 + $0x4c] sm:$0xf]
  %v51 = vld [vmem:[%s1 + $0x50] sm:$0xf]
  %v52 = vld [vmem:[%s1 + $0x54] sm:$0xf]
  %v53 = vld [vmem:[%s1 + $0x58] sm:$0xf]
  %v54 = vld [vmem:[%s1 + $0x5c] sm:$0xf]
  %v55 = vld [vmem:[%s1 + $0x60] sm:$0xf]
  %v60 = vunpack.c.l.b16 %v27
  %v61 = vunpack.c.h.b16 %v27
  %v62 = vunpack.c.l.b16 %v28
  %v63 = vunpack.c.h.b16 %v28
  %v64 = vunpack.c.l.b16 %v29
  %v65 = vunpack.c.h.b16 %v29
  %v66 = vunpack.c.l.b16 %v30
  %v67 = vunpack.c.h.b16 %v30
  %v68 = vpack.c.b16 %v62, %v60
  %v69 = vpack.c.b16 %v63, %v61
  %v70 = vpack.c.b16 %v66, %v64
  %v71 = vpack.c.b16 %v67, %v65
  %v99 = vunpack.c.l.b16 %v31
  %v100 = vunpack.c.l.b16 %v32
  %v101 = vunpack.c.l.b16 %v33
  %v102 = vunpack.c.l.b16 %v34
  %v103 = vunpack.c.l.b16 %v35
  %v104 = vunpack.c.l.b16 %v36
  %v105 = vunpack.c.l.b16 %v37
  %v106 = vunpack.c.l.b16 %v38
  %v107 = vunpack.c.l.b16 %v39
  %v108 = vunpack.c.l.b16 %v40
  %v109 = vunpack.c.l.b16 %v41
  %v110 = vunpack.c.l.b16 %v42
  %v111 = vunpack.c.l.b16 %v43
  %v112 = vunpack.c.l.b16 %v44
  %v113 = vunpack.c.l.b16 %v45
  %v114 = vunpack.c.l.b16 %v46
  %v115 = vunpack.c.l.b16 %v47
  %v116 = vunpack.c.l.b16 %v48
  %v117 = vunpack.c.l.b16 %v49
  %v118 = vunpack.c.l.b16 %v50
  %v119 = vunpack.c.l.b16 %v51
  %v120 = vunpack.c.l.b16 %v52
  %v121 = vunpack.c.l.b16 %v53
  %v122 = vunpack.c.l.b16 %v54
  %v123 = vunpack.c.l.b16 %v55
  %v124 = vpack.c.b16 %v100, %v99
  %v125 = vpack.c.b16 %v102, %v101
  %v126 = vpack.c.b16 %v104, %v103
  %v127 = vpack.c.b16 %v106, %v105
  %v128 = vpack.c.b16 %v108, %v107
  %v129 = vpack.c.b16 %v110, %v109
  %v130 = vpack.c.b16 %v112, %v111
  %v131 = vpack.c.b16 %v114, %v113
  %v132 = vpack.c.b16 %v116, %v115
  %v133 = vpack.c.b16 %v118, %v117
  %v134 = vpack.c.b16 %v120, %v119
  %v135 = vpack.c.b16 %v122, %v121
  %v136 = vpack.c.b16 %v123, %v123
  %vm149 = vcmask 588800
  %v151 = vsel %vm149, %v69, 0
  %v154 = vsel %vm149, %v71, 0
  %vm156 = vcmask 1043456
  %v158 = vsel %vm156, %v136, 0
  %160 = vmatpush.bf16.msra.mxu0 %v131
  %161 = vmatpush.bf16.msra.mxu0 %v130
  %162 = vmatpush.bf16.msra.mxu0 %v129
  %163 = vmatpush.bf16.msra.mxu0 %v128
  %164 = vmatpush.bf16.msra.mxu0 %v127
  %165 = vmatpush.bf16.msra.mxu0 %v126
  %166 = vmatpush.bf16.msra.mxu0 %v125
  %167 = vmatpush.bf16.msra.mxu0 %v124
  %168 = vmatmul.bf16.gmra.mxu0 %v68
  %v169 = vpop.f32.mrf.mxu0
  %v170 = vadd.f32 0.0, %v169
  %v171 = vpop.f32.mrf.mxu0
  %v172 = vadd.f32 0.0, %v171
  %173 = vmatmul.bf16.gmra.mxu0 %v70
  %v174 = vpop.f32.mrf.mxu0
  %v175 = vadd.f32 0.0, %v174
  %v176 = vpop.f32.mrf.mxu0
  %v177 = vadd.f32 0.0, %v176
  %178 = vdwg.mxu0
  %179 = vmatpush.bf16.msra.mxu0 0
  %180 = vmatpush.bf16.msra.mxu0 0
  %181 = vmatpush.bf16.msra.mxu0 0
  %182 = vmatpush.bf16.msra.mxu0 %v158
  %183 = vmatpush.bf16.msra.mxu0 %v135
  %184 = vmatpush.bf16.msra.mxu0 %v134
  %185 = vmatpush.bf16.msra.mxu0 %v133
  %186 = vmatpush.bf16.msra.mxu0 %v132
  %187 = vmatmul.bf16.gmra.mxu0 %v151
  %v188 = vpop.f32.mrf.mxu0
  %v189 = vadd.f32 %v170, %v188
  %v190 = vpop.f32.mrf.mxu0
  %v191 = vadd.f32 %v172, %v190
  %192 = vmatmul.bf16.gmra.mxu0 %v154
  %v193 = vpop.f32.mrf.mxu0
  %v194 = vadd.f32 %v175, %v193
  %v195 = vpop.f32.mrf.mxu0
  %v196 = vadd.f32 %v177, %v195
  %197 = vdwg.mxu0
  %v198 = vadd.f32 %v23, %v189
  %v199 = vadd.f32 %v24, %v191
  %v200 = vadd.f32 %v25, %v194
  %v201 = vadd.f32 %v26, %v196
  %202 = vst [vmem:[#allocation2] sm:$0xff] %v198
  %203 = vst [vmem:[#allocation2 + $0x8] sm:$0xff] %v199
  %204 = vst [vmem:[#allocation2 + $0x10] sm:$0xff] %v200
  %205 = vst [vmem:[#allocation2 + $0x18] sm:$0xff] %v201
  // Predicated region
  $region18: #{cvae_forward.12} parent=0 // pred_check
    %p206 = pneg %p15
  $region19: #{cvae_forward.12} parent=0 // pred_check_branch
    %208 = sbr.rel (%p206) target = $region21
  $region20: #{cvae_forward.12} parent=0 // pred_region
    %v209 = vld [vmem:[#allocation2] sm:$0xff]
    %v210 = vld [vmem:[#allocation2 + $0x8] sm:$0xff]
    %v211 = vld [vmem:[#allocation2 + $0x10] sm:$0xff]
    %v212 = vld [vmem:[#allocation2 + $0x18] sm:$0xff]
    %v213 = vld [vmem:[%s2] sm:$0x1]
    %v215 = vperm.slane %v213, 0
    %v217 = vadd.f32 %v209, %v215
    %v218 = vadd.f32 %v210, %v215
    %v219 = vadd.f32 %v211, %v215
    %v220 = vadd.f32 %v212, %v215
    %v221 = vmax.f32 %v217, 0.0
    %v222 = vmax.f32 %v218, 0.0
    %v223 = vmax.f32 %v219, 0.0
    %v224 = vmax.f32 %v220, 0.0
    %v225 = vpack.c.bf16 %v221, %v221
    %v226 = vpack.c.bf16 %v222, %v222
    %v227 = vpack.c.bf16 %v223, %v223
    %v228 = vpack.c.bf16 %v224, %v224
    %229 = vst [vmem:[%s3] sm:$0xf] %v225
    %230 = vst [vmem:[%s3 + $0x4] sm:$0xf] %v226
    %231 = vst [vmem:[%s3 + $0x8] sm:$0xf] %v227
    %232 = vst [vmem:[%s3 + $0xc] sm:$0xf] %v228
  $region21: #{cvae_forward.12} parent=0 // pred_fallthru
    _
  // Predicated region
  $region22: #{cvae_forward.12} parent=0 // pred_check
    _
  $region23: #{cvae_forward.12} parent=0 // pred_check_branch
    %234 = sbr.rel (0) target = $region25
  $region24: #{cvae_forward.12} parent=0 // pred_region
    _
  $region25: #{cvae_forward.12} parent=0 // pred_fallthru
    _
  // Predicated region
  $region26: #{cvae_forward.12} parent=0 // pred_check
    _
  $region27: #{cvae_forward.12} parent=0 // pred_check_branch
    %236 = sbr.rel (0) target = $region29
  $region28: #{cvae_forward.12} parent=0 // pred_region
    _
  $region29: #{cvae_forward.12} parent=0 // pred_fallthru
    _

// kernel: cvae_forward.14
$region0: #{cvae_forward.14}
  #allocation0 [shape = 'u32[]', space=smem, size = 0x4, offset = 0x4, fixed_abs, tag = 'smem constant byte address 0x4 - core index']
  #allocation1 [shape = 'u32[72,128]{1,0:T(1,128)}', space=vmem, size = 0x9000, scoped, tag = 'internal scratch']
  #allocation2 [shape = 'f32[16,128]{1,0:T(8,128)}', space=vmem, size = 0x2000, scoped, tag = 'scratch operand']
  %s0 = inlined_call_operand.vmem [shape: bf16[2,128], index: 0, kind: input, shape index: {}]
  %s1 = inlined_call_operand.vmem [shape: bf16[128,34], index: 1, kind: input, shape index: {}]
  %s2 = inlined_call_operand.vmem [shape: f32[1,34], index: 2, kind: input, shape index: {}]
  %s3 = inlined_call_operand.vmem [shape: f32[2,34], index: 3, kind: output, shape index: {}]
  %s4 = sld [smem:[#allocation0]]
  $region60: #{cvae_forward.14} parent=0
    _
  %s6 = ssub.s32 1, %s4
  %s7 = scalar_select 0, %s6, %s4
  $region1: #{cvae_forward.14} parent=0
    #allocation3 [shape = 'u8[8192]{0}', space=vmem, size = 0x2000, scoped, tag = 'output window, operand 0, single buffered']
    // Predicated region
    $region2: #{cvae_forward.14} parent=1 // pred_check
      _
    $region3: #{cvae_forward.14} parent=1 // pred_check_branch
      %9 = sbr.rel (0) target = $region5
    $region4: #{cvae_forward.14} parent=1 // pred_region
      _
    $region5: #{cvae_forward.14} parent=1 // pred_fallthru
      _
    // Predicated region
    $region6: #{cvae_forward.14} parent=1 // pred_check
      _
    $region7: #{cvae_forward.14} parent=1 // pred_check_branch
      %11 = sbr.rel (0) target = $region9
    $region8: #{cvae_forward.14} parent=1 // pred_region
      _
    $region9: #{cvae_forward.14} parent=1 // pred_fallthru
      _
    // Predicated region
    $region10: #{cvae_forward.14} parent=1 // pred_check
      _
    $region11: #{cvae_forward.14} parent=1 // pred_check_branch
      %13 = sbr.rel (0) target = $region13
    $region12: #{cvae_forward.14} parent=1 // pred_region
      _
    $region13: #{cvae_forward.14} parent=1 // pred_fallthru
      _
    %p14 = scmp.eq.s32.totalorder 0, 0
    // Predicated region
    $region14: #{cvae_forward.14} parent=1 // pred_check
      %p15 = pneg %p14
    $region15: #{cvae_forward.14} parent=1 // pred_check_branch
      %17 = sbr.rel (%p15) target = $region17
    $region16: #{cvae_forward.14} parent=1 // pred_region
      %18 = vst [vmem:[#allocation2] sm:$0xff] 0.0
      %19 = vst [vmem:[#allocation2 + $0x8] sm:$0xff] 0.0
    $region17: #{cvae_forward.14} parent=1 // pred_fallthru
      _
    %v20 = vld [vmem:[#allocation2] sm:$0xff]
    %v21 = vld [vmem:[#allocation2 + $0x8] sm:$0xff]
    %v22 = vld [vmem:[%s0] sm:$0x1]
    %v23 = vld [vmem:[%s0 + $0x1] sm:$0x1]
    %v24 = vld [vmem:[%s0 + $0x2] sm:$0x1]
    %v25 = vld [vmem:[%s0 + $0x3] sm:$0x1]
    %v26 = vld [vmem:[%s0 + $0x4] sm:$0x1]
    %v27 = vld [vmem:[%s0 + $0x5] sm:$0x1]
    %v28 = vld [vmem:[%s0 + $0x6] sm:$0x1]
    %v29 = vld [vmem:[%s0 + $0x7] sm:$0x1]
    %v30 = vld [vmem:[%s1] sm:$0xf]
    %v31 = vld [vmem:[%s1 + $0x4] sm:$0xf]
    %v32 = vld [vmem:[%s1 + $0x8] sm:$0xf]
    %v33 = vld [vmem:[%s1 + $0xc] sm:$0xf]
    %v34 = vld [vmem:[%s1 + $0x10] sm:$0xf]
    %v35 = vld [vmem:[%s1 + $0x14] sm:$0xf]
    %v36 = vld [vmem:[%s1 + $0x18] sm:$0xf]
    %v37 = vld [vmem:[%s1 + $0x1c] sm:$0xf]
    %v38 = vld [vmem:[%s1 + $0x20] sm:$0xf]
    %v39 = vld [vmem:[%s1 + $0x24] sm:$0xf]
    %v40 = vld [vmem:[%s1 + $0x28] sm:$0xf]
    %v41 = vld [vmem:[%s1 + $0x2c] sm:$0xf]
    %v42 = vld [vmem:[%s1 + $0x30] sm:$0xf]
    %v43 = vld [vmem:[%s1 + $0x34] sm:$0xf]
    %v44 = vld [vmem:[%s1 + $0x38] sm:$0xf]
    %v45 = vld [vmem:[%s1 + $0x3c] sm:$0xf]
    %47 = vst [vmem:[#allocation1] ss:$9 sm:$0xff] %v22
    %s49 = scalar_lea.vmem [#allocation1], 1
    %50 = vst [vmem:[%s49] ss:$9 sm:$0xff] %v23
    %s52 = scalar_lea.vmem [#allocation1], 2
    %53 = vst [vmem:[%s52] ss:$9 sm:$0xff] %v24
    %s55 = scalar_lea.vmem [#allocation1], 3
    %56 = vst [vmem:[%s55] ss:$9 sm:$0xff] %v25
    %s58 = scalar_lea.vmem [#allocation1], 4
    %59 = vst [vmem:[%s58] ss:$9 sm:$0xff] %v26
    %s61 = scalar_lea.vmem [#allocation1], 5
    %62 = vst [vmem:[%s61] ss:$9 sm:$0xff] %v27
    %s64 = scalar_lea.vmem [#allocation1], 6
    %65 = vst [vmem:[%s64] ss:$9 sm:$0xff] %v28
    %s67 = scalar_lea.vmem [#allocation1], 7
    %68 = vst [vmem:[%s67] ss:$9 sm:$0xff] %v29
    %v69 = vld [vmem:[#allocation1] sm:$0xff]
    %v87 = vunpack.c.l.b16 %v30
    %v88 = vunpack.c.l.b16 %v31
    %v89 = vunpack.c.l.b16 %v32
    %v90 = vunpack.c.l.b16 %v33
    %v91 = vunpack.c.l.b16 %v34
    %v92 = vunpack.c.l.b16 %v35
    %v93 = vunpack.c.l.b16 %v36
    %v94 = vunpack.c.l.b16 %v37
    %v95 = vunpack.c.l.b16 %v38
    %v96 = vunpack.c.l.b16 %v39
    %v97 = vunpack.c.l.b16 %v40
    %v98 = vunpack.c.l.b16 %v41
    %v99 = vunpack.c.l.b16 %v42
    %v100 = vunpack.c.l.b16 %v43
    %v101 = vunpack.c.l.b16 %v44
    %v102 = vunpack.c.l.b16 %v45
    %v103 = vpack.c.b16 %v88, %v87
    %v104 = vpack.c.b16 %v90, %v89
    %v105 = vpack.c.b16 %v92, %v91
    %v106 = vpack.c.b16 %v94, %v93
    %v107 = vpack.c.b16 %v96, %v95
    %v108 = vpack.c.b16 %v98, %v97
    %v109 = vpack.c.b16 %v100, %v99
    %v110 = vpack.c.b16 %v102, %v101
    %119 = vmatpush.bf16.msra.mxu0 %v110
    %120 = vmatpush.bf16.msra.mxu0 %v109
    %121 = vmatpush.bf16.msra.mxu0 %v108
    %122 = vmatpush.bf16.msra.mxu0 %v107
    %123 = vmatpush.bf16.msra.mxu0 %v106
    %124 = vmatpush.bf16.msra.mxu0 %v105
    %125 = vmatpush.bf16.msra.mxu0 %v104
    %126 = vmatpush.bf16.msra.mxu0 %v103
    %127 = vmatmul.bf16.gmra.mxu0 %v69
    %v128 = vpop.f32.mrf.mxu0
    %v129 = vadd.f32 0.0, %v128
    %v130 = vpop.f32.mrf.mxu0
    %v131 = vadd.f32 0.0, %v130
    %132 = vdwg.mxu0
    %v133 = vadd.f32 %v20, %v129
    %v134 = vadd.f32 %v21, %v131
    %135 = vst [vmem:[#allocation2] sm:$0xff] %v133
    %136 = vst [vmem:[#allocation2 + $0x8] sm:$0xff] %v134
    // Predicated region
    $region18: #{cvae_forward.14} parent=1 // pred_check
      %p137 = pneg %p14
    $region19: #{cvae_forward.14} parent=1 // pred_check_branch
      %139 = sbr.rel (%p137) target = $region21
    $region20: #{cvae_forward.14} parent=1 // pred_region
      %v140 = vld [vmem:[#allocation2] sm:$0xff]
      %v141 = vld [vmem:[#allocation2 + $0x8] sm:$0xff]
      %v142 = vld [vmem:[%s2] sm:$0x1]
      %v144 = vperm.slane %v142, 0
      %v146 = vadd.f32 %v140, %v144
      %v147 = vadd.f32 %v141, %v144
      %148 = vst [vmem:[#allocation3] sm:$0xff] %v146
      %149 = vst [vmem:[#allocation3 + $0x8] sm:$0xff] %v147
    $region21: #{cvae_forward.14} parent=1 // pred_fallthru
      _
    // Predicated region
    $region22: #{cvae_forward.14} parent=1 // pred_check
      _
    $region23: #{cvae_forward.14} parent=1 // pred_check_branch
      %151 = sbr.rel (0) target = $region25
    $region24: #{cvae_forward.14} parent=1 // pred_region
      // Predicated region
      $region26: #{cvae_forward.14} parent=24 // pred_check
        _
      $region27: #{cvae_forward.14} parent=24 // pred_check_branch
        %153 = sbr.rel (0) target = $region29
      $region28: #{cvae_forward.14} parent=24 // pred_region
        // Predicated region
        $region30: #{cvae_forward.14} parent=28 // pred_check
          _
        $region31: #{cvae_forward.14} parent=28 // pred_check_branch
          %155 = sbr.rel target = $region33
        $region32: #{cvae_forward.14} parent=28 // pred_region
          // Predicated region
          $region45: #{cvae_forward.14} parent=32 // pred_check
            _
          $region46: #{cvae_forward.14} parent=32 // pred_check_branch
            %171 = sbr.rel (0) target = $region48
          $region47: #{cvae_forward.14} parent=32 // pred_region
            %s173 = ssub.s32 4, 1
            loop: start=0, step=1, limit=1
            $region49: #{cvae_forward.14} parent=47 // loop_pre_header
              _
            $region50: #{cvae_forward.14} parent=47 // loop_header
              %s175 = sphi 0, %s179
              %p176 = scmp.ge.s32.totalorder %s175, 1
              %s180 = sphi [#allocation3], [#allocation3]
              %s181 = sphi %s3, %s3
            $region51: #{cvae_forward.14} parent=47 // loop_header_branch
              %178 = sbr.rel (%p176) target = $region55
            $region52: #{cvae_forward.14} parent=47 // loop_body
              %v182 = vld [vmem:[%s180] sm:%s173]
              %183 = vst [vmem:[%s181] sm:%s173] %v182
            $region53: #{cvae_forward.14} parent=47 // loop_footer
              %s179 = sadd.s32 1, %s175
            $region54: #{cvae_forward.14} parent=47 // loop_footer_branch
              %174 = sbr.rel target = $region50
            $region55: #{cvae_forward.14} parent=47 // loop_exit
              _
          $region48: #{cvae_forward.14} parent=32 // pred_fallthru
            _
        $region33: #{cvae_forward.14} parent=28 // pred_fallthru
          _
        // Predicated region
        $region34: #{cvae_forward.14} parent=28 // pred_check
          _
        $region35: #{cvae_forward.14} parent=28 // pred_check_branch
          %157 = sbr.rel (0) target = $region37
        $region36: #{cvae_forward.14} parent=28 // pred_region
          %s159 = ssub.s32 4, 1
          loop: start=0, step=1, limit=1
          $region38: #{cvae_forward.14} parent=36 // loop_pre_header
            _
          $region39: #{cvae_forward.14} parent=36 // loop_header
            %s161 = sphi 0, %s165
            %p162 = scmp.ge.s32.totalorder %s161, 1
            %s166 = sphi [#allocation3], [#allocation3]
            %s167 = sphi %s3, %s3
          $region40: #{cvae_forward.14} parent=36 // loop_header_branch
            %164 = sbr.rel (%p162) target = $region44
          $region41: #{cvae_forward.14} parent=36 // loop_body
            %v168 = vld [vmem:[%s166] sm:%s159]
            %169 = vst [vmem:[%s167] sm:%s159] %v168
          $region42: #{cvae_forward.14} parent=36 // loop_footer
            %s165 = sadd.s32 1, %s161
          $region43: #{cvae_forward.14} parent=36 // loop_footer_branch
            %160 = sbr.rel target = $region39
          $region44: #{cvae_forward.14} parent=36 // loop_exit
            _
        $region37: #{cvae_forward.14} parent=28 // pred_fallthru
          _
      $region29: #{cvae_forward.14} parent=24 // pred_fallthru
        _
      %184 = vnop
    $region25: #{cvae_forward.14} parent=1 // pred_fallthru
      _
    // Predicated region
    $region56: #{cvae_forward.14} parent=1 // pred_check
      _
    $region57: #{cvae_forward.14} parent=1 // pred_check_branch
      %186 = sbr.rel (0) target = $region59
    $region58: #{cvae_forward.14} parent=1 // pred_region
      _
    $region59: #{cvae_forward.14} parent=1 // pred_fallthru
      _

// kernel: cvae_forward.13
$region0: #{cvae_forward.13}
  #allocation0 [shape = 'u32[]', space=smem, size = 0x4, offset = 0x4, fixed_abs, tag = 'smem constant byte address 0x4 - core index']
  #allocation1 [shape = 'u32[72,128]{1,0:T(1,128)}', space=vmem, size = 0x9000, scoped, tag = 'internal scratch']
  #allocation2 [shape = 'f32[16,128]{1,0:T(8,128)}', space=vmem, size = 0x2000, scoped, tag = 'scratch operand']
  %s0 = inlined_call_operand.vmem [shape: bf16[8,400], index: 0, kind: input, shape index: {}]
  %s1 = inlined_call_operand.vmem [shape: bf16[400,32], index: 1, kind: input, shape index: {}]
  %s2 = inlined_call_operand.vmem [shape: f32[1,32], index: 2, kind: input, shape index: {}]
  %s3 = inlined_call_operand.vmem [shape: bf16[8,32], index: 3, kind: output, shape index: {}]
  %s4 = sld [smem:[#allocation0]]
  $region60: #{cvae_forward.13} parent=0
    _
  %s6 = ssub.s32 1, %s4
  %s7 = scalar_select 0, %s6, %s4
  $region1: #{cvae_forward.13} parent=0
    #allocation3 [shape = 'u8[4096]{0}', space=vmem, size = 0x1000, scoped, tag = 'output window, operand 0, single buffered']
    // Predicated region
    $region2: #{cvae_forward.13} parent=1 // pred_check
      _
    $region3: #{cvae_forward.13} parent=1 // pred_check_branch
      %9 = sbr.rel (0) target = $region5
    $region4: #{cvae_forward.13} parent=1 // pred_region
      _
    $region5: #{cvae_forward.13} parent=1 // pred_fallthru
      _
    // Predicated region
    $region6: #{cvae_forward.13} parent=1 // pred_check
      _
    $region7: #{cvae_forward.13} parent=1 // pred_check_branch
      %11 = sbr.rel (0) target = $region9
    $region8: #{cvae_forward.13} parent=1 // pred_region
      _
    $region9: #{cvae_forward.13} parent=1 // pred_fallthru
      _
    // Predicated region
    $region10: #{cvae_forward.13} parent=1 // pred_check
      _
    $region11: #{cvae_forward.13} parent=1 // pred_check_branch
      %13 = sbr.rel (0) target = $region13
    $region12: #{cvae_forward.13} parent=1 // pred_region
      _
    $region13: #{cvae_forward.13} parent=1 // pred_fallthru
      _
    %p15 = scmp.eq.s32.totalorder 0, 0
    // Predicated region
    $region14: #{cvae_forward.13} parent=1 // pred_check
      %p16 = pneg %p15
    $region15: #{cvae_forward.13} parent=1 // pred_check_branch
      %18 = sbr.rel (%p16) target = $region17
    $region16: #{cvae_forward.13} parent=1 // pred_region
      %19 = vst [vmem:[#allocation2] sm:$0xff] 0.0
      %20 = vst [vmem:[#allocation2 + $0x8] sm:$0xff] 0.0
    $region17: #{cvae_forward.13} parent=1 // pred_fallthru
      _
    %v21 = vld [vmem:[#allocation2] sm:$0xff]
    %v22 = vld [vmem:[#allocation2 + $0x8] sm:$0xff]
    %v23 = vld [vmem:[%s0] sm:$0xff]
    %v24 = vld [vmem:[%s0 + $0x8] sm:$0xff]
    %v25 = vld [vmem:[%s0 + $0x10] sm:$0xff]
    %v26 = vld [vmem:[%s0 + $0x18] sm:$0xff]
    %v27 = vld [vmem:[%s1] sm:$0xf]
    %v28 = vld [vmem:[%s1 + $0x4] sm:$0xf]
    %v29 = vld [vmem:[%s1 + $0x8] sm:$0xf]
    %v30 = vld [vmem:[%s1 + $0xc] sm:$0xf]
    %v31 = vld [vmem:[%s1 + $0x10] sm:$0xf]
    %v32 = vld [vmem:[%s1 + $0x14] sm:$0xf]
    %v33 = vld [vmem:[%s1 + $0x18] sm:$0xf]
    %v34 = vld [vmem:[%s1 + $0x1c] sm:$0xf]
    %v35 = vld [vmem:[%s1 + $0x20] sm:$0xf]
    %v36 = vld [vmem:[%s1 + $0x24] sm:$0xf]
    %v37 = vld [vmem:[%s1 + $0x28] sm:$0xf]
    %v38 = vld [vmem:[%s1 + $0x2c] sm:$0xf]
    %v39 = vld [vmem:[%s1 + $0x30] sm:$0xf]
    %v40 = vld [vmem:[%s1 + $0x34] sm:$0xf]
    %v41 = vld [vmem:[%s1 + $0x38] sm:$0xf]
    %v42 = vld [vmem:[%s1 + $0x3c] sm:$0xf]
    %v43 = vld [vmem:[%s1 + $0x40] sm:$0xf]
    %v44 = vld [vmem:[%s1 + $0x44] sm:$0xf]
    %v45 = vld [vmem:[%s1 + $0x48] sm:$0xf]
    %v46 = vld [vmem:[%s1 + $0x4c] sm:$0xf]
    %v47 = vld [vmem:[%s1 + $0x50] sm:$0xf]
    %v48 = vld [vmem:[%s1 + $0x54] sm:$0xf]
    %v49 = vld [vmem:[%s1 + $0x58] sm:$0xf]
    %v50 = vld [vmem:[%s1 + $0x5c] sm:$0xf]
    %v51 = vld [vmem:[%s1 + $0x60] sm:$0xf]
    %v52 = vld [vmem:[%s1 + $0x64] sm:$0xf]
    %v53 = vld [vmem:[%s1 + $0x68] sm:$0xf]
    %v54 = vld [vmem:[%s1 + $0x6c] sm:$0xf]
    %v55 = vld [vmem:[%s1 + $0x70] sm:$0xf]
    %v56 = vld [vmem:[%s1 + $0x74] sm:$0xf]
    %v57 = vld [vmem:[%s1 + $0x78] sm:$0xf]
    %v58 = vld [vmem:[%s1 + $0x7c] sm:$0xf]
    %v59 = vld [vmem:[%s1 + $0x80] sm:$0xf]
    %v60 = vld [vmem:[%s1 + $0x84] sm:$0xf]
    %v61 = vld [vmem:[%s1 + $0x88] sm:$0xf]
    %v62 = vld [vmem:[%s1 + $0x8c] sm:$0xf]
    %v63 = vld [vmem:[%s1 + $0x90] sm:$0xf]
    %v64 = vld [vmem:[%s1 + $0x94] sm:$0xf]
    %v65 = vld [vmem:[%s1 + $0x98] sm:$0xf]
    %v66 = vld [vmem:[%s1 + $0x9c] sm:$0xf]
    %v67 = vld [vmem:[%s1 + $0xa0] sm:$0xf]
    %v68 = vld [vmem:[%s1 + $0xa4] sm:$0xf]
    %v69 = vld [vmem:[%s1 + $0xa8] sm:$0xf]
    %v70 = vld [vmem:[%s1 + $0xac] sm:$0xf]
    %v71 = vld [vmem:[%s1 + $0xb0] sm:$0xf]
    %v72 = vld [vmem:[%s1 + $0xb4] sm:$0xf]
    %v73 = vld [vmem:[%s1 + $0xb8] sm:$0xf]
    %v74 = vld [vmem:[%s1 + $0xbc] sm:$0xf]
    %v75 = vld [vmem:[%s1 + $0xc0] sm:$0xf]
    %v76 = vld [vmem:[%s1 + $0xc4] sm:$0xf]
    %v81 = vunpack.c.l.b16 %v23
    %v82 = vunpack.c.h.b16 %v23
    %v83 = vunpack.c.l.b16 %v24
    %v84 = vunpack.c.h.b16 %v24
    %v85 = vunpack.c.l.b16 %v25
    %v86 = vunpack.c.h.b16 %v25
    %v87 = vunpack.c.l.b16 %v26
    %v88 = vunpack.c.h.b16 %v26
    %v89 = vpack.c.b16 %v85, %v81
    %v90 = vpack.c.b16 %v86, %v82
    %v91 = vpack.c.b16 %v87, %v83
    %v92 = vpack.c.b16 %v88, %v84
    %v146 = vunpack.c.l.b16 %v27
    %v147 = vunpack.c.l.b16 %v28
    %v148 = vunpack.c.l.b16 %v29
    %v149 = vunpack.c.l.b16 %v30
    %v150 = vunpack.c.l.b16 %v31
    %v151 = vunpack.c.l.b16 %v32
    %v152 = vunpack.c.l.b16 %v33
    %v153 = vunpack.c.l.b16 %v34
    %v154 = vunpack.c.l.b16 %v35
    %v155 = vunpack.c.l.b16 %v36
    %v156 = vunpack.c.l.b16 %v37
    %v157 = vunpack.c.l.b16 %v38
    %v158 = vunpack.c.l.b16 %v39
    %v159 = vunpack.c.l.b16 %v40
    %v160 = vunpack.c.l.b16 %v41
    %v161 = vunpack.c.l.b16 %v42
    %v162 = vunpack.c.l.b16 %v43
    %v163 = vunpack.c.l.b16 %v44
    %v164 = vunpack.c.l.b16 %v45
    %v165 = vunpack.c.l.b16 %v46
    %v166 = vunpack.c.l.b16 %v47
    %v167 = vunpack.c.l.b16 %v48
    %v168 = vunpack.c.l.b16 %v49
    %v169 = vunpack.c.l.b16 %v50
    %v170 = vunpack.c.l.b16 %v51
    %v171 = vunpack.c.l.b16 %v52
    %v172 = vunpack.c.l.b16 %v53
    %v173 = vunpack.c.l.b16 %v54
    %v174 = vunpack.c.l.b16 %v55
    %v175 = vunpack.c.l.b16 %v56
    %v176 = vunpack.c.l.b16 %v57
    %v177 = vunpack.c.l.b16 %v58
    %v178 = vunpack.c.l.b16 %v59
    %v179 = vunpack.c.l.b16 %v60
    %v180 = vunpack.c.l.b16 %v61
    %v181 = vunpack.c.l.b16 %v62
    %v182 = vunpack.c.l.b16 %v63
    %v183 = vunpack.c.l.b16 %v64
    %v184 = vunpack.c.l.b16 %v65
    %v185 = vunpack.c.l.b16 %v66
    %v186 = vunpack.c.l.b16 %v67
    %v187 = vunpack.c.l.b16 %v68
    %v188 = vunpack.c.l.b16 %v69
    %v189 = vunpack.c.l.b16 %v70
    %v190 = vunpack.c.l.b16 %v71
    %v191 = vunpack.c.l.b16 %v72
    %v192 = vunpack.c.l.b16 %v73
    %v193 = vunpack.c.l.b16 %v74
    %v194 = vunpack.c.l.b16 %v75
    %v195 = vunpack.c.l.b16 %v76
    %v196 = vpack.c.b16 %v147, %v146
    %v197 = vpack.c.b16 %v149, %v148
    %v198 = vpack.c.b16 %v151, %v150
    %v199 = vpack.c.b16 %v153, %v152
    %v200 = vpack.c.b16 %v155, %v154
    %v201 = vpack.c.b16 %v157, %v156
    %v202 = vpack.c.b16 %v159, %v158
    %v203 = vpack.c.b16 %v161, %v160
    %v204 = vpack.c.b16 %v163, %v162
    %v205 = vpack.c.b16 %v165, %v164
    %v206 = vpack.c.b16 %v167, %v166
    %v207 = vpack.c.b16 %v169, %v168
    %v208 = vpack.c.b16 %v171, %v170
    %v209 = vpack.c.b16 %v173, %v172
    %v210 = vpack.c.b16 %v175, %v174
    %v211 = vpack.c.b16 %v177, %v176
    %v212 = vpack.c.b16 %v179, %v178
    %v213 = vpack.c.b16 %v181, %v180
    %v214 = vpack.c.b16 %v183, %v182
    %v215 = vpack.c.b16 %v185, %v184
    %v216 = vpack.c.b16 %v187, %v186
    %v217 = vpack.c.b16 %v189, %v188
    %v218 = vpack.c.b16 %v191, %v190
    %v219 = vpack.c.b16 %v193, %v192
    %v220 = vpack.c.b16 %v195, %v194
    %vm246 = vcmask 130048
    %v248 = vsel %vm246, %v92, 0
    %250 = vmatpush.bf16.msra.mxu0 %v203
    %251 = vmatpush.bf16.msra.mxu0 %v202
    %252 = vmatpush.bf16.msra.mxu0 %v201
    %253 = vmatpush.bf16.msra.mxu0 %v200
    %254 = vmatpush.bf16.msra.mxu0 %v199
    %255 = vmatpush.bf16.msra.mxu0 %v198
    %256 = vmatpush.bf16.msra.mxu0 %v197
    %257 = vmatpush.bf16.msra.mxu0 %v196
    %258 = vmatmul.bf16.gmra.mxu0 %v89
    %v259 = vpop.f32.mrf.mxu0
    %v260 = vadd.f32 0.0, %v259
    %v261 = vpop.f32.mrf.mxu0
    %v262 = vadd.f32 0.0, %v261
    %263 = vdwg.mxu0
    %264 = vmatpush.bf16.msra.mxu0 %v211
    %265 = vmatpush.bf16.msra.mxu0 %v210
    %266 = vmatpush.bf16.msra.mxu0 %v209
    %267 = vmatpush.bf16.msra.mxu0 %v208
    %268 = vmatpush.bf16.msra.mxu0 %v207
    %269 = vmatpush.bf16.msra.mxu0 %v206
    %270 = vmatpush.bf16.msra.mxu0 %v205
    %271 = vmatpush.bf16.msra.mxu0 %v204
    %272 = vmatmul.bf16.gmra.mxu0 %v90
    %v273 = vpop.f32.mrf.mxu0
    %v274 = vadd.f32 %v260, %v273
    %v275 = vpop.f32.mrf.mxu0
    %v276 = vadd.f32 %v262, %v275
    %277 = vdwg.mxu0
    %278 = vmatpush.bf16.msra.mxu0 %v219
    %279 = vmatpush.bf16.msra.mxu0 %v218
    %280 = vmatpush.bf16.msra.mxu0 %v217
    %281 = vmatpush.bf16.msra.mxu0 %v216
    %282 = vmatpush.bf16.msra.mxu0 %v215
    %283 = vmatpush.bf16.msra.mxu0 %v214
    %284 = vmatpush.bf16.msra.mxu0 %v213
    %285 = vmatpush.bf16.msra.mxu0 %v212
    %286 = vmatmul.bf16.gmra.mxu0 %v91
    %v287 = vpop.f32.mrf.mxu0
    %v288 = vadd.f32 %v274, %v287
    %v289 = vpop.f32.mrf.mxu0
    %v290 = vadd.f32 %v276, %v289
    %291 = vdwg.mxu0
    %292 = vmatpush.bf16.msra.mxu0 0
    %293 = vmatpush.bf16.msra.mxu0 0
    %294 = vmatpush.bf16.msra.mxu0 0
    %295 = vmatpush.bf16.msra.mxu0 0
    %296 = vmatpush.bf16.msra.mxu0 0
    %297 = vmatpush.bf16.msra.mxu0 0
    %298 = vmatpush.bf16.msra.mxu0 0
    %299 = vmatpush.bf16.msra.mxu0 %v220
    %300 = vmatmul.bf16.gmra.mxu0 %v248
    %v301 = vpop.f32.mrf.mxu0
    %v302 = vadd.f32 %v288, %v301
    %v303 = vpop.f32.mrf.mxu0
    %v304 = vadd.f32 %v290, %v303
    %305 = vdwg.mxu0
    %v306 = vadd.f32 %v21, %v302
    %v307 = vadd.f32 %v22, %v304
    %308 = vst [vmem:[#allocation2] sm:$0xff] %v306
    %309 = vst [vmem:[#allocation2 + $0x8] sm:$0xff] %v307
    // Predicated region
    $region18: #{cvae_forward.13} parent=1 // pred_check
      %p310 = pneg %p15
    $region19: #{cvae_forward.13} parent=1 // pred_check_branch
      %312 = sbr.rel (%p310) target = $region21
    $region20: #{cvae_forward.13} parent=1 // pred_region
      %v313 = vld [vmem:[#allocation2] sm:$0xff]
      %v314 = vld [vmem:[#allocation2 + $0x8] sm:$0xff]
      %v315 = vld [vmem:[%s2] sm:$0x1]
      %v317 = vperm.slane %v315, 0
      %v319 = vadd.f32 %v313, %v317
      %v320 = vadd.f32 %v314, %v317
      %v321 = vmax.f32 %v319, 0.0
      %v322 = vmax.f32 %v320, 0.0
      %v323 = vpack.c.bf16 %v321, %v321
      %v324 = vpack.c.bf16 %v322, %v322
      %325 = vst [vmem:[#allocation3] sm:$0xf] %v323
      %326 = vst [vmem:[#allocation3 + $0x4] sm:$0xf] %v324
    $region21: #{cvae_forward.13} parent=1 // pred_fallthru
      _
    // Predicated region
    $region22: #{cvae_forward.13} parent=1 // pred_check
      _
    $region23: #{cvae_forward.13} parent=1 // pred_check_branch
      %328 = sbr.rel (0) target = $region25
    $region24: #{cvae_forward.13} parent=1 // pred_region
      // Predicated region
      $region26: #{cvae_forward.13} parent=24 // pred_check
        _
      $region27: #{cvae_forward.13} parent=24 // pred_check_branch
        %330 = sbr.rel (0) target = $region29
      $region28: #{cvae_forward.13} parent=24 // pred_region
        // Predicated region
        $region30: #{cvae_forward.13} parent=28 // pred_check
          _
        $region31: #{cvae_forward.13} parent=28 // pred_check_branch
          %332 = sbr.rel target = $region33
        $region32: #{cvae_forward.13} parent=28 // pred_region
          // Predicated region
          $region45: #{cvae_forward.13} parent=32 // pred_check
            _
          $region46: #{cvae_forward.13} parent=32 // pred_check_branch
            %348 = sbr.rel (0) target = $region48
          $region47: #{cvae_forward.13} parent=32 // pred_region
            %s350 = ssub.s32 16, 1
            loop: start=0, step=1, limit=1
            $region49: #{cvae_forward.13} parent=47 // loop_pre_header
              _
            $region50: #{cvae_forward.13} parent=47 // loop_header
              %s352 = sphi 0, %s356
              %p353 = scmp.ge.s32.totalorder %s352, 1
              %s357 = sphi [#allocation3], [#allocation3]
              %s358 = sphi %s3, %s3
            $region51: #{cvae_forward.13} parent=47 // loop_header_branch
              %355 = sbr.rel (%p353) target = $region55
            $region52: #{cvae_forward.13} parent=47 // loop_body
              %v359 = vld [vmem:[%s357] sm:%s350]
              %360 = vst [vmem:[%s358] sm:%s350] %v359
            $region53: #{cvae_forward.13} parent=47 // loop_footer
              %s356 = sadd.s32 1, %s352
            $region54: #{cvae_forward.13} parent=47 // loop_footer_branch
              %351 = sbr.rel target = $region50
            $region55: #{cvae_forward.13} parent=47 // loop_exit
              _
          $region48: #{cvae_forward.13} parent=32 // pred_fallthru
            _
        $region33: #{cvae_forward.13} parent=28 // pred_fallthru
          _
        // Predicated region
        $region34: #{cvae_forward.13} parent=28 // pred_check
          _
        $region35: #{cvae_forward.13} parent=28 // pred_check_branch
          %334 = sbr.rel (0) target = $region37
        $region36: #{cvae_forward.13} parent=28 // pred_region
          %s336 = ssub.s32 16, 1
          loop: start=0, step=1, limit=1
          $region38: #{cvae_forward.13} parent=36 // loop_pre_header
            _
          $region39: #{cvae_forward.13} parent=36 // loop_header
            %s338 = sphi 0, %s342
            %p339 = scmp.ge.s32.totalorder %s338, 1
            %s343 = sphi [#allocation3], [#allocation3]
            %s344 = sphi %s3, %s3
          $region40: #{cvae_forward.13} parent=36 // loop_header_branch
            %341 = sbr.rel (%p339) target = $region44
          $region41: #{cvae_forward.13} parent=36 // loop_body
            %v345 = vld [vmem:[%s343] sm:%s336]
            %346 = vst [vmem:[%s344] sm:%s336] %v345
          $region42: #{cvae_forward.13} parent=36 // loop_footer
            %s342 = sadd.s32 1, %s338
          $region43: #{cvae_forward.13} parent=36 // loop_footer_branch
            %337 = sbr.rel target = $region39
          $region44: #{cvae_forward.13} parent=36 // loop_exit
            _
        $region37: #{cvae_forward.13} parent=28 // pred_fallthru
          _
      $region29: #{cvae_forward.13} parent=24 // pred_fallthru
        _
      %361 = vnop
    $region25: #{cvae_forward.13} parent=1 // pred_fallthru
      _
    // Predicated region
    $region56: #{cvae_forward.13} parent=1 // pred_check
      _
    $region57: #{cvae_forward.13} parent=1 // pred_check_branch
      %363 = sbr.rel (0) target = $region59
    $region58: #{cvae_forward.13} parent=1 // pred_region
      _
    $region59: #{cvae_forward.13} parent=1 // pred_fallthru
      _

// kernel: cvae_forward.15
$region0: #{cvae_forward.15}
  #allocation0 [shape = 'u32[]', space=smem, size = 0x4, offset = 0x4, fixed_abs, tag = 'smem constant byte address 0x4 - core index']
  #allocation1 [shape = 'u32[72,128]{1,0:T(1,128)}', space=vmem, size = 0x9000, scoped, tag = 'internal scratch']
  #allocation2 [shape = 'f32[16,128]{1,0:T(8,128)}', space=vmem, size = 0x2000, scoped, tag = 'scratch operand']
  %s0 = inlined_call_operand.vmem [shape: bf16[2,18], index: 0, kind: input, shape index: {}]
  %s1 = inlined_call_operand.vmem [shape: bf16[18,128], index: 1, kind: input, shape index: {}]
  %s2 = inlined_call_operand.vmem [shape: f32[1,128], index: 2, kind: input, shape index: {}]
  %s3 = inlined_call_operand.vmem [shape: bf16[2,128], index: 3, kind: output, shape index: {}]
  %s4 = sld [smem:[#allocation0]]
  $region60: #{cvae_forward.15} parent=0
    _
  %s6 = ssub.s32 1, %s4
  %s7 = scalar_select 0, %s6, %s4
  $region1: #{cvae_forward.15} parent=0
    #allocation3 [shape = 'u8[4096]{0}', space=vmem, size = 0x1000, scoped, tag = 'output window, operand 0, single buffered']
    // Predicated region
    $region2: #{cvae_forward.15} parent=1 // pred_check
      _
    $region3: #{cvae_forward.15} parent=1 // pred_check_branch
      %9 = sbr.rel (0) target = $region5
    $region4: #{cvae_forward.15} parent=1 // pred_region
      _
    $region5: #{cvae_forward.15} parent=1 // pred_fallthru
      _
    // Predicated region
    $region6: #{cvae_forward.15} parent=1 // pred_check
      _
    $region7: #{cvae_forward.15} parent=1 // pred_check_branch
      %11 = sbr.rel (0) target = $region9
    $region8: #{cvae_forward.15} parent=1 // pred_region
      _
    $region9: #{cvae_forward.15} parent=1 // pred_fallthru
      _
    // Predicated region
    $region10: #{cvae_forward.15} parent=1 // pred_check
      _
    $region11: #{cvae_forward.15} parent=1 // pred_check_branch
      %13 = sbr.rel (0) target = $region13
    $region12: #{cvae_forward.15} parent=1 // pred_region
      _
    $region13: #{cvae_forward.15} parent=1 // pred_fallthru
      _
    %p15 = scmp.eq.s32.totalorder 0, 0
    // Predicated region
    $region14: #{cvae_forward.15} parent=1 // pred_check
      %p16 = pneg %p15
    $region15: #{cvae_forward.15} parent=1 // pred_check_branch
      %18 = sbr.rel (%p16) target = $region17
    $region16: #{cvae_forward.15} parent=1 // pred_region
      %19 = vst [vmem:[#allocation2] sm:$0xff] 0.0
      %20 = vst [vmem:[#allocation2 + $0x8] sm:$0xff] 0.0
    $region17: #{cvae_forward.15} parent=1 // pred_fallthru
      _
    %v21 = vld [vmem:[#allocation2] sm:$0xff]
    %v22 = vld [vmem:[#allocation2 + $0x8] sm:$0xff]
    %v23 = vld [vmem:[%s0] sm:$0x1]
    %v24 = vld [vmem:[%s0 + $0x1] sm:$0x1]
    %v25 = vld [vmem:[%s0 + $0x2] sm:$0x1]
    %v26 = vld [vmem:[%s0 + $0x3] sm:$0x1]
    %v27 = vld [vmem:[%s0 + $0x4] sm:$0x1]
    %v28 = vld [vmem:[%s0 + $0x5] sm:$0x1]
    %v29 = vld [vmem:[%s0 + $0x6] sm:$0x1]
    %v30 = vld [vmem:[%s0 + $0x7] sm:$0x1]
    %v31 = vld [vmem:[%s1] sm:$0xf]
    %v32 = vld [vmem:[%s1 + $0x4] sm:$0xf]
    %v33 = vld [vmem:[%s1 + $0x8] sm:$0x1]
    %35 = vst [vmem:[#allocation1] ss:$9 sm:$0xff] %v23
    %s37 = scalar_lea.vmem [#allocation1], 1
    %38 = vst [vmem:[%s37] ss:$9 sm:$0xff] %v24
    %s40 = scalar_lea.vmem [#allocation1], 2
    %41 = vst [vmem:[%s40] ss:$9 sm:$0xff] %v25
    %s43 = scalar_lea.vmem [#allocation1], 3
    %44 = vst [vmem:[%s43] ss:$9 sm:$0xff] %v26
    %s46 = scalar_lea.vmem [#allocation1], 4
    %47 = vst [vmem:[%s46] ss:$9 sm:$0xff] %v27
    %s49 = scalar_lea.vmem [#allocation1], 5
    %50 = vst [vmem:[%s49] ss:$9 sm:$0xff] %v28
    %s52 = scalar_lea.vmem [#allocation1], 6
    %53 = vst [vmem:[%s52] ss:$9 sm:$0xff] %v29
    %s55 = scalar_lea.vmem [#allocation1], 7
    %56 = vst [vmem:[%s55] ss:$9 sm:$0xff] %v30
    %v57 = vld [vmem:[#allocation1] sm:$0xff]
    %v61 = vunpack.c.l.b16 %v31
    %v62 = vunpack.c.l.b16 %v32
    %v63 = vunpack.c.l.b16 %v33
    %v64 = vpack.c.b16 %v62, %v61
    %v65 = vpack.c.b16 %v63, %v63
    %vm67 = vcmask 146432
    %v68 = vsel %vm67, %v57, 0
    %vm70 = vcmask 1040384
    %v72 = vsel %vm70, %v65, 0
    %74 = vmatpush.bf16.msra.mxu0 0
    %75 = vmatpush.bf16.msra.mxu0 0
    %76 = vmatpush.bf16.msra.mxu0 0
    %77 = vmatpush.bf16.msra.mxu0 0
    %78 = vmatpush.bf16.msra.mxu0 0
    %79 = vmatpush.bf16.msra.mxu0 0
    %80 = vmatpush.bf16.msra.mxu0 %v72
    %81 = vmatpush.bf16.msra.mxu0 %v64
    %82 = vmatmul.bf16.gmra.mxu0 %v68
    %v83 = vpop.f32.mrf.mxu0
    %v84 = vadd.f32 0.0, %v83
    %v85 = vpop.f32.mrf.mxu0
    %v86 = vadd.f32 0.0, %v85
    %87 = vdwg.mxu0
    %v88 = vadd.f32 %v21, %v84
    %v89 = vadd.f32 %v22, %v86
    %90 = vst [vmem:[#allocation2] sm:$0xff] %v88
    %91 = vst [vmem:[#allocation2 + $0x8] sm:$0xff] %v89
    // Predicated region
    $region18: #{cvae_forward.15} parent=1 // pred_check
      %p92 = pneg %p15
    $region19: #{cvae_forward.15} parent=1 // pred_check_branch
      %94 = sbr.rel (%p92) target = $region21
    $region20: #{cvae_forward.15} parent=1 // pred_region
      %v95 = vld [vmem:[#allocation2] sm:$0xff]
      %v96 = vld [vmem:[#allocation2 + $0x8] sm:$0xff]
      %v97 = vld [vmem:[%s2] sm:$0x1]
      %v99 = vperm.slane %v97, 0
      %v101 = vadd.f32 %v95, %v99
      %v102 = vadd.f32 %v96, %v99
      %v103 = vmax.f32 %v101, 0.0
      %v104 = vmax.f32 %v102, 0.0
      %v105 = vpack.c.bf16 %v103, %v103
      %v106 = vpack.c.bf16 %v104, %v104
      %v109 = vrot.slane %v105, 3
      %v110 = vrot.slane %v106, 3
      %v113 = vsel %vm70, %v105, %v109
      %vm114 = vcmask 1041409
      %v115 = vsel %vm114, %v105, %v109
      %v117 = vrot.slane %v115, 1
      %vm118 = vcmask 1042434
      %v119 = vsel %vm118, %v105, %v109
      %v121 = vrot.slane %v119, 2
      %vm122 = vcmask 1043459
      %v123 = vsel %vm122, %v105, %v109
      %v125 = vrot.slane %v123, 3
      %v128 = vsel %vm70, %v106, %v110
      %v129 = vsel %vm114, %v106, %v110
      %v131 = vrot.slane %v129, 1
      %v132 = vsel %vm118, %v106, %v110
      %v134 = vrot.slane %v132, 2
      %v135 = vsel %vm122, %v106, %v110
      %v137 = vrot.slane %v135, 3
      %146 = vst [vmem:[#allocation3] sm:$0x1] %v113
      %147 = vst [vmem:[#allocation3 + $0x1] sm:$0x1] %v117
      %148 = vst [vmem:[#allocation3 + $0x2] sm:$0x1] %v121
      %149 = vst [vmem:[#allocation3 + $0x3] sm:$0x1] %v125
      %150 = vst [vmem:[#allocation3 + $0x4] sm:$0x1] %v128
      %151 = vst [vmem:[#allocation3 + $0x5] sm:$0x1] %v131
      %152 = vst [vmem:[#allocation3 + $0x6] sm:$0x1] %v134
      %153 = vst [vmem:[#allocation3 + $0x7] sm:$0x1] %v137
    $region21: #{cvae_forward.15} parent=1 // pred_fallthru
      _
    // Predicated region
    $region22: #{cvae_forward.15} parent=1 // pred_check
      _
    $region23: #{cvae_forward.15} parent=1 // pred_check_branch
      %155 = sbr.rel (0) target = $region25
    $region24: #{cvae_forward.15} parent=1 // pred_region
      // Predicated region
      $region26: #{cvae_forward.15} parent=24 // pred_check
        _
      $region27: #{cvae_forward.15} parent=24 // pred_check_branch
        %157 = sbr.rel (0) target = $region29
      $region28: #{cvae_forward.15} parent=24 // pred_region
        // Predicated region
        $region30: #{cvae_forward.15} parent=28 // pred_check
          _
        $region31: #{cvae_forward.15} parent=28 // pred_check_branch
          %159 = sbr.rel target = $region33
        $region32: #{cvae_forward.15} parent=28 // pred_region
          // Predicated region
          $region45: #{cvae_forward.15} parent=32 // pred_check
            _
          $region46: #{cvae_forward.15} parent=32 // pred_check_branch
            %175 = sbr.rel (0) target = $region48
          $region47: #{cvae_forward.15} parent=32 // pred_region
            %s177 = ssub.s32 2, 1
            loop: start=0, step=1, limit=1
            $region49: #{cvae_forward.15} parent=47 // loop_pre_header
              _
            $region50: #{cvae_forward.15} parent=47 // loop_header
              %s179 = sphi 0, %s183
              %p180 = scmp.ge.s32.totalorder %s179, 1
              %s184 = sphi [#allocation3], [#allocation3]
              %s185 = sphi %s3, %s3
            $region51: #{cvae_forward.15} parent=47 // loop_header_branch
              %182 = sbr.rel (%p180) target = $region55
            $region52: #{cvae_forward.15} parent=47 // loop_body
              %v186 = vld [vmem:[%s184] sm:%s177]
              %187 = vst [vmem:[%s185] sm:%s177] %v186
            $region53: #{cvae_forward.15} parent=47 // loop_footer
              %s183 = sadd.s32 1, %s179
            $region54: #{cvae_forward.15} parent=47 // loop_footer_branch
              %178 = sbr.rel target = $region50
            $region55: #{cvae_forward.15} parent=47 // loop_exit
              _
          $region48: #{cvae_forward.15} parent=32 // pred_fallthru
            _
        $region33: #{cvae_forward.15} parent=28 // pred_fallthru
          _
        // Predicated region
        $region34: #{cvae_forward.15} parent=28 // pred_check
          _
        $region35: #{cvae_forward.15} parent=28 // pred_check_branch
          %161 = sbr.rel (0) target = $region37
        $region36: #{cvae_forward.15} parent=28 // pred_region
          %s163 = ssub.s32 2, 1
          loop: start=0, step=1, limit=1
          $region38: #{cvae_forward.15} parent=36 // loop_pre_header
            _
          $region39: #{cvae_forward.15} parent=36 // loop_header
            %s165 = sphi 0, %s169
            %p166 = scmp.ge.s32.totalorder %s165, 1
            %s170 = sphi [#allocation3], [#allocation3]
            %s171 = sphi %s3, %s3
          $region40: #{cvae_forward.15} parent=36 // loop_header_branch
            %168 = sbr.rel (%p166) target = $region44
          $region41: #{cvae_forward.15} parent=36 // loop_body
            %v172 = vld [vmem:[%s170] sm:%s163]
            %173 = vst [vmem:[%s171] sm:%s163] %v172
          $region42: #{cvae_forward.15} parent=36 // loop_footer
            %s169 = sadd.s32 1, %s165
          $region43: #{cvae_forward.15} parent=36 // loop_footer_branch
            %164 = sbr.rel target = $region39
          $region44: #{cvae_forward.15} parent=36 // loop_exit
            _
        $region37: #{cvae_forward.15} parent=28 // pred_fallthru
          _
      $region29: #{cvae_forward.15} parent=24 // pred_fallthru
        _
      %188 = vnop
    $region25: #{cvae_forward.15} parent=1 // pred_fallthru
      _
    // Predicated region
    $region56: #{cvae_forward.15} parent=1 // pred_check
      _
    $region57: #{cvae_forward.15} parent=1 // pred_check_branch
      %190 = sbr.rel (0) target = $region59
    $region58: #{cvae_forward.15} parent=1 // pred_region
      _
    $region59: #{cvae_forward.15} parent=1 // pred_fallthru
      _

// kernel: cvae_forward.16
$region0: #{cvae_forward.16}
  #allocation0 [shape = 'u32[]', space=smem, size = 0x4, offset = 0x4, fixed_abs, tag = 'smem constant byte address 0x4 - core index']
  #allocation1 [shape = 'u32[72,128]{1,0:T(1,128)}', space=vmem, size = 0x9000, scoped, tag = 'internal scratch']
  #allocation2 [shape = 'f32[16,128]{1,0:T(8,128)}', space=vmem, size = 0x2000, scoped, tag = 'scratch operand']
  %s0 = inlined_call_operand.vmem [shape: bf16[8,128], index: 0, kind: input, shape index: {}]
  %s1 = inlined_call_operand.vmem [shape: bf16[128,64], index: 1, kind: input, shape index: {}]
  %s2 = inlined_call_operand.vmem [shape: f32[1,64], index: 2, kind: input, shape index: {}]
  %s3 = inlined_call_operand.vmem [shape: bf16[8,64], index: 3, kind: output, shape index: {}]
  %s4 = sld [smem:[#allocation0]]
  $region60: #{cvae_forward.16} parent=0
    _
  %s6 = ssub.s32 1, %s4
  %s7 = scalar_select 0, %s6, %s4
  $region1: #{cvae_forward.16} parent=0
    #allocation3 [shape = 'u8[4096]{0}', space=vmem, size = 0x1000, scoped, tag = 'output window, operand 0, single buffered']
    // Predicated region
    $region2: #{cvae_forward.16} parent=1 // pred_check
      _
    $region3: #{cvae_forward.16} parent=1 // pred_check_branch
      %9 = sbr.rel (0) target = $region5
    $region4: #{cvae_forward.16} parent=1 // pred_region
      _
    $region5: #{cvae_forward.16} parent=1 // pred_fallthru
      _
    // Predicated region
    $region6: #{cvae_forward.16} parent=1 // pred_check
      _
    $region7: #{cvae_forward.16} parent=1 // pred_check_branch
      %11 = sbr.rel (0) target = $region9
    $region8: #{cvae_forward.16} parent=1 // pred_region
      _
    $region9: #{cvae_forward.16} parent=1 // pred_fallthru
      _
    // Predicated region
    $region10: #{cvae_forward.16} parent=1 // pred_check
      _
    $region11: #{cvae_forward.16} parent=1 // pred_check_branch
      %13 = sbr.rel (0) target = $region13
    $region12: #{cvae_forward.16} parent=1 // pred_region
      _
    $region13: #{cvae_forward.16} parent=1 // pred_fallthru
      _
    %p14 = scmp.eq.s32.totalorder 0, 0
    // Predicated region
    $region14: #{cvae_forward.16} parent=1 // pred_check
      %p15 = pneg %p14
    $region15: #{cvae_forward.16} parent=1 // pred_check_branch
      %17 = sbr.rel (%p15) target = $region17
    $region16: #{cvae_forward.16} parent=1 // pred_region
      %18 = vst [vmem:[#allocation2] sm:$0xff] 0.0
      %19 = vst [vmem:[#allocation2 + $0x8] sm:$0xff] 0.0
    $region17: #{cvae_forward.16} parent=1 // pred_fallthru
      _
    %v20 = vld [vmem:[#allocation2] sm:$0xff]
    %v21 = vld [vmem:[#allocation2 + $0x8] sm:$0xff]
    %v22 = vld [vmem:[%s0] sm:$0xf]
    %v23 = vld [vmem:[%s0 + $0x4] sm:$0xf]
    %v24 = vld [vmem:[%s1] sm:$0xf]
    %v25 = vld [vmem:[%s1 + $0x4] sm:$0xf]
    %v26 = vld [vmem:[%s1 + $0x8] sm:$0xf]
    %v27 = vld [vmem:[%s1 + $0xc] sm:$0xf]
    %v28 = vld [vmem:[%s1 + $0x10] sm:$0xf]
    %v29 = vld [vmem:[%s1 + $0x14] sm:$0xf]
    %v30 = vld [vmem:[%s1 + $0x18] sm:$0xf]
    %v31 = vld [vmem:[%s1 + $0x1c] sm:$0xf]
    %v32 = vld [vmem:[%s1 + $0x20] sm:$0xf]
    %v33 = vld [vmem:[%s1 + $0x24] sm:$0xf]
    %v34 = vld [vmem:[%s1 + $0x28] sm:$0xf]
    %v35 = vld [vmem:[%s1 + $0x2c] sm:$0xf]
    %v36 = vld [vmem:[%s1 + $0x30] sm:$0xf]
    %v37 = vld [vmem:[%s1 + $0x34] sm:$0xf]
    %v38 = vld [vmem:[%s1 + $0x38] sm:$0xf]
    %v39 = vld [vmem:[%s1 + $0x3c] sm:$0xf]
    %v42 = vunpack.c.l.b16 %v22
    %v43 = vunpack.c.l.b16 %v23
    %v44 = vpack.c.b16 %v43, %v42
    %v62 = vunpack.c.l.b16 %v24
    %v63 = vunpack.c.l.b16 %v25
    %v64 = vunpack.c.l.b16 %v26
    %v65 = vunpack.c.l.b16 %v27
    %v66 = vunpack.c.l.b16 %v28
    %v67 = vunpack.c.l.b16 %v29
    %v68 = vunpack.c.l.b16 %v30
    %v69 = vunpack.c.l.b16 %v31
    %v70 = vunpack.c.l.b16 %v32
    %v71 = vunpack.c.l.b16 %v33
    %v72 = vunpack.c.l.b16 %v34
    %v73 = vunpack.c.l.b16 %v35
    %v74 = vunpack.c.l.b16 %v36
    %v75 = vunpack.c.l.b16 %v37
    %v76 = vunpack.c.l.b16 %v38
    %v77 = vunpack.c.l.b16 %v39
    %v78 = vpack.c.b16 %v63, %v62
    %v79 = vpack.c.b16 %v65, %v64
    %v80 = vpack.c.b16 %v67, %v66
    %v81 = vpack.c.b16 %v69, %v68
    %v82 = vpack.c.b16 %v71, %v70
    %v83 = vpack.c.b16 %v73, %v72
    %v84 = vpack.c.b16 %v75, %v74
    %v85 = vpack.c.b16 %v77, %v76
    %94 = vmatpush.bf16.msra.mxu0 %v85
    %95 = vmatpush.bf16.msra.mxu0 %v84
    %96 = vmatpush.bf16.msra.mxu0 %v83
    %97 = vmatpush.bf16.msra.mxu0 %v82
    %98 = vmatpush.bf16.msra.mxu0 %v81
    %99 = vmatpush.bf16.msra.mxu0 %v80
    %100 = vmatpush.bf16.msra.mxu0 %v79
    %101 = vmatpush.bf16.msra.mxu0 %v78
    %102 = vmatmul.bf16.gmra.mxu0 %v44
    %v103 = vpop.f32.mrf.mxu0
    %v104 = vadd.f32 0.0, %v103
    %v105 = vpop.f32.mrf.mxu0
    %v106 = vadd.f32 0.0, %v105
    %107 = vdwg.mxu0
    %v108 = vadd.f32 %v20, %v104
    %v109 = vadd.f32 %v21, %v106
    %110 = vst [vmem:[#allocation2] sm:$0xff] %v108
    %111 = vst [vmem:[#allocation2 + $0x8] sm:$0xff] %v109
    // Predicated region
    $region18: #{cvae_forward.16} parent=1 // pred_check
      %p112 = pneg %p14
    $region19: #{cvae_forward.16} parent=1 // pred_check_branch
      %114 = sbr.rel (%p112) target = $region21
    $region20: #{cvae_forward.16} parent=1 // pred_region
      %v115 = vld [vmem:[#allocation2] sm:$0xff]
      %v116 = vld [vmem:[#allocation2 + $0x8] sm:$0xff]
      %v117 = vld [vmem:[%s2] sm:$0x1]
      %v119 = vperm.slane %v117, 0
      %v121 = vadd.f32 %v115, %v119
      %v122 = vadd.f32 %v116, %v119
      %v123 = vpack.c.bf16 %v121, %v121
      %v124 = vpack.c.bf16 %v122, %v122
      %125 = vst [vmem:[#allocation3] sm:$0xf] %v123
      %126 = vst [vmem:[#allocation3 + $0x4] sm:$0xf] %v124
    $region21: #{cvae_forward.16} parent=1 // pred_fallthru
      _
    // Predicated region
    $region22: #{cvae_forward.16} parent=1 // pred_check
      _
    $region23: #{cvae_forward.16} parent=1 // pred_check_branch
      %128 = sbr.rel (0) target = $region25
    $region24: #{cvae_forward.16} parent=1 // pred_region
      // Predicated region
      $region26: #{cvae_forward.16} parent=24 // pred_check
        _
      $region27: #{cvae_forward.16} parent=24 // pred_check_branch
        %130 = sbr.rel (0) target = $region29
      $region28: #{cvae_forward.16} parent=24 // pred_region
        // Predicated region
        $region30: #{cvae_forward.16} parent=28 // pred_check
          _
        $region31: #{cvae_forward.16} parent=28 // pred_check_branch
          %132 = sbr.rel target = $region33
        $region32: #{cvae_forward.16} parent=28 // pred_region
          // Predicated region
          $region45: #{cvae_forward.16} parent=32 // pred_check
            _
          $region46: #{cvae_forward.16} parent=32 // pred_check_branch
            %148 = sbr.rel (0) target = $region48
          $region47: #{cvae_forward.16} parent=32 // pred_region
            %s150 = ssub.s32 16, 1
            loop: start=0, step=1, limit=1
            $region49: #{cvae_forward.16} parent=47 // loop_pre_header
              _
            $region50: #{cvae_forward.16} parent=47 // loop_header
              %s152 = sphi 0, %s156
              %p153 = scmp.ge.s32.totalorder %s152, 1
              %s157 = sphi [#allocation3], [#allocation3]
              %s158 = sphi %s3, %s3
            $region51: #{cvae_forward.16} parent=47 // loop_header_branch
              %155 = sbr.rel (%p153) target = $region55
            $region52: #{cvae_forward.16} parent=47 // loop_body
              %v159 = vld [vmem:[%s157] sm:%s150]
              %160 = vst [vmem:[%s158] sm:%s150] %v159
            $region53: #{cvae_forward.16} parent=47 // loop_footer
              %s156 = sadd.s32 1, %s152
            $region54: #{cvae_forward.16} parent=47 // loop_footer_branch
              %151 = sbr.rel target = $region50
            $region55: #{cvae_forward.16} parent=47 // loop_exit
              _
          $region48: #{cvae_forward.16} parent=32 // pred_fallthru
            _
        $region33: #{cvae_forward.16} parent=28 // pred_fallthru
          _
        // Predicated region
        $region34: #{cvae_forward.16} parent=28 // pred_check
          _
        $region35: #{cvae_forward.16} parent=28 // pred_check_branch
          %134 = sbr.rel (0) target = $region37
        $region36: #{cvae_forward.16} parent=28 // pred_region
          %s136 = ssub.s32 16, 1
          loop: start=0, step=1, limit=1
          $region38: #{cvae_forward.16} parent=36 // loop_pre_header
            _
          $region39: #{cvae_forward.16} parent=36 // loop_header
            %s138 = sphi 0, %s142
            %p139 = scmp.ge.s32.totalorder %s138, 1
            %s143 = sphi [#allocation3], [#allocation3]
            %s144 = sphi %s3, %s3
          $region40: #{cvae_forward.16} parent=36 // loop_header_branch
            %141 = sbr.rel (%p139) target = $region44
          $region41: #{cvae_forward.16} parent=36 // loop_body
            %v145 = vld [vmem:[%s143] sm:%s136]
            %146 = vst [vmem:[%s144] sm:%s136] %v145
          $region42: #{cvae_forward.16} parent=36 // loop_footer
            %s142 = sadd.s32 1, %s138
          $region43: #{cvae_forward.16} parent=36 // loop_footer_branch
            %137 = sbr.rel target = $region39
          $region44: #{cvae_forward.16} parent=36 // loop_exit
            _
        $region37: #{cvae_forward.16} parent=28 // pred_fallthru
          _
      $region29: #{cvae_forward.16} parent=24 // pred_fallthru
        _
      %161 = vnop
    $region25: #{cvae_forward.16} parent=1 // pred_fallthru
      _
    // Predicated region
    $region56: #{cvae_forward.16} parent=1 // pred_check
      _
    $region57: #{cvae_forward.16} parent=1 // pred_check_branch
      %163 = sbr.rel (0) target = $region59
    $region58: #{cvae_forward.16} parent=1 // pred_region
      _
    $region59: #{cvae_forward.16} parent=1 // pred_fallthru
      _

// kernel: cvae_forward.17
$region0: #{cvae_forward.17}
  #allocation0 [shape = 'u32[]', space=smem, size = 0x4, offset = 0x4, fixed_abs, tag = 'smem constant byte address 0x4 - core index']
  #allocation1 [shape = 'u32[72,128]{1,0:T(1,128)}', space=vmem, size = 0x9000, scoped, tag = 'internal scratch']
  #allocation2 [shape = 'f32[32,128]{1,0:T(8,128)}', space=vmem, size = 0x4000, scoped, tag = 'scratch operand']
  %s0 = inlined_call_operand.vmem [shape: bf16[32,64], index: 0, kind: input, shape index: {}]
  %s1 = inlined_call_operand.vmem [shape: bf16[64,32], index: 1, kind: input, shape index: {}]
  %s2 = inlined_call_operand.vmem [shape: f32[1,32], index: 2, kind: input, shape index: {}]
  %s3 = inlined_call_operand.vmem [shape: bf16[32,32], index: 3, kind: output, shape index: {}]
  %s4 = sld [smem:[#allocation0]]
  $region30: #{cvae_forward.17} parent=0
    _
  %s6 = ssub.s32 1, %s4
  %s7 = scalar_select 0, %s6, %s4
  // Predicated region
  $region2: #{cvae_forward.17} parent=0 // pred_check
    _
  $region3: #{cvae_forward.17} parent=0 // pred_check_branch
    %9 = sbr.rel (0) target = $region5
  $region4: #{cvae_forward.17} parent=0 // pred_region
    _
  $region5: #{cvae_forward.17} parent=0 // pred_fallthru
    _
  // Predicated region
  $region6: #{cvae_forward.17} parent=0 // pred_check
    _
  $region7: #{cvae_forward.17} parent=0 // pred_check_branch
    %11 = sbr.rel (0) target = $region9
  $region8: #{cvae_forward.17} parent=0 // pred_region
    _
  $region9: #{cvae_forward.17} parent=0 // pred_fallthru
    _
  // Predicated region
  $region10: #{cvae_forward.17} parent=0 // pred_check
    _
  $region11: #{cvae_forward.17} parent=0 // pred_check_branch
    %13 = sbr.rel (0) target = $region13
  $region12: #{cvae_forward.17} parent=0 // pred_region
    _
  $region13: #{cvae_forward.17} parent=0 // pred_fallthru
    _
  %p15 = scmp.eq.s32.totalorder 0, 0
  // Predicated region
  $region14: #{cvae_forward.17} parent=0 // pred_check
    %p16 = pneg %p15
  $region15: #{cvae_forward.17} parent=0 // pred_check_branch
    %18 = sbr.rel (%p16) target = $region17
  $region16: #{cvae_forward.17} parent=0 // pred_region
    %19 = vst [vmem:[#allocation2] sm:$0xff] 0.0
    %20 = vst [vmem:[#allocation2 + $0x8] sm:$0xff] 0.0
    %21 = vst [vmem:[#allocation2 + $0x10] sm:$0xff] 0.0
    %22 = vst [vmem:[#allocation2 + $0x18] sm:$0xff] 0.0
  $region17: #{cvae_forward.17} parent=0 // pred_fallthru
    _
  %v23 = vld [vmem:[#allocation2] sm:$0xff]
  %v24 = vld [vmem:[#allocation2 + $0x8] sm:$0xff]
  %v25 = vld [vmem:[#allocation2 + $0x10] sm:$0xff]
  %v26 = vld [vmem:[#allocation2 + $0x18] sm:$0xff]
  %v27 = vld [vmem:[%s0] sm:$0xf]
  %v28 = vld [vmem:[%s0 + $0x4] sm:$0xf]
  %v29 = vld [vmem:[%s0 + $0x8] sm:$0xf]
  %v30 = vld [vmem:[%s0 + $0xc] sm:$0xf]
  %v31 = vld [vmem:[%s1] sm:$0xf]
  %v32 = vld [vmem:[%s1 + $0x4] sm:$0xf]
  %v33 = vld [vmem:[%s1 + $0x8] sm:$0xf]
  %v34 = vld [vmem:[%s1 + $0xc] sm:$0xf]
  %v35 = vld [vmem:[%s1 + $0x10] sm:$0xf]
  %v36 = vld [vmem:[%s1 + $0x14] sm:$0xf]
  %v37 = vld [vmem:[%s1 + $0x18] sm:$0xf]
  %v38 = vld [vmem:[%s1 + $0x1c] sm:$0xf]
  %v43 = vunpack.c.l.b16 %v27
  %v44 = vunpack.c.l.b16 %v28
  %v45 = vunpack.c.l.b16 %v29
  %v46 = vunpack.c.l.b16 %v30
  %v47 = vpack.c.b16 %v44, %v43
  %v48 = vpack.c.b16 %v46, %v45
  %v57 = vunpack.c.l.b16 %v31
  %v58 = vunpack.c.l.b16 %v32
  %v59 = vunpack.c.l.b16 %v33
  %v60 = vunpack.c.l.b16 %v34
  %v61 = vunpack.c.l.b16 %v35
  %v62 = vunpack.c.l.b16 %v36
  %v63 = vunpack.c.l.b16 %v37
  %v64 = vunpack.c.l.b16 %v38
  %v65 = vpack.c.b16 %v58, %v57
  %v66 = vpack.c.b16 %v60, %v59
  %v67 = vpack.c.b16 %v62, %v61
  %v68 = vpack.c.b16 %v64, %v63
  %vm73 = vcmask 523264
  %v75 = vsel %vm73, %v47, 0
  %v78 = vsel %vm73, %v48, 0
  %80 = vmatpush.bf16.msra.mxu0 0
  %81 = vmatpush.bf16.msra.mxu0 0
  %82 = vmatpush.bf16.msra.mxu0 0
  %83 = vmatpush.bf16.msra.mxu0 0
  %84 = vmatpush.bf16.msra.mxu0 %v68
  %85 = vmatpush.bf16.msra.mxu0 %v67
  %86 = vmatpush.bf16.msra.mxu0 %v66
  %87 = vmatpush.bf16.msra.mxu0 %v65
  %88 = vmatmul.bf16.gmra.mxu0 %v75
  %v89 = vpop.f32.mrf.mxu0
  %v90 = vadd.f32 0.0, %v89
  %v91 = vpop.f32.mrf.mxu0
  %v92 = vadd.f32 0.0, %v91
  %93 = vmatmul.bf16.gmra.mxu0 %v78
  %v94 = vpop.f32.mrf.mxu0
  %v95 = vadd.f32 0.0, %v94
  %v96 = vpop.f32.mrf.mxu0
  %v97 = vadd.f32 0.0, %v96
  %98 = vdwg.mxu0
  %v99 = vadd.f32 %v23, %v90
  %v100 = vadd.f32 %v24, %v92
  %v101 = vadd.f32 %v25, %v95
  %v102 = vadd.f32 %v26, %v97
  %103 = vst [vmem:[#allocation2] sm:$0xff] %v99
  %104 = vst [vmem:[#allocation2 + $0x8] sm:$0xff] %v100
  %105 = vst [vmem:[#allocation2 + $0x10] sm:$0xff] %v101
  %106 = vst [vmem:[#allocation2 + $0x18] sm:$0xff] %v102
  // Predicated region
  $region18: #{cvae_forward.17} parent=0 // pred_check
    %p107 = pneg %p15
  $region19: #{cvae_forward.17} parent=0 // pred_check_branch
    %109 = sbr.rel (%p107) target = $region21
  $region20: #{cvae_forward.17} parent=0 // pred_region
    %v110 = vld [vmem:[#allocation2] sm:$0xff]
    %v111 = vld [vmem:[#allocation2 + $0x8] sm:$0xff]
    %v112 = vld [vmem:[#allocation2 + $0x10] sm:$0xff]
    %v113 = vld [vmem:[#allocation2 + $0x18] sm:$0xff]
    %v114 = vld [vmem:[%s2] sm:$0x1]
    %v116 = vperm.slane %v114, 0
    %v118 = vadd.f32 %v110, %v116
    %v119 = vadd.f32 %v111, %v116
    %v120 = vadd.f32 %v112, %v116
    %v121 = vadd.f32 %v113, %v116
    %v122 = vpack.c.bf16 %v118, %v118
    %v123 = vpack.c.bf16 %v119, %v119
    %v124 = vpack.c.bf16 %v120, %v120
    %v125 = vpack.c.bf16 %v121, %v121
    %126 = vst [vmem:[%s3] sm:$0xf] %v122
    %127 = vst [vmem:[%s3 + $0x4] sm:$0xf] %v123
    %128 = vst [vmem:[%s3 + $0x8] sm:$0xf] %v124
    %129 = vst [vmem:[%s3 + $0xc] sm:$0xf] %v125
  $region21: #{cvae_forward.17} parent=0 // pred_fallthru
    _
  // Predicated region
  $region22: #{cvae_forward.17} parent=0 // pred_check
    _
  $region23: #{cvae_forward.17} parent=0 // pred_check_branch
    %131 = sbr.rel (0) target = $region25
  $region24: #{cvae_forward.17} parent=0 // pred_region
    _
  $region25: #{cvae_forward.17} parent=0 // pred_fallthru
    _
  // Predicated region
  $region26: #{cvae_forward.17} parent=0 // pred_check
    _
  $region27: #{cvae_forward.17} parent=0 // pred_check_branch
    %133 = sbr.rel (0) target = $region29
  $region28: #{cvae_forward.17} parent=0 // pred_region
    _
  $region29: #{cvae_forward.17} parent=0 // pred_fallthru
    _

// kernel: cvae_forward.18
$region0: #{cvae_forward.18}
  #allocation0 [shape = 'u32[]', space=smem, size = 0x4, offset = 0x4, fixed_abs, tag = 'smem constant byte address 0x4 - core index']
  #allocation1 [shape = 'u32[72,128]{1,0:T(1,128)}', space=vmem, size = 0x9000, scoped, tag = 'internal scratch']
  #allocation2 [shape = 'f32[128,128]{1,0:T(8,128)}', space=vmem, size = 0x10000, scoped, tag = 'scratch operand']
  %s0 = inlined_call_operand.vmem [shape: bf16[128,32], index: 0, kind: input, shape index: {}]
  %s1 = inlined_call_operand.vmem [shape: bf16[32,16], index: 1, kind: input, shape index: {}]
  %s2 = inlined_call_operand.vmem [shape: f32[1,16], index: 2, kind: input, shape index: {}]
  %s3 = inlined_call_operand.vmem [shape: bf16[128,16], index: 3, kind: output, shape index: {}]
  %s4 = sld [smem:[#allocation0]]
  $region30: #{cvae_forward.18} parent=0
    _
  %s6 = ssub.s32 1, %s4
  %s7 = scalar_select 0, %s6, %s4
  // Predicated region
  $region2: #{cvae_forward.18} parent=0 // pred_check
    _
  $region3: #{cvae_forward.18} parent=0 // pred_check_branch
    %9 = sbr.rel (0) target = $region5
  $region4: #{cvae_forward.18} parent=0 // pred_region
    _
  $region5: #{cvae_forward.18} parent=0 // pred_fallthru
    _
  // Predicated region
  $region6: #{cvae_forward.18} parent=0 // pred_check
    _
  $region7: #{cvae_forward.18} parent=0 // pred_check_branch
    %11 = sbr.rel (0) target = $region9
  $region8: #{cvae_forward.18} parent=0 // pred_region
    _
  $region9: #{cvae_forward.18} parent=0 // pred_fallthru
    _
  // Predicated region
  $region10: #{cvae_forward.18} parent=0 // pred_check
    _
  $region11: #{cvae_forward.18} parent=0 // pred_check_branch
    %13 = sbr.rel (0) target = $region13
  $region12: #{cvae_forward.18} parent=0 // pred_region
    _
  $region13: #{cvae_forward.18} parent=0 // pred_fallthru
    _
  %p15 = scmp.eq.s32.totalorder 0, 0
  // Predicated region
  $region14: #{cvae_forward.18} parent=0 // pred_check
    %p16 = pneg %p15
  $region15: #{cvae_forward.18} parent=0 // pred_check_branch
    %18 = sbr.rel (%p16) target = $region17
  $region16: #{cvae_forward.18} parent=0 // pred_region
    %19 = vst [vmem:[#allocation2] sm:$0xff] 0.0
    %20 = vst [vmem:[#allocation2 + $0x8] sm:$0xff] 0.0
    %21 = vst [vmem:[#allocation2 + $0x10] sm:$0xff] 0.0
    %22 = vst [vmem:[#allocation2 + $0x18] sm:$0xff] 0.0
    %23 = vst [vmem:[#allocation2 + $0x20] sm:$0xff] 0.0
    %24 = vst [vmem:[#allocation2 + $0x28] sm:$0xff] 0.0
    %25 = vst [vmem:[#allocation2 + $0x30] sm:$0xff] 0.0
    %26 = vst [vmem:[#allocation2 + $0x38] sm:$0xff] 0.0
    %27 = vst [vmem:[#allocation2 + $0x40] sm:$0xff] 0.0
    %28 = vst [vmem:[#allocation2 + $0x48] sm:$0xff] 0.0
    %29 = vst [vmem:[#allocation2 + $0x50] sm:$0xff] 0.0
    %30 = vst [vmem:[#allocation2 + $0x58] sm:$0xff] 0.0
    %31 = vst [vmem:[#allocation2 + $0x60] sm:$0xff] 0.0
    %32 = vst [vmem:[#allocation2 + $0x68] sm:$0xff] 0.0
    %33 = vst [vmem:[#allocation2 + $0x70] sm:$0xff] 0.0
    %34 = vst [vmem:[#allocation2 + $0x78] sm:$0xff] 0.0
  $region17: #{cvae_forward.18} parent=0 // pred_fallthru
    _
  %v35 = vld [vmem:[#allocation2] sm:$0xff]
  %v36 = vld [vmem:[#allocation2 + $0x8] sm:$0xff]
  %v37 = vld [vmem:[#allocation2 + $0x10] sm:$0xff]
  %v38 = vld [vmem:[#allocation2 + $0x18] sm:$0xff]
  %v39 = vld [vmem:[#allocation2 + $0x20] sm:$0xff]
  %v40 = vld [vmem:[#allocation2 + $0x28] sm:$0xff]
  %v41 = vld [vmem:[#allocation2 + $0x30] sm:$0xff]
  %v42 = vld [vmem:[#allocation2 + $0x38] sm:$0xff]
  %v43 = vld [vmem:[#allocation2 + $0x40] sm:$0xff]
  %v44 = vld [vmem:[#allocation2 + $0x48] sm:$0xff]
  %v45 = vld [vmem:[#allocation2 + $0x50] sm:$0xff]
  %v46 = vld [vmem:[#allocation2 + $0x58] sm:$0xff]
  %v47 = vld [vmem:[#allocation2 + $0x60] sm:$0xff]
  %v48 = vld [vmem:[#allocation2 + $0x68] sm:$0xff]
  %v49 = vld [vmem:[#allocation2 + $0x70] sm:$0xff]
  %v50 = vld [vmem:[#allocation2 + $0x78] sm:$0xff]
  %v51 = vld [vmem:[%s0] sm:$0xf]
  %v52 = vld [vmem:[%s0 + $0x4] sm:$0xf]
  %v53 = vld [vmem:[%s0 + $0x8] sm:$0xf]
  %v54 = vld [vmem:[%s0 + $0xc] sm:$0xf]
  %v55 = vld [vmem:[%s0 + $0x10] sm:$0xf]
  %v56 = vld [vmem:[%s0 + $0x14] sm:$0xf]
  %v57 = vld [vmem:[%s0 + $0x18] sm:$0xf]
  %v58 = vld [vmem:[%s0 + $0x1c] sm:$0xf]
  %v59 = vld [vmem:[%s0 + $0x20] sm:$0xf]
  %v60 = vld [vmem:[%s0 + $0x24] sm:$0xf]
  %v61 = vld [vmem:[%s0 + $0x28] sm:$0xf]
  %v62 = vld [vmem:[%s0 + $0x2c] sm:$0xf]
  %v63 = vld [vmem:[%s0 + $0x30] sm:$0xf]
  %v64 = vld [vmem:[%s0 + $0x34] sm:$0xf]
  %v65 = vld [vmem:[%s0 + $0x38] sm:$0xf]
  %v66 = vld [vmem:[%s0 + $0x3c] sm:$0xf]
  %v67 = vld [vmem:[%s1] sm:$0xf]
  %v68 = vld [vmem:[%s1 + $0x4] sm:$0xf]
  %v69 = vld [vmem:[%s1 + $0x8] sm:$0xf]
  %v70 = vld [vmem:[%s1 + $0xc] sm:$0xf]
  %v87 = vunpack.c.l.b16 %v51
  %v88 = vunpack.c.l.b16 %v52
  %v89 = vunpack.c.l.b16 %v53
  %v90 = vunpack.c.l.b16 %v54
  %v91 = vunpack.c.l.b16 %v55
  %v92 = vunpack.c.l.b16 %v56
  %v93 = vunpack.c.l.b16 %v57
  %v94 = vunpack.c.l.b16 %v58
  %v95 = vunpack.c.l.b16 %v59
  %v96 = vunpack.c.l.b16 %v60
  %v97 = vunpack.c.l.b16 %v61
  %v98 = vunpack.c.l.b16 %v62
  %v99 = vunpack.c.l.b16 %v63
  %v100 = vunpack.c.l.b16 %v64
  %v101 = vunpack.c.l.b16 %v65
  %v102 = vunpack.c.l.b16 %v66
  %v103 = vpack.c.b16 %v88, %v87
  %v104 = vpack.c.b16 %v90, %v89
  %v105 = vpack.c.b16 %v92, %v91
  %v106 = vpack.c.b16 %v94, %v93
  %v107 = vpack.c.b16 %v96, %v95
  %v108 = vpack.c.b16 %v98, %v97
  %v109 = vpack.c.b16 %v100, %v99
  %v110 = vpack.c.b16 %v102, %v101
  %v115 = vunpack.c.l.b16 %v67
  %v116 = vunpack.c.l.b16 %v68
  %v117 = vunpack.c.l.b16 %v69
  %v118 = vunpack.c.l.b16 %v70
  %v119 = vpack.c.b16 %v116, %v115
  %v120 = vpack.c.b16 %v118, %v117
  %vm123 = vcmask 261120
  %v125 = vsel %vm123, %v103, 0
  %v128 = vsel %vm123, %v104, 0
  %v131 = vsel %vm123, %v105, 0
  %v134 = vsel %vm123, %v106, 0
  %v137 = vsel %vm123, %v107, 0
  %v140 = vsel %vm123, %v108, 0
  %v143 = vsel %vm123, %v109, 0
  %v146 = vsel %vm123, %v110, 0
  %148 = vmatpush.bf16.msra.mxu0 0
  %149 = vmatpush.bf16.msra.mxu0 0
  %150 = vmatpush.bf16.msra.mxu0 0
  %151 = vmatpush.bf16.msra.mxu0 0
  %152 = vmatpush.bf16.msra.mxu0 0
  %153 = vmatpush.bf16.msra.mxu0 0
  %154 = vmatpush.bf16.msra.mxu0 %v120
  %155 = vmatpush.bf16.msra.mxu0 %v119
  %156 = vmatmul.bf16.gmra.mxu0 %v125
  %v157 = vpop.f32.mrf.mxu0
  %v158 = vadd.f32 0.0, %v157
  %v159 = vpop.f32.mrf.mxu0
  %v160 = vadd.f32 0.0, %v159
  %161 = vmatmul.bf16.gmra.mxu0 %v128
  %v162 = vpop.f32.mrf.mxu0
  %v163 = vadd.f32 0.0, %v162
  %v164 = vpop.f32.mrf.mxu0
  %v165 = vadd.f32 0.0, %v164
  %166 = vmatmul.bf16.gmra.mxu0 %v131
  %v167 = vpop.f32.mrf.mxu0
  %v168 = vadd.f32 0.0, %v167
  %v169 = vpop.f32.mrf.mxu0
  %v170 = vadd.f32 0.0, %v169
  %171 = vmatmul.bf16.gmra.mxu0 %v134
  %v172 = vpop.f32.mrf.mxu0
  %v173 = vadd.f32 0.0, %v172
  %v174 = vpop.f32.mrf.mxu0
  %v175 = vadd.f32 0.0, %v174
  %176 = vmatmul.bf16.gmra.mxu0 %v137
  %v177 = vpop.f32.mrf.mxu0
  %v178 = vadd.f32 0.0, %v177
  %v179 = vpop.f32.mrf.mxu0
  %v180 = vadd.f32 0.0, %v179
  %181 = vmatmul.bf16.gmra.mxu0 %v140
  %v182 = vpop.f32.mrf.mxu0
  %v183 = vadd.f32 0.0, %v182
  %v184 = vpop.f32.mrf.mxu0
  %v185 = vadd.f32 0.0, %v184
  %186 = vmatmul.bf16.gmra.mxu0 %v143
  %v187 = vpop.f32.mrf.mxu0
  %v188 = vadd.f32 0.0, %v187
  %v189 = vpop.f32.mrf.mxu0
  %v190 = vadd.f32 0.0, %v189
  %191 = vmatmul.bf16.gmra.mxu0 %v146
  %v192 = vpop.f32.mrf.mxu0
  %v193 = vadd.f32 0.0, %v192
  %v194 = vpop.f32.mrf.mxu0
  %v195 = vadd.f32 0.0, %v194
  %196 = vdwg.mxu0
  %v197 = vadd.f32 %v35, %v158
  %v198 = vadd.f32 %v36, %v160
  %v199 = vadd.f32 %v37, %v163
  %v200 = vadd.f32 %v38, %v165
  %v201 = vadd.f32 %v39, %v168
  %v202 = vadd.f32 %v40, %v170
  %v203 = vadd.f32 %v41, %v173
  %v204 = vadd.f32 %v42, %v175
  %v205 = vadd.f32 %v43, %v178
  %v206 = vadd.f32 %v44, %v180
  %v207 = vadd.f32 %v45, %v183
  %v208 = vadd.f32 %v46, %v185
  %v209 = vadd.f32 %v47, %v188
  %v210 = vadd.f32 %v48, %v190
  %v211 = vadd.f32 %v49, %v193
  %v212 = vadd.f32 %v50, %v195
  %213 = vst [vmem:[#allocation2] sm:$0xff] %v197
  %214 = vst [vmem:[#allocation2 + $0x8] sm:$0xff] %v198
  %215 = vst [vmem:[#allocation2 + $0x10] sm:$0xff] %v199
  %216 = vst [vmem:[#allocation2 + $0x18] sm:$0xff] %v200
  %217 = vst [vmem:[#allocation2 + $0x20] sm:$0xff] %v201
  %218 = vst [vmem:[#allocation2 + $0x28] sm:$0xff] %v202
  %219 = vst [vmem:[#allocation2 + $0x30] sm:$0xff] %v203
  %220 = vst [vmem:[#allocation2 + $0x38] sm:$0xff] %v204
  %221 = vst [vmem:[#allocation2 + $0x40] sm:$0xff] %v205
  %222 = vst [vmem:[#allocation2 + $0x48] sm:$0xff] %v206
  %223 = vst [vmem:[#allocation2 + $0x50] sm:$0xff] %v207
  %224 = vst [vmem:[#allocation2 + $0x58] sm:$0xff] %v208
  %225 = vst [vmem:[#allocation2 + $0x60] sm:$0xff] %v209
  %226 = vst [vmem:[#allocation2 + $0x68] sm:$0xff] %v210
  %227 = vst [vmem:[#allocation2 + $0x70] sm:$0xff] %v211
  %228 = vst [vmem:[#allocation2 + $0x78] sm:$0xff] %v212
  // Predicated region
  $region18: #{cvae_forward.18} parent=0 // pred_check
    %p229 = pneg %p15
  $region19: #{cvae_forward.18} parent=0 // pred_check_branch
    %231 = sbr.rel (%p229) target = $region21
  $region20: #{cvae_forward.18} parent=0 // pred_region
    %v232 = vld [vmem:[#allocation2] sm:$0xff]
    %v233 = vld [vmem:[#allocation2 + $0x8] sm:$0xff]
    %v234 = vld [vmem:[#allocation2 + $0x10] sm:$0xff]
    %v235 = vld [vmem:[#allocation2 + $0x18] sm:$0xff]
    %v236 = vld [vmem:[#allocation2 + $0x20] sm:$0xff]
    %v237 = vld [vmem:[#allocation2 + $0x28] sm:$0xff]
    %v238 = vld [vmem:[#allocation2 + $0x30] sm:$0xff]
    %v239 = vld [vmem:[#allocation2 + $0x38] sm:$0xff]
    %v240 = vld [vmem:[#allocation2 + $0x40] sm:$0xff]
    %v241 = vld [vmem:[#allocation2 + $0x48] sm:$0xff]
    %v242 = vld [vmem:[#allocation2 + $0x50] sm:$0xff]
    %v243 = vld [vmem:[#allocation2 + $0x58] sm:$0xff]
    %v244 = vld [vmem:[#allocation2 + $0x60] sm:$0xff]
    %v245 = vld [vmem:[#allocation2 + $0x68] sm:$0xff]
    %v246 = vld [vmem:[#allocation2 + $0x70] sm:$0xff]
    %v247 = vld [vmem:[#allocation2 + $0x78] sm:$0xff]
    %v248 = vld [vmem:[%s2] sm:$0x1]
    %v250 = vperm.slane %v248, 0
    %v252 = vadd.f32 %v232, %v250
    %v253 = vadd.f32 %v233, %v250
    %v254 = vadd.f32 %v234, %v250
    %v255 = vadd.f32 %v235, %v250
    %v256 = vadd.f32 %v236, %v250
    %v257 = vadd.f32 %v237, %v250
    %v258 = vadd.f32 %v238, %v250
    %v259 = vadd.f32 %v239, %v250
    %v260 = vadd.f32 %v240, %v250
    %v261 = vadd.f32 %v241, %v250
    %v262 = vadd.f32 %v242, %v250
    %v263 = vadd.f32 %v243, %v250
    %v264 = vadd.f32 %v244, %v250
    %v265 = vadd.f32 %v245, %v250
    %v266 = vadd.f32 %v246, %v250
    %v267 = vadd.f32 %v247, %v250
    %v268 = vpack.c.bf16 %v252, %v252
    %v269 = vpack.c.bf16 %v253, %v253
    %v270 = vpack.c.bf16 %v254, %v254
    %v271 = vpack.c.bf16 %v255, %v255
    %v272 = vpack.c.bf16 %v256, %v256
    %v273 = vpack.c.bf16 %v257, %v257
    %v274 = vpack.c.bf16 %v258, %v258
    %v275 = vpack.c.bf16 %v259, %v259
    %v276 = vpack.c.bf16 %v260, %v260
    %v277 = vpack.c.bf16 %v261, %v261
    %v278 = vpack.c.bf16 %v262, %v262
    %v279 = vpack.c.bf16 %v263, %v263
    %v280 = vpack.c.bf16 %v264, %v264
    %v281 = vpack.c.bf16 %v265, %v265
    %v282 = vpack.c.bf16 %v266, %v266
    %v283 = vpack.c.bf16 %v267, %v267
    %284 = vst [vmem:[%s3] sm:$0xf] %v268
    %285 = vst [vmem:[%s3 + $0x4] sm:$0xf] %v269
    %286 = vst [vmem:[%s3 + $0x8] sm:$0xf] %v270
    %287 = vst [vmem:[%s3 + $0xc] sm:$0xf] %v271
    %288 = vst [vmem:[%s3 + $0x10] sm:$0xf] %v272
    %289 = vst [vmem:[%s3 + $0x14] sm:$0xf] %v273
    %290 = vst [vmem:[%s3 + $0x18] sm:$0xf] %v274
    %291 = vst [vmem:[%s3 + $0x1c] sm:$0xf] %v275
    %292 = vst [vmem:[%s3 + $0x20] sm:$0xf] %v276
    %293 = vst [vmem:[%s3 + $0x24] sm:$0xf] %v277
    %294 = vst [vmem:[%s3 + $0x28] sm:$0xf] %v278
    %295 = vst [vmem:[%s3 + $0x2c] sm:$0xf] %v279
    %296 = vst [vmem:[%s3 + $0x30] sm:$0xf] %v280
    %297 = vst [vmem:[%s3 + $0x34] sm:$0xf] %v281
    %298 = vst [vmem:[%s3 + $0x38] sm:$0xf] %v282
    %299 = vst [vmem:[%s3 + $0x3c] sm:$0xf] %v283
  $region21: #{cvae_forward.18} parent=0 // pred_fallthru
    _
  // Predicated region
  $region22: #{cvae_forward.18} parent=0 // pred_check
    _
  $region23: #{cvae_forward.18} parent=0 // pred_check_branch
    %301 = sbr.rel (0) target = $region25
  $region24: #{cvae_forward.18} parent=0 // pred_region
    _
  $region25: #{cvae_forward.18} parent=0 // pred_fallthru
    _
  // Predicated region
  $region26: #{cvae_forward.18} parent=0 // pred_check
    _
  $region27: #{cvae_forward.18} parent=0 // pred_check_branch
    %303 = sbr.rel (0) target = $region29
  $region28: #{cvae_forward.18} parent=0 // pred_region
    _
  $region29: #{cvae_forward.18} parent=0 // pred_fallthru
    _

// kernel: cvae_forward.19
$region0: #{cvae_forward.19}
  #allocation0 [shape = 'u32[]', space=smem, size = 0x4, offset = 0x4, fixed_abs, tag = 'smem constant byte address 0x4 - core index']
  #allocation1 [shape = 'u32[72,128]{1,0:T(1,128)}', space=vmem, size = 0x9000, scoped, tag = 'internal scratch']
  #allocation2 [shape = 'f32[256,128]{1,0:T(8,128)}', space=vmem, size = 0x20000, scoped, tag = 'scratch operand']
  %s0 = inlined_call_operand.vmem [shape: bf16[512,16], index: 0, kind: input, shape index: {}]
  %s1 = inlined_call_operand.vmem [shape: bf16[16,12], index: 1, kind: input, shape index: {}]
  %s2 = inlined_call_operand.vmem [shape: f32[1,12], index: 2, kind: input, shape index: {}]
  %s3 = inlined_call_operand.vmem [shape: f32[512,12], index: 3, kind: output, shape index: {}]
  %s4 = sld [smem:[#allocation0]]
  $region53: #{cvae_forward.19} parent=0
    _
  %s6 = ssub.s32 1, %s4
  %s7 = scalar_select 0, %s6, %s4
  loop: start=0, step=1, limit=4
  $region2: #{cvae_forward.19} parent=0 // loop_pre_header
    _
  $region3: #{cvae_forward.19} parent=0 // loop_header
    %s9 = sphi 0, %s13
    %p10 = scmp.ge.s32.totalorder %s9, 4
    %s16 = sphi 0, %s35
    %s17 = sphi 0, %s31
    %s18 = sphi 0, %s27
    %s19 = sphi 0, %s16
    %s20 = sphi 0, %s17
    %s21 = sphi 0, %s18
    %s22 = sphi 0, %s19
    %s23 = sphi 0, %s20
    %s24 = sphi 0, %s21
    %s40 = sphi 0, %s42
    %s43 = sphi 0, %s40
    %s44 = sphi 0, %s43
    %s60 = sphi 0, %s44
    %s68 = sphi 0, %s70
    %s71 = sphi 0, %s68
    %s72 = sphi 0, %s71
    %s88 = sphi 0, %s72
    %s94 = sphi 0, %s96
    %s97 = sphi 0, %s94
    %s98 = sphi 0, %s97
    %s114 = sphi 0, %s98
    %s122 = sphi 0, %s124
    %s125 = sphi 0, %s122
    %s126 = sphi 0, %s125
    %s142 = sphi 0, %s126
  $region4: #{cvae_forward.19} parent=0 // loop_header_branch
    %12 = sbr.rel (%p10) target = $region8
  $region5: #{cvae_forward.19} parent=0 // loop_body
    %s14 = ssub.s32 %s9, 1
    %s15 = ssub.s32 %s9, 2
    %s25 = sadd.s32 1, %s18
    %p26 = scmp.ge.s32.totalorder %s25, 1
    %s27 = scalar_select %p26, 0, %s25
    %s28 = sadd.s32 1, %s17
    %s29 = scalar_select %p26, %s28, %s17
    %p30 = scmp.ge.s32.totalorder %s29, 1
    %s31 = scalar_select %p30, 0, %s29
    %s32 = sadd.s32 1, %s16
    %s33 = scalar_select %p30, %s32, %s16
    %p34 = scmp.ge.s32.totalorder %s33, 2
    %s35 = scalar_select %p34, 0, %s33
    %s36 = ssub.s32 %s16, %s35
    %s37 = ssub.s32 %s18, %s27
    %s38 = sor.u32 %s36, %s37
    %p39 = scmp.eq.s32.totalorder %s38, 0
    %s41 = sadd.s32 %s40, 1
    %s42 = scalar_select %p39, %s40, %s41
    %p45 = pneg %p39
    %p46 = scmp.eq.s32.totalorder %s9, 1
    %p47 = por %p45, %p46
    %p48 = scmp.ne.s32.totalorder %s40, %s43
    %p49 = scmp.eq.s32.totalorder %s9, 0
    %p50 = por %p48, %p49
    %p51 = scmp.ne.s32.totalorder %s40, %s43
    %p52 = scmp.eq.s32.totalorder %s14, 1
    %p53 = por %p51, %p52
    %p54 = scmp.ne.s32.totalorder %s43, %s44
    %p55 = scmp.eq.s32.totalorder %s14, 0
    %p56 = por %p54, %p55
    %p57 = scmp.ne.s32.totalorder %s43, %s44
    %p58 = scmp.eq.s32.totalorder %s15, 1
    %p59 = por %p57, %p58
    %p61 = scmp.ne.s32.totalorder %s44, %s60
    %p62 = scmp.eq.s32.totalorder %s15, 0
    %p63 = por %p61, %p62
    %s64 = ssub.s32 %s18, %s27
    %s65 = ssub.s32 %s17, %s31
    %s66 = sor.u32 %s64, %s65
    %p67 = scmp.eq.s32.totalorder %s66, 0
    %s69 = sadd.s32 %s68, 1
    %s70 = scalar_select %p67, %s68, %s69
    %p73 = pneg %p67
    %p74 = scmp.eq.s32.totalorder %s9, 1
    %p75 = por %p73, %p74
    %p76 = scmp.ne.s32.totalorder %s68, %s71
    %p77 = scmp.eq.s32.totalorder %s9, 0
    %p78 = por %p76, %p77
    %p79 = scmp.ne.s32.totalorder %s68, %s71
    %p80 = scmp.eq.s32.totalorder %s14, 1
    %p81 = por %p79, %p80
    %p82 = scmp.ne.s32.totalorder %s71, %s72
    %p83 = scmp.eq.s32.totalorder %s14, 0
    %p84 = por %p82, %p83
    %p85 = scmp.ne.s32.totalorder %s71, %s72
    %p86 = scmp.eq.s32.totalorder %s15, 1
    %p87 = por %p85, %p86
    %p89 = scmp.ne.s32.totalorder %s72, %s88
    %p90 = scmp.eq.s32.totalorder %s15, 0
    %p91 = por %p89, %p90
    %s92 = ssub.s32 %s17, %s31
    %p93 = scmp.eq.s32.totalorder %s92, 0
    %s95 = sadd.s32 %s94, 1
    %s96 = scalar_select %p93, %s94, %s95
    %p99 = pneg %p93
    %p100 = scmp.eq.s32.totalorder %s9, 1
    %p101 = por %p99, %p100
    %p102 = scmp.ne.s32.totalorder %s94, %s97
    %p103 = scmp.eq.s32.totalorder %s9, 0
    %p104 = por %p102, %p103
    %p105 = scmp.ne.s32.totalorder %s94, %s97
    %p106 = scmp.eq.s32.totalorder %s14, 1
    %p107 = por %p105, %p106
    %p108 = scmp.ne.s32.totalorder %s97, %s98
    %p109 = scmp.eq.s32.totalorder %s14, 0
    %p110 = por %p108, %p109
    %p111 = scmp.ne.s32.totalorder %s97, %s98
    %p112 = scmp.eq.s32.totalorder %s15, 1
    %p113 = por %p111, %p112
    %p115 = scmp.ne.s32.totalorder %s98, %s114
    %p116 = scmp.eq.s32.totalorder %s15, 0
    %p117 = por %p115, %p116
    %s118 = ssub.s32 %s16, %s35
    %s119 = ssub.s32 %s17, %s31
    %s120 = sor.u32 %s118, %s119
    %p121 = scmp.eq.s32.totalorder %s120, 0
    %s123 = sadd.s32 %s122, 1
    %s124 = scalar_select %p121, %s122, %s123
    %p127 = pneg %p121
    %p128 = scmp.eq.s32.totalorder %s9, 1
    %p129 = por %p127, %p128
    %p130 = scmp.ne.s32.totalorder %s122, %s125
    %p131 = scmp.eq.s32.totalorder %s9, 0
    %p132 = por %p130, %p131
    %p133 = scmp.ne.s32.totalorder %s122, %s125
    %p134 = scmp.eq.s32.totalorder %s14, 1
    %p135 = por %p133, %p134
    %p136 = scmp.ne.s32.totalorder %s125, %s126
    %p137 = scmp.eq.s32.totalorder %s14, 0
    %p138 = por %p136, %p137
    %p139 = scmp.ne.s32.totalorder %s125, %s126
    %p140 = scmp.eq.s32.totalorder %s15, 1
    %p141 = por %p139, %p140
    %p143 = scmp.ne.s32.totalorder %s126, %s142
    %p144 = scmp.eq.s32.totalorder %s15, 0
    %p145 = por %p143, %p144
    %p146 = scmp.le.s32.totalorder 1, %s9
    %p147 = scmp.lt.s32.totalorder %s9, 3
    %p148 = pnand %p146, %p147
    %p149 = pneg %p148
    // Predicated region
    $region9: #{cvae_forward.19} parent=5 // pred_check
      _
    $region10: #{cvae_forward.19} parent=5 // pred_check_branch
      %151 = sbr.rel (%p148) target = $region12
    $region11: #{cvae_forward.19} parent=5 // pred_region
      %s152 = ssub.s32 %s9, 1
      // Predicated region
      $region13: #{cvae_forward.19} parent=11 // pred_check
        %p153 = pneg %p84
      $region14: #{cvae_forward.19} parent=11 // pred_check_branch
        %155 = sbr.rel (%p153) target = $region16
      $region15: #{cvae_forward.19} parent=11 // pred_region
        %s156 = smul.u32 2, %s21
        %p157 = scmp.lt.s32.totalorder %s156, 1
        %s158 = scalar_select %p157, %s156, 1
        %p159 = scmp.lt.s32.totalorder %s20, 0
        %s160 = scalar_select %p159, %s20, 0
        %s161 = sadd.s32 %s160, %s158
        %s162 = smul.addr %s161, 4
        %s163 = scalar_lea.vmem %s1, %s162
        %s164 = smul.u32 2, %s21
      $region16: #{cvae_forward.19} parent=11 // pred_fallthru
        _
      // Predicated region
      $region17: #{cvae_forward.19} parent=11 // pred_check
        %p165 = pneg %p110
      $region18: #{cvae_forward.19} parent=11 // pred_check_branch
        %167 = sbr.rel (%p165) target = $region20
      $region19: #{cvae_forward.19} parent=11 // pred_region
        %p168 = scmp.lt.s32.totalorder %s20, 0
        %s169 = scalar_select %p168, %s20, 0
        %s170 = scalar_lea.vmem %s2, %s169
      $region20: #{cvae_forward.19} parent=11 // pred_fallthru
        _
    $region12: #{cvae_forward.19} parent=5 // pred_fallthru
      _
    %p171 = scmp.lt.s32.totalorder %s9, 2
    // Predicated region
    $region21: #{cvae_forward.19} parent=5 // pred_check
      %p172 = pneg %p171
    $region22: #{cvae_forward.19} parent=5 // pred_check_branch
      %174 = sbr.rel (%p172) target = $region24
    $region23: #{cvae_forward.19} parent=5 // pred_region
      // Predicated region
      $region25: #{cvae_forward.19} parent=23 // pred_check
        %p175 = pneg %p50
      $region26: #{cvae_forward.19} parent=23 // pred_check_branch
        %177 = sbr.rel (%p175) target = $region28
      $region27: #{cvae_forward.19} parent=23 // pred_region
        %s178 = smul.u32 32, %s16
        %p179 = scmp.lt.s32.totalorder %s178, 63
        %s180 = scalar_select %p179, %s178, 63
        %p181 = scmp.lt.s32.totalorder %s18, 0
        %s182 = scalar_select %p181, %s18, 0
        %s183 = sadd.s32 %s182, %s180
        %s184 = smul.addr %s183, 4
        %s185 = scalar_lea.vmem %s0, %s184
        %s186 = smul.u32 32, %s16
      $region28: #{cvae_forward.19} parent=23 // pred_fallthru
        _
    $region24: #{cvae_forward.19} parent=5 // pred_fallthru
      _
    %p187 = scmp.le.s32.totalorder 1, %s9
    %p188 = scmp.lt.s32.totalorder %s9, 3
    %p189 = pnand %p187, %p188
    %p190 = pneg %p189
    // Predicated region
    $region29: #{cvae_forward.19} parent=5 // pred_check
      _
    $region30: #{cvae_forward.19} parent=5 // pred_check_branch
      %192 = sbr.rel (%p189) target = $region32
    $region31: #{cvae_forward.19} parent=5 // pred_region
      %s193 = ssub.s32 %s9, 1
      %s194 = smul.u32 32, %s19
      %p195 = scmp.lt.s32.totalorder %s194, 63
      %s196 = scalar_select %p195, %s194, 63
      %p197 = scmp.lt.s32.totalorder %s21, 0
      %s198 = scalar_select %p197, %s21, 0
      %s199 = sadd.s32 %s198, %s196
      %s200 = smul.addr %s199, 4
      %s201 = scalar_lea.vmem %s0, %s200
      %p202 = pneg %p56
      %p203 = pneg %p53
      %s204 = smul.u32 2, %s21
      %p205 = scmp.lt.s32.totalorder %s204, 1
      %s206 = scalar_select %p205, %s204, 1
      %p207 = scmp.lt.s32.totalorder %s20, 0
      %s208 = scalar_select %p207, %s20, 0
      %s209 = sadd.s32 %s208, %s206
      %s210 = smul.addr %s209, 4
      %s211 = scalar_lea.vmem %s1, %s210
      %p212 = pneg %p84
      %p213 = pneg %p81
      %p214 = scmp.lt.s32.totalorder %s20, 0
      %s215 = scalar_select %p214, %s20, 0
      %s216 = scalar_lea.vmem %s2, %s215
      %p217 = pneg %p110
      %p218 = pneg %p107
      %p219 = pneg %p138
      %p220 = pneg %p135
      %s221 = smul.u32 32, %s19
      %p222 = scmp.lt.s32.totalorder %s221, 63
      %s223 = scalar_select %p222, %s221, 63
      %p224 = scmp.lt.s32.totalorder %s20, 0
      %s225 = scalar_select %p224, %s20, 0
      %s226 = sadd.s32 %s225, %s223
      %s227 = smul.addr %s226, 8
      %s228 = scalar_lea.vmem %s3, %s227
      %s229 = smul.u32 32, %s19
      %p230 = scmp.lt.s32.totalorder %s229, 63
      %s231 = scalar_select %p230, %s229, 63
      %p232 = scmp.lt.s32.totalorder %s21, 0
      %s233 = scalar_select %p232, %s21, 0
      %s234 = sadd.s32 %s233, %s231
      %s235 = smul.addr %s234, 4
      %s236 = scalar_lea.vmem %s0, %s235
      %s237 = smul.u32 32, %s19
      %s238 = smul.u32 2, %s21
      %p239 = scmp.lt.s32.totalorder %s238, 1
      %s240 = scalar_select %p239, %s238, 1
      %p241 = scmp.lt.s32.totalorder %s20, 0
      %s242 = scalar_select %p241, %s20, 0
      %s243 = sadd.s32 %s242, %s240
      %s244 = smul.addr %s243, 4
      %s245 = scalar_lea.vmem %s1, %s244
      %s246 = smul.u32 2, %s21
      %p247 = scmp.lt.s32.totalorder %s20, 0
      %s248 = scalar_select %p247, %s20, 0
      %s249 = scalar_lea.vmem %s2, %s248
      %s250 = smul.u32 32, %s19
      %p251 = scmp.lt.s32.totalorder %s250, 63
      %s252 = scalar_select %p251, %s250, 63
      %p253 = scmp.lt.s32.totalorder %s20, 0
      %s254 = scalar_select %p253, %s20, 0
      %s255 = sadd.s32 %s254, %s252
      %s256 = smul.addr %s255, 8
      %s257 = scalar_lea.vmem %s3, %s256
      %s258 = smul.u32 32, %s19
      %p260 = scmp.eq.s32.totalorder %s21, 0
      // Predicated region
      $region33: #{cvae_forward.19} parent=31 // pred_check
        %p261 = pneg %p260
      $region34: #{cvae_forward.19} parent=31 // pred_check_branch
        %263 = sbr.rel (%p261) target = $region36
      $region35: #{cvae_forward.19} parent=31 // pred_region
        %264 = vst [vmem:[#allocation2] sm:$0xff] 0.0
        %265 = vst [vmem:[#allocation2 + $0x8] sm:$0xff] 0.0
        %266 = vst [vmem:[#allocation2 + $0x10] sm:$0xff] 0.0
        %267 = vst [vmem:[#allocation2 + $0x18] sm:$0xff] 0.0
        %268 = vst [vmem:[#allocation2 + $0x20] sm:$0xff] 0.0
        %269 = vst [vmem:[#allocation2 + $0x28] sm:$0xff] 0.0
        %270 = vst [vmem:[#allocation2 + $0x30] sm:$0xff] 0.0
        %271 = vst [vmem:[#allocation2 + $0x38] sm:$0xff] 0.0
        %272 = vst [vmem:[#allocation2 + $0x40] sm:$0xff] 0.0
        %273 = vst [vmem:[#allocation2 + $0x48] sm:$0xff] 0.0
        %274 = vst [vmem:[#allocation2 + $0x50] sm:$0xff] 0.0
        %275 = vst [vmem:[#allocation2 + $0x58] sm:$0xff] 0.0
        %276 = vst [vmem:[#allocation2 + $0x60] sm:$0xff] 0.0
        %277 = vst [vmem:[#allocation2 + $0x68] sm:$0xff] 0.0
        %278 = vst [vmem:[#allocation2 + $0x70] sm:$0xff] 0.0
        %279 = vst [vmem:[#allocation2 + $0x78] sm:$0xff] 0.0
        %280 = vst [vmem:[#allocation2 + $0x80] sm:$0xff] 0.0
        %281 = vst [vmem:[#allocation2 + $0x88] sm:$0xff] 0.0
        %282 = vst [vmem:[#allocation2 + $0x90] sm:$0xff] 0.0
        %283 = vst [vmem:[#allocation2 + $0x98] sm:$0xff] 0.0
        %284 = vst [vmem:[#allocation2 + $0xa0] sm:$0xff] 0.0
        %285 = vst [vmem:[#allocation2 + $0xa8] sm:$0xff] 0.0
        %286 = vst [vmem:[#allocation2 + $0xb0] sm:$0xff] 0.0
        %287 = vst [vmem:[#allocation2 + $0xb8] sm:$0xff] 0.0
        %288 = vst [vmem:[#allocation2 + $0xc0] sm:$0xff] 0.0
        %289 = vst [vmem:[#allocation2 + $0xc8] sm:$0xff] 0.0
        %290 = vst [vmem:[#allocation2 + $0xd0] sm:$0xff] 0.0
        %291 = vst [vmem:[#allocation2 + $0xd8] sm:$0xff] 0.0
        %292 = vst [vmem:[#allocation2 + $0xe0] sm:$0xff] 0.0
        %293 = vst [vmem:[#allocation2 + $0xe8] sm:$0xff] 0.0
        %294 = vst [vmem:[#allocation2 + $0xf0] sm:$0xff] 0.0
        %295 = vst [vmem:[#allocation2 + $0xf8] sm:$0xff] 0.0
      $region36: #{cvae_forward.19} parent=31 // pred_fallthru
        _
      %v296 = vld [vmem:[#allocation2] sm:$0xff]
      %v297 = vld [vmem:[#allocation2 + $0x8] sm:$0xff]
      %v298 = vld [vmem:[#allocation2 + $0x10] sm:$0xff]
      %v299 = vld [vmem:[#allocation2 + $0x18] sm:$0xff]
      %v300 = vld [vmem:[#allocation2 + $0x20] sm:$0xff]
      %v301 = vld [vmem:[#allocation2 + $0x28] sm:$0xff]
      %v302 = vld [vmem:[#allocation2 + $0x30] sm:$0xff]
      %v303 = vld [vmem:[#allocation2 + $0x38] sm:$0xff]
      %v304 = vld [vmem:[#allocation2 + $0x40] sm:$0xff]
      %v305 = vld [vmem:[#allocation2 + $0x48] sm:$0xff]
      %v306 = vld [vmem:[#allocation2 + $0x50] sm:$0xff]
      %v307 = vld [vmem:[#allocation2 + $0x58] sm:$0xff]
      %v308 = vld [vmem:[#allocation2 + $0x60] sm:$0xff]
      %v309 = vld [vmem:[#allocation2 + $0x68] sm:$0xff]
      %v310 = vld [vmem:[#allocation2 + $0x70] sm:$0xff]
      %v311 = vld [vmem:[#allocation2 + $0x78] sm:$0xff]
      %v312 = vld [vmem:[#allocation2 + $0x80] sm:$0xff]
      %v313 = vld [vmem:[#allocation2 + $0x88] sm:$0xff]
      %v314 = vld [vmem:[#allocation2 + $0x90] sm:$0xff]
      %v315 = vld [vmem:[#allocation2 + $0x98] sm:$0xff]
      %v316 = vld [vmem:[#allocation2 + $0xa0] sm:$0xff]
      %v317 = vld [vmem:[#allocation2 + $0xa8] sm:$0xff]
      %v318 = vld [vmem:[#allocation2 + $0xb0] sm:$0xff]
      %v319 = vld [vmem:[#allocation2 + $0xb8] sm:$0xff]
      %v320 = vld [vmem:[#allocation2 + $0xc0] sm:$0xff]
      %v321 = vld [vmem:[#allocation2 + $0xc8] sm:$0xff]
      %v322 = vld [vmem:[#allocation2 + $0xd0] sm:$0xff]
      %v323 = vld [vmem:[#allocation2 + $0xd8] sm:$0xff]
      %v324 = vld [vmem:[#allocation2 + $0xe0] sm:$0xff]
      %v325 = vld [vmem:[#allocation2 + $0xe8] sm:$0xff]
      %v326 = vld [vmem:[#allocation2 + $0xf0] sm:$0xff]
      %v327 = vld [vmem:[#allocation2 + $0xf8] sm:$0xff]
      %v328 = vld [vmem:[%s236] sm:$0xf]
      %v329 = vld [vmem:[%s236 + $0x4] sm:$0xf]
      %v330 = vld [vmem:[%s236 + $0x8] sm:$0xf]
      %v331 = vld [vmem:[%s236 + $0xc] sm:$0xf]
      %v332 = vld [vmem:[%s236 + $0x10] sm:$0xf]
      %v333 = vld [vmem:[%s236 + $0x14] sm:$0xf]
      %v334 = vld [vmem:[%s236 + $0x18] sm:$0xf]
      %v335 = vld [vmem:[%s236 + $0x1c] sm:$0xf]
      %v336 = vld [vmem:[%s236 + $0x20] sm:$0xf]
      %v337 = vld [vmem:[%s236 + $0x24] sm:$0xf]
      %v338 = vld [vmem:[%s236 + $0x28] sm:$0xf]
      %v339 = vld [vmem:[%s236 + $0x2c] sm:$0xf]
      %v340 = vld [vmem:[%s236 + $0x30] sm:$0xf]
      %v341 = vld [vmem:[%s236 + $0x34] sm:$0xf]
      %v342 = vld [vmem:[%s236 + $0x38] sm:$0xf]
      %v343 = vld [vmem:[%s236 + $0x3c] sm:$0xf]
      %v344 = vld [vmem:[%s236 + $0x40] sm:$0xf]
      %v345 = vld [vmem:[%s236 + $0x44] sm:$0xf]
      %v346 = vld [vmem:[%s236 + $0x48] sm:$0xf]
      %v347 = vld [vmem:[%s236 + $0x4c] sm:$0xf]
      %v348 = vld [vmem:[%s236 + $0x50] sm:$0xf]
      %v349 = vld [vmem:[%s236 + $0x54] sm:$0xf]
      %v350 = vld [vmem:[%s236 + $0x58] sm:$0xf]
      %v351 = vld [vmem:[%s236 + $0x5c] sm:$0xf]
      %v352 = vld [vmem:[%s236 + $0x60] sm:$0xf]
      %v353 = vld [vmem:[%s236 + $0x64] sm:$0xf]
      %v354 = vld [vmem:[%s236 + $0x68] sm:$0xf]
      %v355 = vld [vmem:[%s236 + $0x6c] sm:$0xf]
      %v356 = vld [vmem:[%s236 + $0x70] sm:$0xf]
      %v357 = vld [vmem:[%s236 + $0x74] sm:$0xf]
      %v358 = vld [vmem:[%s236 + $0x78] sm:$0xf]
      %v359 = vld [vmem:[%s236 + $0x7c] sm:$0xf]
      %v360 = vld [vmem:[%s245] sm:$0xf]
      %v361 = vld [vmem:[%s245 + $0x4] sm:$0xf]
      %v394 = vunpack.c.l.b16 %v328
      %v395 = vunpack.c.l.b16 %v329
      %v396 = vunpack.c.l.b16 %v330
      %v397 = vunpack.c.l.b16 %v331
      %v398 = vunpack.c.l.b16 %v332
      %v399 = vunpack.c.l.b16 %v333
      %v400 = vunpack.c.l.b16 %v334
      %v401 = vunpack.c.l.b16 %v335
      %v402 = vunpack.c.l.b16 %v336
      %v403 = vunpack.c.l.b16 %v337
      %v404 = vunpack.c.l.b16 %v338
      %v405 = vunpack.c.l.b16 %v339
      %v406 = vunpack.c.l.b16 %v340
      %v407 = vunpack.c.l.b16 %v341
      %v408 = vunpack.c.l.b16 %v342
      %v409 = vunpack.c.l.b16 %v343
      %v410 = vunpack.c.l.b16 %v344
      %v411 = vunpack.c.l.b16 %v345
      %v412 = vunpack.c.l.b16 %v346
      %v413 = vunpack.c.l.b16 %v347
      %v414 = vunpack.c.l.b16 %v348
      %v415 = vunpack.c.l.b16 %v349
      %v416 = vunpack.c.l.b16 %v350
      %v417 = vunpack.c.l.b16 %v351
      %v418 = vunpack.c.l.b16 %v352
      %v419 = vunpack.c.l.b16 %v353
      %v420 = vunpack.c.l.b16 %v354
      %v421 = vunpack.c.l.b16 %v355
      %v422 = vunpack.c.l.b16 %v356
      %v423 = vunpack.c.l.b16 %v357
      %v424 = vunpack.c.l.b16 %v358
      %v425 = vunpack.c.l.b16 %v359
      %v426 = vpack.c.b16 %v395, %v394
      %v427 = vpack.c.b16 %v397, %v396
      %v428 = vpack.c.b16 %v399, %v398
      %v429 = vpack.c.b16 %v401, %v400
      %v430 = vpack.c.b16 %v403, %v402
      %v431 = vpack.c.b16 %v405, %v404
      %v432 = vpack.c.b16 %v407, %v406
      %v433 = vpack.c.b16 %v409, %v408
      %v434 = vpack.c.b16 %v411, %v410
      %v435 = vpack.c.b16 %v413, %v412
      %v436 = vpack.c.b16 %v415, %v414
      %v437 = vpack.c.b16 %v417, %v416
      %v438 = vpack.c.b16 %v419, %v418
      %v439 = vpack.c.b16 %v421, %v420
      %v440 = vpack.c.b16 %v423, %v422
      %v441 = vpack.c.b16 %v425, %v424
      %v444 = vunpack.c.l.b16 %v360
      %v445 = vunpack.c.l.b16 %v361
      %v446 = vpack.c.b16 %v445, %v444
      %vm448 = vcmask 130048
      %v450 = vsel %vm448, %v426, 0
      %v453 = vsel %vm448, %v427, 0
      %v456 = vsel %vm448, %v428, 0
      %v459 = vsel %vm448, %v429, 0
      %v462 = vsel %vm448, %v430, 0
      %v465 = vsel %vm448, %v431, 0
      %v468 = vsel %vm448, %v432, 0
      %v471 = vsel %vm448, %v433, 0
      %v474 = vsel %vm448, %v434, 0
      %v477 = vsel %vm448, %v435, 0
      %v480 = vsel %vm448, %v436, 0
      %v483 = vsel %vm448, %v437, 0
      %v486 = vsel %vm448, %v438, 0
      %v489 = vsel %vm448, %v439, 0
      %v492 = vsel %vm448, %v440, 0
      %v495 = vsel %vm448, %v441, 0
      %497 = vmatpush.bf16.msra.mxu0 0
      %498 = vmatpush.bf16.msra.mxu0 0
      %499 = vmatpush.bf16.msra.mxu0 0
      %500 = vmatpush.bf16.msra.mxu0 0
      %501 = vmatpush.bf16.msra.mxu0 0
      %502 = vmatpush.bf16.msra.mxu0 0
      %503 = vmatpush.bf16.msra.mxu0 0
      %504 = vmatpush.bf16.msra.mxu0 %v446
      %505 = vmatmul.bf16.gmra.mxu0 %v450
      %v506 = vpop.f32.mrf.mxu0
      %v507 = vadd.f32 0.0, %v506
      %v508 = vpop.f32.mrf.mxu0
      %v509 = vadd.f32 0.0, %v508
      %510 = vmatmul.bf16.gmra.mxu0 %v453
      %v511 = vpop.f32.mrf.mxu0
      %v512 = vadd.f32 0.0, %v511
      %v513 = vpop.f32.mrf.mxu0
      %v514 = vadd.f32 0.0, %v513
      %515 = vmatmul.bf16.gmra.mxu0 %v456
      %v516 = vpop.f32.mrf.mxu0
      %v517 = vadd.f32 0.0, %v516
      %v518 = vpop.f32.mrf.mxu0
      %v519 = vadd.f32 0.0, %v518
      %520 = vmatmul.bf16.gmra.mxu0 %v459
      %v521 = vpop.f32.mrf.mxu0
      %v522 = vadd.f32 0.0, %v521
      %v523 = vpop.f32.mrf.mxu0
      %v524 = vadd.f32 0.0, %v523
      %525 = vmatmul.bf16.gmra.mxu0 %v462
      %v526 = vpop.f32.mrf.mxu0
      %v527 = vadd.f32 0.0, %v526
      %v528 = vpop.f32.mrf.mxu0
      %v529 = vadd.f32 0.0, %v528
      %530 = vmatmul.bf16.gmra.mxu0 %v465
      %v531 = vpop.f32.mrf.mxu0
      %v532 = vadd.f32 0.0, %v531
      %v533 = vpop.f32.mrf.mxu0
      %v534 = vadd.f32 0.0, %v533
      %535 = vmatmul.bf16.gmra.mxu0 %v468
      %v536 = vpop.f32.mrf.mxu0
      %v537 = vadd.f32 0.0, %v536
      %v538 = vpop.f32.mrf.mxu0
      %v539 = vadd.f32 0.0, %v538
      %540 = vmatmul.bf16.gmra.mxu0 %v471
      %v541 = vpop.f32.mrf.mxu0
      %v542 = vadd.f32 0.0, %v541
      %v543 = vpop.f32.mrf.mxu0
      %v544 = vadd.f32 0.0, %v543
      %545 = vmatmul.bf16.gmra.mxu0 %v474
      %v546 = vpop.f32.mrf.mxu0
      %v547 = vadd.f32 0.0, %v546
      %v548 = vpop.f32.mrf.mxu0
      %v549 = vadd.f32 0.0, %v548
      %550 = vmatmul.bf16.gmra.mxu0 %v477
      %v551 = vpop.f32.mrf.mxu0
      %v552 = vadd.f32 0.0, %v551
      %v553 = vpop.f32.mrf.mxu0
      %v554 = vadd.f32 0.0, %v553
      %555 = vmatmul.bf16.gmra.mxu0 %v480
      %v556 = vpop.f32.mrf.mxu0
      %v557 = vadd.f32 0.0, %v556
      %v558 = vpop.f32.mrf.mxu0
      %v559 = vadd.f32 0.0, %v558
      %560 = vmatmul.bf16.gmra.mxu0 %v483
      %v561 = vpop.f32.mrf.mxu0
      %v562 = vadd.f32 0.0, %v561
      %v563 = vpop.f32.mrf.mxu0
      %v564 = vadd.f32 0.0, %v563
      %565 = vmatmul.bf16.gmra.mxu0 %v486
      %v566 = vpop.f32.mrf.mxu0
      %v567 = vadd.f32 0.0, %v566
      %v568 = vpop.f32.mrf.mxu0
      %v569 = vadd.f32 0.0, %v568
      %570 = vmatmul.bf16.gmra.mxu0 %v489
      %v571 = vpop.f32.mrf.mxu0
      %v572 = vadd.f32 0.0, %v571
      %v573 = vpop.f32.mrf.mxu0
      %v574 = vadd.f32 0.0, %v573
      %575 = vmatmul.bf16.gmra.mxu0 %v492
      %v576 = vpop.f32.mrf.mxu0
      %v577 = vadd.f32 0.0, %v576
      %v578 = vpop.f32.mrf.mxu0
      %v579 = vadd.f32 0.0, %v578
      %580 = vmatmul.bf16.gmra.mxu0 %v495
      %v581 = vpop.f32.mrf.mxu0
      %v582 = vadd.f32 0.0, %v581
      %v583 = vpop.f32.mrf.mxu0
      %v584 = vadd.f32 0.0, %v583
      %585 = vdwg.mxu0
      %v586 = vadd.f32 %v296, %v507
      %v587 = vadd.f32 %v297, %v509
      %v588 = vadd.f32 %v298, %v512
      %v589 = vadd.f32 %v299, %v514
      %v590 = vadd.f32 %v300, %v517
      %v591 = vadd.f32 %v301, %v519
      %v592 = vadd.f32 %v302, %v522
      %v593 = vadd.f32 %v303, %v524
      %v594 = vadd.f32 %v304, %v527
      %v595 = vadd.f32 %v305, %v529
      %v596 = vadd.f32 %v306, %v532
      %v597 = vadd.f32 %v307, %v534
      %v598 = vadd.f32 %v308, %v537
      %v599 = vadd.f32 %v309, %v539
      %v600 = vadd.f32 %v310, %v542
      %v601 = vadd.f32 %v311, %v544
      %v602 = vadd.f32 %v312, %v547
      %v603 = vadd.f32 %v313, %v549
      %v604 = vadd.f32 %v314, %v552
      %v605 = vadd.f32 %v315, %v554
      %v606 = vadd.f32 %v316, %v557
      %v607 = vadd.f32 %v317, %v559
      %v608 = vadd.f32 %v318, %v562
      %v609 = vadd.f32 %v319, %v564
      %v610 = vadd.f32 %v320, %v567
      %v611 = vadd.f32 %v321, %v569
      %v612 = vadd.f32 %v322, %v572
      %v613 = vadd.f32 %v323, %v574
      %v614 = vadd.f32 %v324, %v577
      %v615 = vadd.f32 %v325, %v579
      %v616 = vadd.f32 %v326, %v582
      %v617 = vadd.f32 %v327, %v584
      %618 = vst [vmem:[#allocation2] sm:$0xff] %v586
      %619 = vst [vmem:[#allocation2 + $0x8] sm:$0xff] %v587
      %620 = vst [vmem:[#allocation2 + $0x10] sm:$0xff] %v588
      %621 = vst [vmem:[#allocation2 + $0x18] sm:$0xff] %v589
      %622 = vst [vmem:[#allocation2 + $0x20] sm:$0xff] %v590
      %623 = vst [vmem:[#allocation2 + $0x28] sm:$0xff] %v591
      %624 = vst [vmem:[#allocation2 + $0x30] sm:$0xff] %v592
      %625 = vst [vmem:[#allocation2 + $0x38] sm:$0xff] %v593
      %626 = vst [vmem:[#allocation2 + $0x40] sm:$0xff] %v594
      %627 = vst [vmem:[#allocation2 + $0x48] sm:$0xff] %v595
      %628 = vst [vmem:[#allocation2 + $0x50] sm:$0xff] %v596
      %629 = vst [vmem:[#allocation2 + $0x58] sm:$0xff] %v597
      %630 = vst [vmem:[#allocation2 + $0x60] sm:$0xff] %v598
      %631 = vst [vmem:[#allocation2 + $0x68] sm:$0xff] %v599
      %632 = vst [vmem:[#allocation2 + $0x70] sm:$0xff] %v600
      %633 = vst [vmem:[#allocation2 + $0x78] sm:$0xff] %v601
      %634 = vst [vmem:[#allocation2 + $0x80] sm:$0xff] %v602
      %635 = vst [vmem:[#allocation2 + $0x88] sm:$0xff] %v603
      %636 = vst [vmem:[#allocation2 + $0x90] sm:$0xff] %v604
      %637 = vst [vmem:[#allocation2 + $0x98] sm:$0xff] %v605
      %638 = vst [vmem:[#allocation2 + $0xa0] sm:$0xff] %v606
      %639 = vst [vmem:[#allocation2 + $0xa8] sm:$0xff] %v607
      %640 = vst [vmem:[#allocation2 + $0xb0] sm:$0xff] %v608
      %641 = vst [vmem:[#allocation2 + $0xb8] sm:$0xff] %v609
      %642 = vst [vmem:[#allocation2 + $0xc0] sm:$0xff] %v610
      %643 = vst [vmem:[#allocation2 + $0xc8] sm:$0xff] %v611
      %644 = vst [vmem:[#allocation2 + $0xd0] sm:$0xff] %v612
      %645 = vst [vmem:[#allocation2 + $0xd8] sm:$0xff] %v613
      %646 = vst [vmem:[#allocation2 + $0xe0] sm:$0xff] %v614
      %647 = vst [vmem:[#allocation2 + $0xe8] sm:$0xff] %v615
      %648 = vst [vmem:[#allocation2 + $0xf0] sm:$0xff] %v616
      %649 = vst [vmem:[#allocation2 + $0xf8] sm:$0xff] %v617
      // Predicated region
      $region37: #{cvae_forward.19} parent=31 // pred_check
        %p650 = pneg %p260
      $region38: #{cvae_forward.19} parent=31 // pred_check_branch
        %652 = sbr.rel (%p650) target = $region40
      $region39: #{cvae_forward.19} parent=31 // pred_region
        %v653 = vld [vmem:[#allocation2] sm:$0xff]
        %v654 = vld [vmem:[#allocation2 + $0x8] sm:$0xff]
        %v655 = vld [vmem:[#allocation2 + $0x10] sm:$0xff]
        %v656 = vld [vmem:[#allocation2 + $0x18] sm:$0xff]
        %v657 = vld [vmem:[#allocation2 + $0x20] sm:$0xff]
        %v658 = vld [vmem:[#allocation2 + $0x28] sm:$0xff]
        %v659 = vld [vmem:[#allocation2 + $0x30] sm:$0xff]
        %v660 = vld [vmem:[#allocation2 + $0x38] sm:$0xff]
        %v661 = vld [vmem:[#allocation2 + $0x40] sm:$0xff]
        %v662 = vld [vmem:[#allocation2 + $0x48] sm:$0xff]
        %v663 = vld [vmem:[#allocation2 + $0x50] sm:$0xff]
        %v664 = vld [vmem:[#allocation2 + $0x58] sm:$0xff]
        %v665 = vld [vmem:[#allocation2 + $0x60] sm:$0xff]
        %v666 = vld [vmem:[#allocation2 + $0x68] sm:$0xff]
        %v667 = vld [vmem:[#allocation2 + $0x70] sm:$0xff]
        %v668 = vld [vmem:[#allocation2 + $0x78] sm:$0xff]
        %v669 = vld [vmem:[#allocation2 + $0x80] sm:$0xff]
        %v670 = vld [vmem:[#allocation2 + $0x88] sm:$0xff]
        %v671 = vld [vmem:[#allocation2 + $0x90] sm:$0xff]
        %v672 = vld [vmem:[#allocation2 + $0x98] sm:$0xff]
        %v673 = vld [vmem:[#allocation2 + $0xa0] sm:$0xff]
        %v674 = vld [vmem:[#allocation2 + $0xa8] sm:$0xff]
        %v675 = vld [vmem:[#allocation2 + $0xb0] sm:$0xff]
        %v676 = vld [vmem:[#allocation2 + $0xb8] sm:$0xff]
        %v677 = vld [vmem:[#allocation2 + $0xc0] sm:$0xff]
        %v678 = vld [vmem:[#allocation2 + $0xc8] sm:$0xff]
        %v679 = vld [vmem:[#allocation2 + $0xd0] sm:$0xff]
        %v680 = vld [vmem:[#allocation2 + $0xd8] sm:$0xff]
        %v681 = vld [vmem:[#allocation2 + $0xe0] sm:$0xff]
        %v682 = vld [vmem:[#allocation2 + $0xe8] sm:$0xff]
        %v683 = vld [vmem:[#allocation2 + $0xf0] sm:$0xff]
        %v684 = vld [vmem:[#allocation2 + $0xf8] sm:$0xff]
        %v685 = vld [vmem:[%s249] sm:$0x1]
        %v687 = vperm.slane %v685, 0
        %v689 = vadd.f32 %v653, %v687
        %v690 = vadd.f32 %v654, %v687
        %v691 = vadd.f32 %v655, %v687
        %v692 = vadd.f32 %v656, %v687
        %v693 = vadd.f32 %v657, %v687
        %v694 = vadd.f32 %v658, %v687
        %v695 = vadd.f32 %v659, %v687
        %v696 = vadd.f32 %v660, %v687
        %v697 = vadd.f32 %v661, %v687
        %v698 = vadd.f32 %v662, %v687
        %v699 = vadd.f32 %v663, %v687
        %v700 = vadd.f32 %v664, %v687
        %v701 = vadd.f32 %v665, %v687
        %v702 = vadd.f32 %v666, %v687
        %v703 = vadd.f32 %v667, %v687
        %v704 = vadd.f32 %v668, %v687
        %v705 = vadd.f32 %v669, %v687
        %v706 = vadd.f32 %v670, %v687
        %v707 = vadd.f32 %v671, %v687
        %v708 = vadd.f32 %v672, %v687
        %v709 = vadd.f32 %v673, %v687
        %v710 = vadd.f32 %v674, %v687
        %v711 = vadd.f32 %v675, %v687
        %v712 = vadd.f32 %v676, %v687
        %v713 = vadd.f32 %v677, %v687
        %v714 = vadd.f32 %v678, %v687
        %v715 = vadd.f32 %v679, %v687
        %v716 = vadd.f32 %v680, %v687
        %v717 = vadd.f32 %v681, %v687
        %v718 = vadd.f32 %v682, %v687
        %v719 = vadd.f32 %v683, %v687
        %v720 = vadd.f32 %v684, %v687
        %v721 = vsub.f32 0.0, %v689
        %v722 = vsub.f32 0.0, %v690
        %v723 = vsub.f32 0.0, %v691
        %v724 = vsub.f32 0.0, %v692
        %v725 = vsub.f32 0.0, %v693
        %v726 = vsub.f32 0.0, %v694
        %v727 = vsub.f32 0.0, %v695
        %v728 = vsub.f32 0.0, %v696
        %v729 = vsub.f32 0.0, %v697
        %v730 = vsub.f32 0.0, %v698
        %v731 = vsub.f32 0.0, %v699
        %v732 = vsub.f32 0.0, %v700
        %v733 = vsub.f32 0.0, %v701
        %v734 = vsub.f32 0.0, %v702
        %v735 = vsub.f32 0.0, %v703
        %v736 = vsub.f32 0.0, %v704
        %v737 = vsub.f32 0.0, %v705
        %v738 = vsub.f32 0.0, %v706
        %v739 = vsub.f32 0.0, %v707
        %v740 = vsub.f32 0.0, %v708
        %v741 = vsub.f32 0.0, %v709
        %v742 = vsub.f32 0.0, %v710
        %v743 = vsub.f32 0.0, %v711
        %v744 = vsub.f32 0.0, %v712
        %v745 = vsub.f32 0.0, %v713
        %v746 = vsub.f32 0.0, %v714
        %v747 = vsub.f32 0.0, %v715
        %v748 = vsub.f32 0.0, %v716
        %v749 = vsub.f32 0.0, %v717
        %v750 = vsub.f32 0.0, %v718
        %v751 = vsub.f32 0.0, %v719
        %v752 = vsub.f32 0.0, %v720
        %v753 = vmul.f32 %v721, 1.442695
        %v754 = vpow.pop %v753
        %v755 = vmul.f32 %v722, 1.442695
        %v756 = vpow.pop %v755
        %v757 = vmul.f32 %v723, 1.442695
        %v758 = vpow.pop %v757
        %v759 = vmul.f32 %v724, 1.442695
        %v760 = vpow.pop %v759
        %v761 = vmul.f32 %v725, 1.442695
        %v762 = vpow.pop %v761
        %v763 = vmul.f32 %v726, 1.442695
        %v764 = vpow.pop %v763
        %v765 = vmul.f32 %v727, 1.442695
        %v766 = vpow.pop %v765
        %v767 = vmul.f32 %v728, 1.442695
        %v768 = vpow.pop %v767
        %v769 = vmul.f32 %v729, 1.442695
        %v770 = vpow.pop %v769
        %v771 = vmul.f32 %v730, 1.442695
        %v772 = vpow.pop %v771
        %v773 = vmul.f32 %v731, 1.442695
        %v774 = vpow.pop %v773
        %v775 = vmul.f32 %v732, 1.442695
        %v776 = vpow.pop %v775
        %v777 = vmul.f32 %v733, 1.442695
        %v778 = vpow.pop %v777
        %v779 = vmul.f32 %v734, 1.442695
        %v780 = vpow.pop %v779
        %v781 = vmul.f32 %v735, 1.442695
        %v782 = vpow.pop %v781
        %v783 = vmul.f32 %v736, 1.442695
        %v784 = vpow.pop %v783
        %v785 = vmul.f32 %v737, 1.442695
        %v786 = vpow.pop %v785
        %v787 = vmul.f32 %v738, 1.442695
        %v788 = vpow.pop %v787
        %v789 = vmul.f32 %v739, 1.442695
        %v790 = vpow.pop %v789
        %v791 = vmul.f32 %v740, 1.442695
        %v792 = vpow.pop %v791
        %v793 = vmul.f32 %v741, 1.442695
        %v794 = vpow.pop %v793
        %v795 = vmul.f32 %v742, 1.442695
        %v796 = vpow.pop %v795
        %v797 = vmul.f32 %v743, 1.442695
        %v798 = vpow.pop %v797
        %v799 = vmul.f32 %v744, 1.442695
        %v800 = vpow.pop %v799
        %v801 = vmul.f32 %v745, 1.442695
        %v802 = vpow.pop %v801
        %v803 = vmul.f32 %v746, 1.442695
        %v804 = vpow.pop %v803
        %v805 = vmul.f32 %v747, 1.442695
        %v806 = vpow.pop %v805
        %v807 = vmul.f32 %v748, 1.442695
        %v808 = vpow.pop %v807
        %v809 = vmul.f32 %v749, 1.442695
        %v810 = vpow.pop %v809
        %v811 = vmul.f32 %v750, 1.442695
        %v812 = vpow.pop %v811
        %v813 = vmul.f32 %v751, 1.442695
        %v814 = vpow.pop %v813
        %v815 = vmul.f32 %v752, 1.442695
        %v816 = vpow.pop %v815
        %v817 = vadd.f32 %v754, 1.0
        %v818 = vadd.f32 %v756, 1.0
        %v819 = vadd.f32 %v758, 1.0
        %v820 = vadd.f32 %v760, 1.0
        %v821 = vadd.f32 %v762, 1.0
        %v822 = vadd.f32 %v764, 1.0
        %v823 = vadd.f32 %v766, 1.0
        %v824 = vadd.f32 %v768, 1.0
        %v825 = vadd.f32 %v770, 1.0
        %v826 = vadd.f32 %v772, 1.0
        %v827 = vadd.f32 %v774, 1.0
        %v828 = vadd.f32 %v776, 1.0
        %v829 = vadd.f32 %v778, 1.0
        %v830 = vadd.f32 %v780, 1.0
        %v831 = vadd.f32 %v782, 1.0
        %v832 = vadd.f32 %v784, 1.0
        %v833 = vadd.f32 %v786, 1.0
        %v834 = vadd.f32 %v788, 1.0
        %v835 = vadd.f32 %v790, 1.0
        %v836 = vadd.f32 %v792, 1.0
        %v837 = vadd.f32 %v794, 1.0
        %v838 = vadd.f32 %v796, 1.0
        %v839 = vadd.f32 %v798, 1.0
        %v840 = vadd.f32 %v800, 1.0
        %v841 = vadd.f32 %v802, 1.0
        %v842 = vadd.f32 %v804, 1.0
        %v843 = vadd.f32 %v806, 1.0
        %v844 = vadd.f32 %v808, 1.0
        %v845 = vadd.f32 %v810, 1.0
        %v846 = vadd.f32 %v812, 1.0
        %v847 = vadd.f32 %v814, 1.0
        %v848 = vadd.f32 %v816, 1.0
        %v849 = vrcp.pop %v817
        %v850 = vmul.f32 %v817, %v849
        %v851 = vsub.f32 1.0, %v850
        %v852 = vmul.f32 %v849, %v851
        %v853 = vadd.f32 %v849, %v852
        %vm854 = vweird.f32 %v817
        %vm855 = vweird.f32 %v849
        %vm856 = vmor %vm854, %vm855
        %v857 = vsel %vm856, %v849, %v853
        %v858 = vand.u32 2147483647, %v817
        %vm859 = vcmp.eq.f32.partialorder %v858, 8.507059e+37
        %v860 = vand.u32 %v817, 2147483648
        %v861 = vor.u32 1.1754944e-38, %v860
        %v862 = vsel %vm859, %v861, %v857
        %v863 = vmul.f32 1.0, %v862
        %v864 = vrcp.pop %v818
        %v865 = vmul.f32 %v818, %v864
        %v866 = vsub.f32 1.0, %v865
        %v867 = vmul.f32 %v864, %v866
        %v868 = vadd.f32 %v864, %v867
        %vm869 = vweird.f32 %v818
        %vm870 = vweird.f32 %v864
        %vm871 = vmor %vm869, %vm870
        %v872 = vsel %vm871, %v864, %v868
        %v873 = vand.u32 2147483647, %v818
        %vm874 = vcmp.eq.f32.partialorder %v873, 8.507059e+37
        %v875 = vand.u32 %v818, 2147483648
        %v876 = vor.u32 1.1754944e-38, %v875
        %v877 = vsel %vm874, %v876, %v872
        %v878 = vmul.f32 1.0, %v877
        %v879 = vrcp.pop %v819
        %v880 = vmul.f32 %v819, %v879
        %v881 = vsub.f32 1.0, %v880
        %v882 = vmul.f32 %v879, %v881
        %v883 = vadd.f32 %v879, %v882
        %vm884 = vweird.f32 %v819
        %vm885 = vweird.f32 %v879
        %vm886 = vmor %vm884, %vm885
        %v887 = vsel %vm886, %v879, %v883
        %v888 = vand.u32 2147483647, %v819
        %vm889 = vcmp.eq.f32.partialorder %v888, 8.507059e+37
        %v890 = vand.u32 %v819, 2147483648
        %v891 = vor.u32 1.1754944e-38, %v890
        %v892 = vsel %vm889, %v891, %v887
        %v893 = vmul.f32 1.0, %v892
        %v894 = vrcp.pop %v820
        %v895 = vmul.f32 %v820, %v894
        %v896 = vsub.f32 1.0, %v895
        %v897 = vmul.f32 %v894, %v896
        %v898 = vadd.f32 %v894, %v897
        %vm899 = vweird.f32 %v820
        %vm900 = vweird.f32 %v894
        %vm901 = vmor %vm899, %vm900
        %v902 = vsel %vm901, %v894, %v898
        %v903 = vand.u32 2147483647, %v820
        %vm904 = vcmp.eq.f32.partialorder %v903, 8.507059e+37
        %v905 = vand.u32 %v820, 2147483648
        %v906 = vor.u32 1.1754944e-38, %v905
        %v907 = vsel %vm904, %v906, %v902
        %v908 = vmul.f32 1.0, %v907
        %v909 = vrcp.pop %v821
        %v910 = vmul.f32 %v821, %v909
        %v911 = vsub.f32 1.0, %v910
        %v912 = vmul.f32 %v909, %v911
        %v913 = vadd.f32 %v909, %v912
        %vm914 = vweird.f32 %v821
        %vm915 = vweird.f32 %v909
        %vm916 = vmor %vm914, %vm915
        %v917 = vsel %vm916, %v909, %v913
        %v918 = vand.u32 2147483647, %v821
        %vm919 = vcmp.eq.f32.partialorder %v918, 8.507059e+37
        %v920 = vand.u32 %v821, 2147483648
        %v921 = vor.u32 1.1754944e-38, %v920
        %v922 = vsel %vm919, %v921, %v917
        %v923 = vmul.f32 1.0, %v922
        %v924 = vrcp.pop %v822
        %v925 = vmul.f32 %v822, %v924
        %v926 = vsub.f32 1.0, %v925
        %v927 = vmul.f32 %v924, %v926
        %v928 = vadd.f32 %v924, %v927
        %vm929 = vweird.f32 %v822
        %vm930 = vweird.f32 %v924
        %vm931 = vmor %vm929, %vm930
        %v932 = vsel %vm931, %v924, %v928
        %v933 = vand.u32 2147483647, %v822
        %vm934 = vcmp.eq.f32.partialorder %v933, 8.507059e+37
        %v935 = vand.u32 %v822, 2147483648
        %v936 = vor.u32 1.1754944e-38, %v935
        %v937 = vsel %vm934, %v936, %v932
        %v938 = vmul.f32 1.0, %v937
        %v939 = vrcp.pop %v823
        %v940 = vmul.f32 %v823, %v939
        %v941 = vsub.f32 1.0, %v940
        %v942 = vmul.f32 %v939, %v941
        %v943 = vadd.f32 %v939, %v942
        %vm944 = vweird.f32 %v823
        %vm945 = vweird.f32 %v939
        %vm946 = vmor %vm944, %vm945
        %v947 = vsel %vm946, %v939, %v943
        %v948 = vand.u32 2147483647, %v823
        %vm949 = vcmp.eq.f32.partialorder %v948, 8.507059e+37
        %v950 = vand.u32 %v823, 2147483648
        %v951 = vor.u32 1.1754944e-38, %v950
        %v952 = vsel %vm949, %v951, %v947
        %v953 = vmul.f32 1.0, %v952
        %v954 = vrcp.pop %v824
        %v955 = vmul.f32 %v824, %v954
        %v956 = vsub.f32 1.0, %v955
        %v957 = vmul.f32 %v954, %v956
        %v958 = vadd.f32 %v954, %v957
        %vm959 = vweird.f32 %v824
        %vm960 = vweird.f32 %v954
        %vm961 = vmor %vm959, %vm960
        %v962 = vsel %vm961, %v954, %v958
        %v963 = vand.u32 2147483647, %v824
        %vm964 = vcmp.eq.f32.partialorder %v963, 8.507059e+37
        %v965 = vand.u32 %v824, 2147483648
        %v966 = vor.u32 1.1754944e-38, %v965
        %v967 = vsel %vm964, %v966, %v962
        %v968 = vmul.f32 1.0, %v967
        %v969 = vrcp.pop %v825
        %v970 = vmul.f32 %v825, %v969
        %v971 = vsub.f32 1.0, %v970
        %v972 = vmul.f32 %v969, %v971
        %v973 = vadd.f32 %v969, %v972
        %vm974 = vweird.f32 %v825
        %vm975 = vweird.f32 %v969
        %vm976 = vmor %vm974, %vm975
        %v977 = vsel %vm976, %v969, %v973
        %v978 = vand.u32 2147483647, %v825
        %vm979 = vcmp.eq.f32.partialorder %v978, 8.507059e+37
        %v980 = vand.u32 %v825, 2147483648
        %v981 = vor.u32 1.1754944e-38, %v980
        %v982 = vsel %vm979, %v981, %v977
        %v983 = vmul.f32 1.0, %v982
        %v984 = vrcp.pop %v826
        %v985 = vmul.f32 %v826, %v984
        %v986 = vsub.f32 1.0, %v985
        %v987 = vmul.f32 %v984, %v986
        %v988 = vadd.f32 %v984, %v987
        %vm989 = vweird.f32 %v826
        %vm990 = vweird.f32 %v984
        %vm991 = vmor %vm989, %vm990
        %v992 = vsel %vm991, %v984, %v988
        %v993 = vand.u32 2147483647, %v826
        %vm994 = vcmp.eq.f32.partialorder %v993, 8.507059e+37
        %v995 = vand.u32 %v826, 2147483648
        %v996 = vor.u32 1.1754944e-38, %v995
        %v997 = vsel %vm994, %v996, %v992
        %v998 = vmul.f32 1.0, %v997
        %v999 = vrcp.pop %v827
        %v1000 = vmul.f32 %v827, %v999
        %v1001 = vsub.f32 1.0, %v1000
        %v1002 = vmul.f32 %v999, %v1001
        %v1003 = vadd.f32 %v999, %v1002
        %vm1004 = vweird.f32 %v827
        %vm1005 = vweird.f32 %v999
        %vm1006 = vmor %vm1004, %vm1005
        %v1007 = vsel %vm1006, %v999, %v1003
        %v1008 = vand.u32 2147483647, %v827
        %vm1009 = vcmp.eq.f32.partialorder %v1008, 8.507059e+37
        %v1010 = vand.u32 %v827, 2147483648
        %v1011 = vor.u32 1.1754944e-38, %v1010
        %v1012 = vsel %vm1009, %v1011, %v1007
        %v1013 = vmul.f32 1.0, %v1012
        %v1014 = vrcp.pop %v828
        %v1015 = vmul.f32 %v828, %v1014
        %v1016 = vsub.f32 1.0, %v1015
        %v1017 = vmul.f32 %v1014, %v1016
        %v1018 = vadd.f32 %v1014, %v1017
        %vm1019 = vweird.f32 %v828
        %vm1020 = vweird.f32 %v1014
        %vm1021 = vmor %vm1019, %vm1020
        %v1022 = vsel %vm1021, %v1014, %v1018
        %v1023 = vand.u32 2147483647, %v828
        %vm1024 = vcmp.eq.f32.partialorder %v1023, 8.507059e+37
        %v1025 = vand.u32 %v828, 2147483648
        %v1026 = vor.u32 1.1754944e-38, %v1025
        %v1027 = vsel %vm1024, %v1026, %v1022
        %v1028 = vmul.f32 1.0, %v1027
        %v1029 = vrcp.pop %v829
        %v1030 = vmul.f32 %v829, %v1029
        %v1031 = vsub.f32 1.0, %v1030
        %v1032 = vmul.f32 %v1029, %v1031
        %v1033 = vadd.f32 %v1029, %v1032
        %vm1034 = vweird.f32 %v829
        %vm1035 = vweird.f32 %v1029
        %vm1036 = vmor %vm1034, %vm1035
        %v1037 = vsel %vm1036, %v1029, %v1033
        %v1038 = vand.u32 2147483647, %v829
        %vm1039 = vcmp.eq.f32.partialorder %v1038, 8.507059e+37
        %v1040 = vand.u32 %v829, 2147483648
        %v1041 = vor.u32 1.1754944e-38, %v1040
        %v1042 = vsel %vm1039, %v1041, %v1037
        %v1043 = vmul.f32 1.0, %v1042
        %v1044 = vrcp.pop %v830
        %v1045 = vmul.f32 %v830, %v1044
        %v1046 = vsub.f32 1.0, %v1045
        %v1047 = vmul.f32 %v1044, %v1046
        %v1048 = vadd.f32 %v1044, %v1047
        %vm1049 = vweird.f32 %v830
        %vm1050 = vweird.f32 %v1044
        %vm1051 = vmor %vm1049, %vm1050
        %v1052 = vsel %vm1051, %v1044, %v1048
        %v1053 = vand.u32 2147483647, %v830
        %vm1054 = vcmp.eq.f32.partialorder %v1053, 8.507059e+37
        %v1055 = vand.u32 %v830, 2147483648
        %v1056 = vor.u32 1.1754944e-38, %v1055
        %v1057 = vsel %vm1054, %v1056, %v1052
        %v1058 = vmul.f32 1.0, %v1057
        %v1059 = vrcp.pop %v831
        %v1060 = vmul.f32 %v831, %v1059
        %v1061 = vsub.f32 1.0, %v1060
        %v1062 = vmul.f32 %v1059, %v1061
        %v1063 = vadd.f32 %v1059, %v1062
        %vm1064 = vweird.f32 %v831
        %vm1065 = vweird.f32 %v1059
        %vm1066 = vmor %vm1064, %vm1065
        %v1067 = vsel %vm1066, %v1059, %v1063
        %v1068 = vand.u32 2147483647, %v831
        %vm1069 = vcmp.eq.f32.partialorder %v1068, 8.507059e+37
        %v1070 = vand.u32 %v831, 2147483648
        %v1071 = vor.u32 1.1754944e-38, %v1070
        %v1072 = vsel %vm1069, %v1071, %v1067
        %v1073 = vmul.f32 1.0, %v1072
        %v1074 = vrcp.pop %v832
        %v1075 = vmul.f32 %v832, %v1074
        %v1076 = vsub.f32 1.0, %v1075
        %v1077 = vmul.f32 %v1074, %v1076
        %v1078 = vadd.f32 %v1074, %v1077
        %vm1079 = vweird.f32 %v832
        %vm1080 = vweird.f32 %v1074
        %vm1081 = vmor %vm1079, %vm1080
        %v1082 = vsel %vm1081, %v1074, %v1078
        %v1083 = vand.u32 2147483647, %v832
        %vm1084 = vcmp.eq.f32.partialorder %v1083, 8.507059e+37
        %v1085 = vand.u32 %v832, 2147483648
        %v1086 = vor.u32 1.1754944e-38, %v1085
        %v1087 = vsel %vm1084, %v1086, %v1082
        %v1088 = vmul.f32 1.0, %v1087
        %v1089 = vrcp.pop %v833
        %v1090 = vmul.f32 %v833, %v1089
        %v1091 = vsub.f32 1.0, %v1090
        %v1092 = vmul.f32 %v1089, %v1091
        %v1093 = vadd.f32 %v1089, %v1092
        %vm1094 = vweird.f32 %v833
        %vm1095 = vweird.f32 %v1089
        %vm1096 = vmor %vm1094, %vm1095
        %v1097 = vsel %vm1096, %v1089, %v1093
        %v1098 = vand.u32 2147483647, %v833
        %vm1099 = vcmp.eq.f32.partialorder %v1098, 8.507059e+37
        %v1100 = vand.u32 %v833, 2147483648
        %v1101 = vor.u32 1.1754944e-38, %v1100
        %v1102 = vsel %vm1099, %v1101, %v1097
        %v1103 = vmul.f32 1.0, %v1102
        %v1104 = vrcp.pop %v834
        %v1105 = vmul.f32 %v834, %v1104
        %v1106 = vsub.f32 1.0, %v1105
        %v1107 = vmul.f32 %v1104, %v1106
        %v1108 = vadd.f32 %v1104, %v1107
        %vm1109 = vweird.f32 %v834
        %vm1110 = vweird.f32 %v1104
        %vm1111 = vmor %vm1109, %vm1110
        %v1112 = vsel %vm1111, %v1104, %v1108
        %v1113 = vand.u32 2147483647, %v834
        %vm1114 = vcmp.eq.f32.partialorder %v1113, 8.507059e+37
        %v1115 = vand.u32 %v834, 2147483648
        %v1116 = vor.u32 1.1754944e-38, %v1115
        %v1117 = vsel %vm1114, %v1116, %v1112
        %v1118 = vmul.f32 1.0, %v1117
        %v1119 = vrcp.pop %v835
        %v1120 = vmul.f32 %v835, %v1119
        %v1121 = vsub.f32 1.0, %v1120
        %v1122 = vmul.f32 %v1119, %v1121
        %v1123 = vadd.f32 %v1119, %v1122
        %vm1124 = vweird.f32 %v835
        %vm1125 = vweird.f32 %v1119
        %vm1126 = vmor %vm1124, %vm1125
        %v1127 = vsel %vm1126, %v1119, %v1123
        %v1128 = vand.u32 2147483647, %v835
        %vm1129 = vcmp.eq.f32.partialorder %v1128, 8.507059e+37
        %v1130 = vand.u32 %v835, 2147483648
        %v1131 = vor.u32 1.1754944e-38, %v1130
        %v1132 = vsel %vm1129, %v1131, %v1127
        %v1133 = vmul.f32 1.0, %v1132
        %v1134 = vrcp.pop %v836
        %v1135 = vmul.f32 %v836, %v1134
        %v1136 = vsub.f32 1.0, %v1135
        %v1137 = vmul.f32 %v1134, %v1136
        %v1138 = vadd.f32 %v1134, %v1137
        %vm1139 = vweird.f32 %v836
        %vm1140 = vweird.f32 %v1134
        %vm1141 = vmor %vm1139, %vm1140
        %v1142 = vsel %vm1141, %v1134, %v1138
        %v1143 = vand.u32 2147483647, %v836
        %vm1144 = vcmp.eq.f32.partialorder %v1143, 8.507059e+37
        %v1145 = vand.u32 %v836, 2147483648
        %v1146 = vor.u32 1.1754944e-38, %v1145
        %v1147 = vsel %vm1144, %v1146, %v1142
        %v1148 = vmul.f32 1.0, %v1147
        %v1149 = vrcp.pop %v837
        %v1150 = vmul.f32 %v837, %v1149
        %v1151 = vsub.f32 1.0, %v1150
        %v1152 = vmul.f32 %v1149, %v1151
        %v1153 = vadd.f32 %v1149, %v1152
        %vm1154 = vweird.f32 %v837
        %vm1155 = vweird.f32 %v1149
        %vm1156 = vmor %vm1154, %vm1155
        %v1157 = vsel %vm1156, %v1149, %v1153
        %v1158 = vand.u32 2147483647, %v837
        %vm1159 = vcmp.eq.f32.partialorder %v1158, 8.507059e+37
        %v1160 = vand.u32 %v837, 2147483648
        %v1161 = vor.u32 1.1754944e-38, %v1160
        %v1162 = vsel %vm1159, %v1161, %v1157
        %v1163 = vmul.f32 1.0, %v1162
        %v1164 = vrcp.pop %v838
        %v1165 = vmul.f32 %v838, %v1164
        %v1166 = vsub.f32 1.0, %v1165
        %v1167 = vmul.f32 %v1164, %v1166
        %v1168 = vadd.f32 %v1164, %v1167
        %vm1169 = vweird.f32 %v838
        %vm1170 = vweird.f32 %v1164
        %vm1171 = vmor %vm1169, %vm1170
        %v1172 = vsel %vm1171, %v1164, %v1168
        %v1173 = vand.u32 2147483647, %v838
        %vm1174 = vcmp.eq.f32.partialorder %v1173, 8.507059e+37
        %v1175 = vand.u32 %v838, 2147483648
        %v1176 = vor.u32 1.1754944e-38, %v1175
        %v1177 = vsel %vm1174, %v1176, %v1172
        %v1178 = vmul.f32 1.0, %v1177
        %v1179 = vrcp.pop %v839
        %v1180 = vmul.f32 %v839, %v1179
        %v1181 = vsub.f32 1.0, %v1180
        %v1182 = vmul.f32 %v1179, %v1181
        %v1183 = vadd.f32 %v1179, %v1182
        %vm1184 = vweird.f32 %v839
        %vm1185 = vweird.f32 %v1179
        %vm1186 = vmor %vm1184, %vm1185
        %v1187 = vsel %vm1186, %v1179, %v1183
        %v1188 = vand.u32 2147483647, %v839
        %vm1189 = vcmp.eq.f32.partialorder %v1188, 8.507059e+37
        %v1190 = vand.u32 %v839, 2147483648
        %v1191 = vor.u32 1.1754944e-38, %v1190
        %v1192 = vsel %vm1189, %v1191, %v1187
        %v1193 = vmul.f32 1.0, %v1192
        %v1194 = vrcp.pop %v840
        %v1195 = vmul.f32 %v840, %v1194
        %v1196 = vsub.f32 1.0, %v1195
        %v1197 = vmul.f32 %v1194, %v1196
        %v1198 = vadd.f32 %v1194, %v1197
        %vm1199 = vweird.f32 %v840
        %vm1200 = vweird.f32 %v1194
        %vm1201 = vmor %vm1199, %vm1200
        %v1202 = vsel %vm1201, %v1194, %v1198
        %v1203 = vand.u32 2147483647, %v840
        %vm1204 = vcmp.eq.f32.partialorder %v1203, 8.507059e+37
        %v1205 = vand.u32 %v840, 2147483648
        %v1206 = vor.u32 1.1754944e-38, %v1205
        %v1207 = vsel %vm1204, %v1206, %v1202
        %v1208 = vmul.f32 1.0, %v1207
        %v1209 = vrcp.pop %v841
        %v1210 = vmul.f32 %v841, %v1209
        %v1211 = vsub.f32 1.0, %v1210
        %v1212 = vmul.f32 %v1209, %v1211
        %v1213 = vadd.f32 %v1209, %v1212
        %vm1214 = vweird.f32 %v841
        %vm1215 = vweird.f32 %v1209
        %vm1216 = vmor %vm1214, %vm1215
        %v1217 = vsel %vm1216, %v1209, %v1213
        %v1218 = vand.u32 2147483647, %v841
        %vm1219 = vcmp.eq.f32.partialorder %v1218, 8.507059e+37
        %v1220 = vand.u32 %v841, 2147483648
        %v1221 = vor.u32 1.1754944e-38, %v1220
        %v1222 = vsel %vm1219, %v1221, %v1217
        %v1223 = vmul.f32 1.0, %v1222
        %v1224 = vrcp.pop %v842
        %v1225 = vmul.f32 %v842, %v1224
        %v1226 = vsub.f32 1.0, %v1225
        %v1227 = vmul.f32 %v1224, %v1226
        %v1228 = vadd.f32 %v1224, %v1227
        %vm1229 = vweird.f32 %v842
        %vm1230 = vweird.f32 %v1224
        %vm1231 = vmor %vm1229, %vm1230
        %v1232 = vsel %vm1231, %v1224, %v1228
        %v1233 = vand.u32 2147483647, %v842
        %vm1234 = vcmp.eq.f32.partialorder %v1233, 8.507059e+37
        %v1235 = vand.u32 %v842, 2147483648
        %v1236 = vor.u32 1.1754944e-38, %v1235
        %v1237 = vsel %vm1234, %v1236, %v1232
        %v1238 = vmul.f32 1.0, %v1237
        %v1239 = vrcp.pop %v843
        %v1240 = vmul.f32 %v843, %v1239
        %v1241 = vsub.f32 1.0, %v1240
        %v1242 = vmul.f32 %v1239, %v1241
        %v1243 = vadd.f32 %v1239, %v1242
        %vm1244 = vweird.f32 %v843
        %vm1245 = vweird.f32 %v1239
        %vm1246 = vmor %vm1244, %vm1245
        %v1247 = vsel %vm1246, %v1239, %v1243
        %v1248 = vand.u32 2147483647, %v843
        %vm1249 = vcmp.eq.f32.partialorder %v1248, 8.507059e+37
        %v1250 = vand.u32 %v843, 2147483648
        %v1251 = vor.u32 1.1754944e-38, %v1250
        %v1252 = vsel %vm1249, %v1251, %v1247
        %v1253 = vmul.f32 1.0, %v1252
        %v1254 = vrcp.pop %v844
        %v1255 = vmul.f32 %v844, %v1254
        %v1256 = vsub.f32 1.0, %v1255
        %v1257 = vmul.f32 %v1254, %v1256
        %v1258 = vadd.f32 %v1254, %v1257
        %vm1259 = vweird.f32 %v844
        %vm1260 = vweird.f32 %v1254
        %vm1261 = vmor %vm1259, %vm1260
        %v1262 = vsel %vm1261, %v1254, %v1258
        %v1263 = vand.u32 2147483647, %v844
        %vm1264 = vcmp.eq.f32.partialorder %v1263, 8.507059e+37
        %v1265 = vand.u32 %v844, 2147483648
        %v1266 = vor.u32 1.1754944e-38, %v1265
        %v1267 = vsel %vm1264, %v1266, %v1262
        %v1268 = vmul.f32 1.0, %v1267
        %v1269 = vrcp.pop %v845
        %v1270 = vmul.f32 %v845, %v1269
        %v1271 = vsub.f32 1.0, %v1270
        %v1272 = vmul.f32 %v1269, %v1271
        %v1273 = vadd.f32 %v1269, %v1272
        %vm1274 = vweird.f32 %v845
        %vm1275 = vweird.f32 %v1269
        %vm1276 = vmor %vm1274, %vm1275
        %v1277 = vsel %vm1276, %v1269, %v1273
        %v1278 = vand.u32 2147483647, %v845
        %vm1279 = vcmp.eq.f32.partialorder %v1278, 8.507059e+37
        %v1280 = vand.u32 %v845, 2147483648
        %v1281 = vor.u32 1.1754944e-38, %v1280
        %v1282 = vsel %vm1279, %v1281, %v1277
        %v1283 = vmul.f32 1.0, %v1282
        %v1284 = vrcp.pop %v846
        %v1285 = vmul.f32 %v846, %v1284
        %v1286 = vsub.f32 1.0, %v1285
        %v1287 = vmul.f32 %v1284, %v1286
        %v1288 = vadd.f32 %v1284, %v1287
        %vm1289 = vweird.f32 %v846
        %vm1290 = vweird.f32 %v1284
        %vm1291 = vmor %vm1289, %vm1290
        %v1292 = vsel %vm1291, %v1284, %v1288
        %v1293 = vand.u32 2147483647, %v846
        %vm1294 = vcmp.eq.f32.partialorder %v1293, 8.507059e+37
        %v1295 = vand.u32 %v846, 2147483648
        %v1296 = vor.u32 1.1754944e-38, %v1295
        %v1297 = vsel %vm1294, %v1296, %v1292
        %v1298 = vmul.f32 1.0, %v1297
        %v1299 = vrcp.pop %v847
        %v1300 = vmul.f32 %v847, %v1299
        %v1301 = vsub.f32 1.0, %v1300
        %v1302 = vmul.f32 %v1299, %v1301
        %v1303 = vadd.f32 %v1299, %v1302
        %vm1304 = vweird.f32 %v847
        %vm1305 = vweird.f32 %v1299
        %vm1306 = vmor %vm1304, %vm1305
        %v1307 = vsel %vm1306, %v1299, %v1303
        %v1308 = vand.u32 2147483647, %v847
        %vm1309 = vcmp.eq.f32.partialorder %v1308, 8.507059e+37
        %v1310 = vand.u32 %v847, 2147483648
        %v1311 = vor.u32 1.1754944e-38, %v1310
        %v1312 = vsel %vm1309, %v1311, %v1307
        %v1313 = vmul.f32 1.0, %v1312
        %v1314 = vrcp.pop %v848
        %v1315 = vmul.f32 %v848, %v1314
        %v1316 = vsub.f32 1.0, %v1315
        %v1317 = vmul.f32 %v1314, %v1316
        %v1318 = vadd.f32 %v1314, %v1317
        %vm1319 = vweird.f32 %v848
        %vm1320 = vweird.f32 %v1314
        %vm1321 = vmor %vm1319, %vm1320
        %v1322 = vsel %vm1321, %v1314, %v1318
        %v1323 = vand.u32 2147483647, %v848
        %vm1324 = vcmp.eq.f32.partialorder %v1323, 8.507059e+37
        %v1325 = vand.u32 %v848, 2147483648
        %v1326 = vor.u32 1.1754944e-38, %v1325
        %v1327 = vsel %vm1324, %v1326, %v1322
        %v1328 = vmul.f32 1.0, %v1327
        %1329 = vst [vmem:[%s257] sm:$0xff] %v863
        %1330 = vst [vmem:[%s257 + $0x8] sm:$0xff] %v878
        %1331 = vst [vmem:[%s257 + $0x10] sm:$0xff] %v893
        %1332 = vst [vmem:[%s257 + $0x18] sm:$0xff] %v908
        %1333 = vst [vmem:[%s257 + $0x20] sm:$0xff] %v923
        %1334 = vst [vmem:[%s257 + $0x28] sm:$0xff] %v938
        %1335 = vst [vmem:[%s257 + $0x30] sm:$0xff] %v953
        %1336 = vst [vmem:[%s257 + $0x38] sm:$0xff] %v968
        %1337 = vst [vmem:[%s257 + $0x40] sm:$0xff] %v983
        %1338 = vst [vmem:[%s257 + $0x48] sm:$0xff] %v998
        %1339 = vst [vmem:[%s257 + $0x50] sm:$0xff] %v1013
        %1340 = vst [vmem:[%s257 + $0x58] sm:$0xff] %v1028
        %1341 = vst [vmem:[%s257 + $0x60] sm:$0xff] %v1043
        %1342 = vst [vmem:[%s257 + $0x68] sm:$0xff] %v1058
        %1343 = vst [vmem:[%s257 + $0x70] sm:$0xff] %v1073
        %1344 = vst [vmem:[%s257 + $0x78] sm:$0xff] %v1088
        %1345 = vst [vmem:[%s257 + $0x80] sm:$0xff] %v1103
        %1346 = vst [vmem:[%s257 + $0x88] sm:$0xff] %v1118
        %1347 = vst [vmem:[%s257 + $0x90] sm:$0xff] %v1133
        %1348 = vst [vmem:[%s257 + $0x98] sm:$0xff] %v1148
        %1349 = vst [vmem:[%s257 + $0xa0] sm:$0xff] %v1163
        %1350 = vst [vmem:[%s257 + $0xa8] sm:$0xff] %v1178
        %1351 = vst [vmem:[%s257 + $0xb0] sm:$0xff] %v1193
        %1352 = vst [vmem:[%s257 + $0xb8] sm:$0xff] %v1208
        %1353 = vst [vmem:[%s257 + $0xc0] sm:$0xff] %v1223
        %1354 = vst [vmem:[%s257 + $0xc8] sm:$0xff] %v1238
        %1355 = vst [vmem:[%s257 + $0xd0] sm:$0xff] %v1253
        %1356 = vst [vmem:[%s257 + $0xd8] sm:$0xff] %v1268
        %1357 = vst [vmem:[%s257 + $0xe0] sm:$0xff] %v1283
        %1358 = vst [vmem:[%s257 + $0xe8] sm:$0xff] %v1298
        %1359 = vst [vmem:[%s257 + $0xf0] sm:$0xff] %v1313
        %1360 = vst [vmem:[%s257 + $0xf8] sm:$0xff] %v1328
      $region40: #{cvae_forward.19} parent=31 // pred_fallthru
        _
      %s1361 = smul.u32 32, %s19
      %p1362 = scmp.lt.s32.totalorder %s1361, 63
      %s1363 = scalar_select %p1362, %s1361, 63
      %p1364 = scmp.lt.s32.totalorder %s20, 0
      %s1365 = scalar_select %p1364, %s20, 0
      %s1366 = sadd.s32 %s1365, %s1363
      %s1367 = smul.addr %s1366, 8
      %s1368 = scalar_lea.vmem %s3, %s1367
      // Predicated region
      $region41: #{cvae_forward.19} parent=31 // pred_check
        %p1369 = pneg %p135
      $region42: #{cvae_forward.19} parent=31 // pred_check_branch
        %1371 = sbr.rel (%p1369) target = $region44
      $region43: #{cvae_forward.19} parent=31 // pred_region
        %s1372 = smul.u32 32, %s19
      $region44: #{cvae_forward.19} parent=31 // pred_fallthru
        _
    $region32: #{cvae_forward.19} parent=5 // pred_fallthru
      _
    %p1373 = scmp.le.s32.totalorder 2, %s9
    // Predicated region
    $region45: #{cvae_forward.19} parent=5 // pred_check
      %p1374 = pneg %p1373
    $region46: #{cvae_forward.19} parent=5 // pred_check_branch
      %1376 = sbr.rel (%p1374) target = $region48
    $region47: #{cvae_forward.19} parent=5 // pred_region
      %s1377 = ssub.s32 %s9, 2
      // Predicated region
      $region49: #{cvae_forward.19} parent=47 // pred_check
        %p1378 = pneg %p141
      $region50: #{cvae_forward.19} parent=47 // pred_check_branch
        %1380 = sbr.rel (%p1378) target = $region52
      $region51: #{cvae_forward.19} parent=47 // pred_region
        %s1381 = smul.u32 32, %s22
        %p1382 = scmp.lt.s32.totalorder %s1381, 63
        %s1383 = scalar_select %p1382, %s1381, 63
        %p1384 = scmp.lt.s32.totalorder %s23, 0
        %s1385 = scalar_select %p1384, %s23, 0
        %s1386 = sadd.s32 %s1385, %s1383
        %s1387 = smul.addr %s1386, 8
        %s1388 = scalar_lea.vmem %s3, %s1387
      $region52: #{cvae_forward.19} parent=47 // pred_fallthru
        _
    $region48: #{cvae_forward.19} parent=5 // pred_fallthru
      _
  $region6: #{cvae_forward.19} parent=0 // loop_footer
    %s13 = sadd.s32 1, %s9
  $region7: #{cvae_forward.19} parent=0 // loop_footer_branch
    %8 = sbr.rel target = $region3
  $region8: #{cvae_forward.19} parent=0 // loop_exit
    _

</llo_original>
